<compile_context>
chip_gen: v5e
topology: v5e:2x2
jax: 0.10.0
libtpu: 0.0.40
codegen_flags: <defaults>
</compile_context>

<pallas_src>
import functools
import math

import numpy as np
import jax
import jax.numpy as jnp
from jax.experimental import pallas as pl
from jax.experimental.pallas import tpu as pltpu


# ---------------------------------------------------------------------------
# Pallas kernel 1: RevIN + decomposition + patch/in_layer + prompt similarity
# ---------------------------------------------------------------------------

def _preprocess_embed_kernel(x_ref, trend_m_ref, seas_m_ref,
                             w_comb_ref, b_comb_ref, w_mean_ref, b_mean_ref,
                             pkey_ref,
                             emb_ref, sim_ref, musd_ref):
    x = x_ref[...].astype(jnp.float32)                        # (R, L)
    mu = jnp.mean(x, axis=-1, keepdims=True)
    xc = x - mu
    var = jnp.mean(xc * xc, axis=-1, keepdims=True)           # unbiased=False
    std = jnp.sqrt(var + 1e-5)
    xn = xc / std

    # pandas rolling(center=True).mean().bfill().ffill() and per-phase groupby
    # mean are exact linear maps -> two constant (L, L) matmuls.
    trend = jnp.dot(xn, trend_m_ref[...], preferred_element_type=jnp.float32)
    detr = xn - trend
    seas = jnp.dot(detr, seas_m_ref[...], preferred_element_type=jnp.float32)
    resid = detr - seas

    # ReplicationPad1d((0, stride)) + unfold + in_layer folded into ONE constant
    # (3L, n_patch*C) matmul; the patch-mean (prompt key) uses the pre-averaged
    # (3L, C) version of the same matrix (exact, built once outside jit).
    comp_all = jnp.concatenate([trend, seas, resid], axis=-1)            # (R, 3L)
    emb_ref[...] = jnp.dot(comp_all, w_comb_ref[...],
                           preferred_element_type=jnp.float32) + b_comb_ref[...]
    x_mean = jnp.dot(comp_all, w_mean_ref[...],
                     preferred_element_type=jnp.float32) + b_mean_ref[...]

    # prompt pool: l2-normalize and cosine similarity.
    xnrm = x_mean * jax.lax.rsqrt(
        jnp.maximum(jnp.sum(x_mean * x_mean, axis=-1, keepdims=True), 1e-12))
    pk = pkey_ref[...].astype(jnp.float32)
    knrm = pk * jax.lax.rsqrt(
        jnp.maximum(jnp.sum(pk * pk, axis=-1, keepdims=True), 1e-12))
    sim_ref[...] = jax.lax.dot_general(xnrm, knrm, (((1,), (1,)), ((), ())),
                                       preferred_element_type=jnp.float32)
    musd_ref[...] = jnp.concatenate([mu, std], axis=-1)                  # (R, 2)


def preprocess_embed(x2d, trend_m, seas_m, w_comb, b_comb, w_mean, b_mean,
                     prompt_key, n_patch, d_model):
    R, _ = x2d.shape
    pool = prompt_key.shape[0]
    return pl.pallas_call(
        _preprocess_embed_kernel,
        out_shape=(jax.ShapeDtypeStruct((R, n_patch * d_model), jnp.float32),
                   jax.ShapeDtypeStruct((R, pool), jnp.float32),
                   jax.ShapeDtypeStruct((R, 2), jnp.float32)),
    )(x2d, trend_m, seas_m, w_comb, b_comb, w_mean, b_mean, prompt_key)


# ---------------------------------------------------------------------------
# Pallas kernel 2: full GPT2 stack + out_layer + component-sum + de-normalize
# ---------------------------------------------------------------------------

def _gpt2_head_kernel(x_ref, musd_ref, wpe_ref,
                      ln1g_ref, ln1b_ref,
                      wq_ref, bq_ref, wk_ref, bk_ref, wv_ref, bv_ref,
                      wap_ref, bap_ref,
                      ln2g_ref, ln2b_ref,
                      wfc_ref, bfc_ref, wpr_ref, bpr_ref,
                      lnfg_ref, lnfb_ref,
                      wout_ref, bout_ref,
                      o_ref,
                      *, n_layers, n_heads, head_dim, seq_t, d_model, pred_len):
    T, C = seq_t, d_model
    h = x_ref[...].astype(jnp.float32) + wpe_ref[...]          # (T, C)

    # Causal mask generated in-kernel (block-diagonal structure comes from the
    # per-sequence grid -> no dense (BT,BT) bias DMA'd from HBM).
    row = jax.lax.broadcasted_iota(jnp.int32, (T, T), 0)
    col = jax.lax.broadcasted_iota(jnp.int32, (T, T), 1)
    causal_bias = jnp.where(col <= row, 0.0, -1e9).astype(jnp.float32)

    scale = 1.0 / math.sqrt(head_dim)
    gelu_c = math.sqrt(2.0 / math.pi)

    def layer_norm(v, g, b):
        m = jnp.mean(v, axis=-1, keepdims=True)
        vc = v - m
        var = jnp.mean(vc * vc, axis=-1, keepdims=True)
        return vc * jax.lax.rsqrt(var + 1e-5) * g + b

    # TODO(synk): GPT2 train-mode dropout (embd/attn/resid) omitted.
    for l in range(n_layers):                                   # weights VMEM-resident
        # ---- attention block: LN1 + Q/K/V (full-width matmuls) + MHA + proj ----
        a = layer_norm(h, ln1g_ref[l], ln1b_ref[l])
        q_all = jnp.dot(a, wq_ref[l], preferred_element_type=jnp.float32) + bq_ref[l]
        k_all = jnp.dot(a, wk_ref[l], preferred_element_type=jnp.float32) + bk_ref[l]
        v_all = jnp.dot(a, wv_ref[l], preferred_element_type=jnp.float32) + bv_ref[l]
        ctx_parts = []
        for hh in range(n_heads):                # static unroll, 12-lane slices in-vreg
            lo, hi = hh * head_dim, (hh + 1) * head_dim
            q, k, v = q_all[:, lo:hi], k_all[:, lo:hi], v_all[:, lo:hi]
            s = jax.lax.dot_general(q, k, (((1,), (1,)), ((), ())),
                                    preferred_element_type=jnp.float32)
            s = s * scale + causal_bias
            m = jnp.max(s, axis=-1, keepdims=True)
            p = jnp.exp(s - m)
            p = p / jnp.sum(p, axis=-1, keepdims=True)          # exact (parity w/ torch)
            ctx_parts.append(jnp.dot(p, v, preferred_element_type=jnp.float32))
        ctx = jnp.concatenate(ctx_parts, axis=-1)               # (T, C) merged heads
        h = h + jnp.dot(ctx, wap_ref[l],
                        preferred_element_type=jnp.float32) + bap_ref[l]

        # ---- MLP block: LN2 + FC + gelu_new + proj + residual ----
        a2 = layer_norm(h, ln2g_ref[l], ln2b_ref[l])
        ff = jnp.dot(a2, wfc_ref[l], preferred_element_type=jnp.float32) + bfc_ref[l]
        ff = 0.5 * ff * (1.0 + jnp.tanh(gelu_c * (ff + 0.044715 * ff * ff * ff)))
        h = h + jnp.dot(ff, wpr_ref[l],
                        preferred_element_type=jnp.float32) + bpr_ref[l]

    h = layer_norm(h, lnfg_ref[...], lnfb_ref[...])

    # Fused out_layer: torch does out_layer(h.reshape(R*3, T*C/3)) then sums the
    # 3 components.  Equivalent to sum_t h[t] @ W3[t] with
    # W3[t, c, :] = out_w[(t*C + c) % (T*C//3), :] plus 3x the bias.
    acc = jnp.zeros((1, pred_len), jnp.float32)
    for t in range(T):
        acc = acc + jnp.dot(h[t:t + 1, :], wout_ref[t],
                            preferred_element_type=jnp.float32)
    acc = acc + 3.0 * bout_ref[...]

    # Fused RevIN de-normalization (packed mu/std per sequence).
    o_ref[...] = acc * musd_ref[0:1, 1:2] + musd_ref[0:1, 0:1]


def gpt2_forecast_head(prompted, musd3, pp, cfg):
    R, T, C = prompted.shape
    Lyr = cfg["gpt_layers"]
    H = cfg["n_heads"]
    hd = C // H
    pred = cfg["pred_len"]

    def const(shape):                       # full-block, constant index_map (resident)
        zeros = (0,) * len(shape)
        return pl.BlockSpec(shape, lambda r: zeros)

    grid_spec = pltpu.PrefetchScalarGridSpec(
        num_scalar_prefetch=0,
        grid=(R,),
        in_specs=[
            pl.BlockSpec((None, T, C), lambda r: (r, 0, 0)),    # per-sequence tokens
            pl.BlockSpec((None, 1, 2), lambda r: (r, 0, 0)),    # packed (mu, std)
            const((T, C)),                                      # wpe[:T]
            const((Lyr, 1, C)), const((Lyr, 1, C)),             # ln1 g / b
            const((Lyr, C, C)), const((Lyr, 1, C)),             # w_q / b_q
            const((Lyr, C, C)), const((Lyr, 1, C)),             # w_k / b_k
            const((Lyr, C, C)), const((Lyr, 1, C)),             # w_v / b_v
            const((Lyr, C, C)), const((Lyr, 1, C)),             # attn out proj
            const((Lyr, 1, C)), const((Lyr, 1, C)),             # ln2 g / b
            const((Lyr, C, 4 * C)), const((Lyr, 1, 4 * C)),     # mlp fc
            const((Lyr, 4 * C, C)), const((Lyr, 1, C)),         # mlp proj
            const((1, C)), const((1, C)),                       # ln_f
            const((T, C, pred)), const((1, pred)),              # fused out_layer
        ],
        out_specs=pl.BlockSpec((None, 1, pred), lambda r: (r, 0, 0)),
    )
    return pl.pallas_call(
        functools.partial(_gpt2_head_kernel, n_layers=Lyr, n_heads=H,
                          head_dim=hd, seq_t=T, d_model=C, pred_len=pred),
        out_shape=jax.ShapeDtypeStruct((R, 1, pred), jnp.float32),
        grid_spec=grid_spec,
        compiler_params=pltpu.CompilerParams(
            dimension_semantics=("parallel",)),    # shard sequences across TCs (v7x)
    )(prompted, musd3, pp["wpe_t"],
      pp["ln1_g"], pp["ln1_b"],
      pp["w_q"], pp["b_q"], pp["w_k"], pp["b_k"], pp["w_v"], pp["b_v"],
      pp["w_ap"], pp["b_ap"],
      pp["ln2_g"], pp["ln2_b"],
      pp["w_fc"], pp["b_fc"], pp["w_pr"], pp["b_pr"],
      pp["lnf_g"], pp["lnf_b"],
      pp["w_out3"], pp["b_out"])


# ---------------- host-side constant builders (one-time, outside jit) --------

def build_decomp_matrices(L, trend_w, seas_w):
    """Constant matrices so that trend = x @ A and seasonal = (x - trend) @ Sm
    exactly mirror pandas rolling(window, center=True).mean().bfill().ffill()
    and groupby(index % seas_w).transform('mean')."""
    offset = (trend_w - 1) // 2          # pandas center=True window placement
    valid = [i for i in range(L)
             if (i + 1 + offset - trend_w) >= 0 and (i + offset) <= L - 1]
    first, last = valid[0], valid[-1]
    A = np.zeros((L, L), dtype=np.float32)
    for i in range(L):
        j = min(max(i, first), last)     # bfill / ffill of the NaN edges
        s = j + 1 + offset - trend_w
        A[s:s + trend_w, i] = 1.0 / trend_w
    Sm = np.zeros((L, L), dtype=np.float32)
    phase = np.arange(L) % seas_w
    for g in range(seas_w):
        idx = np.where(phase == g)[0]
        Sm[np.ix_(idx, idx)] = 1.0 / len(idx)
    return A, Sm


def build_patch_index(L, P, S):
    """ReplicationPad1d((0, S)) + unfold(size=P, step=S) as a clipped gather index."""
    Lp = L + S
    n = (Lp - P) // S + 1
    idx = np.arange(n)[:, None] * S + np.arange(P)[None, :]
    return np.minimum(idx, L - 1).astype(np.int32), n


# ----------------------------- model wiring ---------------------------------

def init_params(key, cfg):
    C = cfg["d_model"]
    keys = iter(jax.random.split(key, 8 + 12 * cfg["gpt_layers"]))
    n = lambda shape, s=0.02: (jax.random.normal(next(keys), shape, jnp.float32) * s)

    params = {
        "wte": n((cfg["vocab"], C)),
        "wpe": n((cfg["max_pos"], C)),
        "prompt_key": jax.random.uniform(next(keys), (cfg["pool_size"], C),
                                         jnp.float32, -1.0, 1.0),
        "in_w": n((cfg["patch_size"] * 3, C)),
        "in_b": jnp.zeros((C,), jnp.float32),
        "out_w": n((C // 3 * (cfg["patch_num"] + cfg["prompt_length"]), cfg["pred_len"])),
        "out_b": jnp.zeros((cfg["pred_len"],), jnp.float32),
        "lnf_g": jnp.ones((C,), jnp.float32),
        "lnf_b": jnp.zeros((C,), jnp.float32),
        "layers": [],
    }
    for _ in range(cfg["gpt_layers"]):
        params["layers"].append({
            "ln1_g": jnp.ones((C,), jnp.float32), "ln1_b": jnp.zeros((C,), jnp.float32),
            "w_qkv": n((C, 3 * C)), "b_qkv": jnp.zeros((3 * C,), jnp.float32),
            "w_attn_proj": n((C, C)), "b_attn_proj": jnp.zeros((C,), jnp.float32),
            "ln2_g": jnp.ones((C,), jnp.float32), "ln2_b": jnp.zeros((C,), jnp.float32),
            "w_fc": n((C, 4 * C)), "b_fc": jnp.zeros((4 * C,), jnp.float32),
            "w_proj": n((4 * C, C)), "b_proj": jnp.zeros((C,), jnp.float32),
        })
    return params


def prepare_params(params, cfg):
    """One-time (outside jit) re-layout: fold patching into in_layer, split the
    packed c_attn into full-width Q/K/V, stack per-layer weights with a leading
    layer dim, and rearrange out_layer for the fused component-sum head."""
    C = cfg["d_model"]
    Lyr = cfg["gpt_layers"]
    L = cfg["seq_len"]
    P = cfg["patch_size"]
    pred = cfg["pred_len"]
    widx, n_patch = build_patch_index(L, P, cfg["stride"])
    T = n_patch + cfg["prompt_length"]

    # -- fold ReplicationPad + unfold + in_layer into one (3L, n*C) matrix --
    sel = np.zeros((3 * L, n_patch, 3 * P), np.float32)
    for c in range(3):
        for nn in range(n_patch):
            for p in range(P):
                sel[c * L + widx[nn, p], nn, c * P + p] += 1.0
    w3 = jnp.einsum("lnq,qc->lnc", jnp.asarray(sel), params["in_w"])   # (3L, n, C)
    w_comb = w3.reshape(3 * L, n_patch * C)
    w_mean = jnp.mean(w3, axis=1)                                      # (3L, C)
    b_comb = jnp.tile(params["in_b"], (n_patch,)).reshape(1, n_patch * C)
    b_mean = params["in_b"].reshape(1, C)

    # -- out_layer rearranged so out = sum_t h[t] @ w_out3[t] + 3*b matches the
    #    torch reshape(B*M*3, -1) @ out_w followed by the 3-component sum --
    flat_idx = np.arange(T * C) % ((C // 3) * T)
    w_out3 = jnp.take(params["out_w"], jnp.asarray(flat_idx), axis=0).reshape(T, C, pred)

    stk = lambda k: jnp.stack([lyr[k] for lyr in params["layers"]])
    wqkv = stk("w_qkv")                       # (Lyr, C, 3C)
    bqkv = stk("b_qkv")                       # (Lyr, 3C)
    pp = {
        "wte": params["wte"],
        "prompt_key": params["prompt_key"],
        "wpe_t": params["wpe"][:T],
        "w_comb": w_comb, "b_comb": b_comb, "w_mean": w_mean, "b_mean": b_mean,
        "w_out3": w_out3, "b_out": params["out_b"].reshape(1, pred),
        "lnf_g": params["lnf_g"].reshape(1, C),
        "lnf_b": params["lnf_b"].reshape(1, C),
        "ln1_g": stk("ln1_g").reshape(Lyr, 1, C),
        "ln1_b": stk("ln1_b").reshape(Lyr, 1, C),
        "ln2_g": stk("ln2_g").reshape(Lyr, 1, C),
        "ln2_b": stk("ln2_b").reshape(Lyr, 1, C),
        "w_q": wqkv[:, :, 0 * C:1 * C], "b_q": bqkv[:, 0 * C:1 * C].reshape(Lyr, 1, C),
        "w_k": wqkv[:, :, 1 * C:2 * C], "b_k": bqkv[:, 1 * C:2 * C].reshape(Lyr, 1, C),
        "w_v": wqkv[:, :, 2 * C:3 * C], "b_v": bqkv[:, 2 * C:3 * C].reshape(Lyr, 1, C),
        "w_ap": stk("w_attn_proj"), "b_ap": stk("b_attn_proj").reshape(Lyr, 1, C),
        "w_fc": stk("w_fc"), "b_fc": stk("b_fc").reshape(Lyr, 1, 4 * C),
        "w_pr": stk("w_proj"), "b_pr": stk("b_proj").reshape(Lyr, 1, C),
    }
    return pp


def make_forecast_fn(cfg):
    L = cfg["seq_len"]
    C = cfg["d_model"]
    trend_np, seas_np = build_decomp_matrices(L, cfg["trend_length"],
                                              cfg["seasonal_length"])
    _, n_patch = build_patch_index(L, cfg["patch_size"], cfg["stride"])
    trend_m = jnp.asarray(trend_np)
    seas_m = jnp.asarray(seas_np)

    def forecast(x_enc, pp):
        B, Lx, M = x_enc.shape
        R = B * M

        # 'b l m -> (b m) l'
        x_bm_l = jnp.transpose(x_enc, (0, 2, 1)).reshape(R, Lx)

        # --- Pallas call 1: RevIN + decomposition + patching/in_layer + prompt sim ---
        emb_flat, sim, musd = preprocess_embed(
            x_bm_l, trend_m, seas_m, pp["w_comb"], pp["b_comb"],
            pp["w_mean"], pp["b_mean"], pp["prompt_key"], n_patch, C)

        # --- prompt-pool top-k + gather (tiny XLA glue; data-dependent) ---
        topk_val, topk_idx = jax.lax.top_k(sim, cfg["prompt_length"])
        reduce_sim = jnp.sum(topk_val) / R        # == sum(key_norm[idx] * x_norm) / R
        batched_prompt = jnp.take(pp["wte"], topk_idx, axis=0)        # (R, top_k, C)
        emb = emb_flat.reshape(R, n_patch, C)
        prompted = jnp.concatenate([batched_prompt, emb], axis=1)     # (R, T, C)

        # --- Pallas call 2: GPT2 stack + out_layer + 3-sum + de-normalize ---
        dec = gpt2_forecast_head(prompted, musd.reshape(R, 1, 2), pp, cfg)  # (R,1,pred)

        out = jnp.transpose(dec.reshape(B, M, cfg["pred_len"]), (0, 2, 1))  # (B,pred,M)
        res = {"simlarity_loss": reduce_sim, "similarity": sim,
               "prompt_key": pp["prompt_key"]}
        return out[:, -cfg["pred_len"]:, :], res

    return jax.jit(forecast)


# --------------------------------- main --------------------------------------

if __name__ == "__main__":
    cfg = dict(
        task_name="ir_forecast",
        seq_len=16, pred_len=8, patch_size=4, stride=4,
        d_model=48, n_heads=4, gpt_layers=2,
        pool_size=8, prompt_length=2,
        trend_length=4, seasonal_length=4,
        vocab=64, max_pos=32,
    )
    cfg["patch_num"] = (cfg["seq_len"] - cfg["patch_size"]) // cfg["stride"] + 1 + 1

    key = jax.random.PRNGKey(0)
    k_param, k_data = jax.random.split(key)
    params = init_params(k_param, cfg)
    prepped = prepare_params(params, cfg)      # one-time weight re-layout (outside jit)

    B, L, M = 2, cfg["seq_len"], 2
    x_enc = jax.random.normal(k_data, (B, L, M), jnp.float32)

    forecast = make_forecast_fn(cfg)
    dec_out, res = forecast(x_enc, prepped)
    jax.block_until_ready(dec_out)
    jax.block_until_ready(res["simlarity_loss"])

    assert dec_out.shape == (B, cfg["pred_len"], M)
    assert np.isfinite(np.asarray(dec_out)).all()
    print("KERNEL_OK")
</pallas_src>

<mosaic_0001>
module attributes {stable_mosaic.version = 11 : i64} {
  func.func @_preprocess_embed_kernel(%arg0: memref<4x16xf32, #tpu.memory_space<vmem>>, %arg1: memref<16x16xf32, #tpu.memory_space<vmem>>, %arg2: memref<16x16xf32, #tpu.memory_space<vmem>>, %arg3: memref<48x240xf32, #tpu.memory_space<vmem>>, %arg4: memref<1x240xf32, #tpu.memory_space<vmem>>, %arg5: memref<48x48xf32, #tpu.memory_space<vmem>>, %arg6: memref<1x48xf32, #tpu.memory_space<vmem>>, %arg7: memref<8x48xf32, #tpu.memory_space<vmem>>, %arg8: memref<4x240xf32, #tpu.memory_space<vmem>>, %arg9: memref<4x8xf32, #tpu.memory_space<vmem>>, %arg10: memref<4x2xf32, #tpu.memory_space<vmem>>) attributes {dimension_semantics = [], scalar_prefetch = 0 : i64, scratch_operands = 0 : i64, tpu.core_type = #tpu.core_type<tc>} {
    %c0 = arith.constant 0 : index
    %c0_0 = arith.constant 0 : index
    %0 = vector.load %arg0[%c0, %c0_0] : memref<4x16xf32, #tpu.memory_space<vmem>>, vector<4x16xf32>
    %cst = arith.constant dense<0.000000e+00> : vector<4xf32>
    %1 = vector.multi_reduction <add>, %0, %cst [1] : vector<4x16xf32> to vector<4xf32>
    %2 = vector.shape_cast %1 : vector<4xf32> to vector<4x1xf32>
    %cst_1 = arith.constant 1.600000e+01 : f32
    %3 = vector.broadcast %cst_1 : f32 to vector<4x1xf32>
    %4 = arith.divf %2, %3 : vector<4x1xf32>
    %5 = vector.broadcast %4 : vector<4x1xf32> to vector<4x16xf32>
    %6 = arith.subf %0, %5 : vector<4x16xf32>
    %7 = arith.mulf %6, %6 : vector<4x16xf32>
    %cst_2 = arith.constant dense<0.000000e+00> : vector<4xf32>
    %8 = vector.multi_reduction <add>, %7, %cst_2 [1] : vector<4x16xf32> to vector<4xf32>
    %9 = vector.shape_cast %8 : vector<4xf32> to vector<4x1xf32>
    %cst_3 = arith.constant 1.600000e+01 : f32
    %10 = vector.broadcast %cst_3 : f32 to vector<4x1xf32>
    %11 = arith.divf %9, %10 : vector<4x1xf32>
    %cst_4 = arith.constant 9.99999974E-6 : f32
    %12 = vector.broadcast %cst_4 : f32 to vector<4x1xf32>
    %13 = arith.addf %11, %12 : vector<4x1xf32>
    %14 = math.sqrt %13 : vector<4x1xf32>
    %15 = vector.broadcast %14 : vector<4x1xf32> to vector<4x16xf32>
    %16 = arith.divf %6, %15 : vector<4x16xf32>
    %c0_5 = arith.constant 0 : index
    %c0_6 = arith.constant 0 : index
    %17 = vector.load %arg1[%c0_5, %c0_6] : memref<16x16xf32, #tpu.memory_space<vmem>>, vector<16x16xf32>
    %cst_7 = arith.constant dense<0.000000e+00> : vector<4x16xf32>
    %18 = tpu.matmul %16, %17, %cst_7 {dimension_numbers = #tpu.dot_dimension_numbers<[1], [0], [0], [1], [0, 0, 1, 1], [], []>} : vector<4x16xf32>, vector<16x16xf32>, vector<4x16xf32> -> vector<4x16xf32>
    %19 = arith.subf %16, %18 : vector<4x16xf32>
    %c0_8 = arith.constant 0 : index
    %c0_9 = arith.constant 0 : index
    %20 = vector.load %arg2[%c0_8, %c0_9] : memref<16x16xf32, #tpu.memory_space<vmem>>, vector<16x16xf32>
    %cst_10 = arith.constant dense<0.000000e+00> : vector<4x16xf32>
    %21 = tpu.matmul %19, %20, %cst_10 {dimension_numbers = #tpu.dot_dimension_numbers<[1], [0], [0], [1], [0, 0, 1, 1], [], []>} : vector<4x16xf32>, vector<16x16xf32>, vector<4x16xf32> -> vector<4x16xf32>
    %22 = arith.subf %19, %21 : vector<4x16xf32>
    %23 = tpu.concatenate %18, %21, %22 in 1 : vector<4x16xf32>, vector<4x16xf32>, vector<4x16xf32> -> vector<4x48xf32>
    %c0_11 = arith.constant 0 : index
    %c0_12 = arith.constant 0 : index
    %24 = vector.load %arg3[%c0_11, %c0_12] : memref<48x240xf32, #tpu.memory_space<vmem>>, vector<48x240xf32>
    %cst_13 = arith.constant dense<0.000000e+00> : vector<4x240xf32>
    %25 = tpu.matmul %23, %24, %cst_13 {dimension_numbers = #tpu.dot_dimension_numbers<[1], [0], [0], [1], [0, 0, 1, 1], [], []>} : vector<4x48xf32>, vector<48x240xf32>, vector<4x240xf32> -> vector<4x240xf32>
    %c0_14 = arith.constant 0 : index
    %c0_15 = arith.constant 0 : index
    %26 = vector.load %arg4[%c0_14, %c0_15] : memref<1x240xf32, #tpu.memory_space<vmem>>, vector<1x240xf32>
    %27 = vector.broadcast %26 : vector<1x240xf32> to vector<4x240xf32>
    %28 = arith.addf %25, %27 : vector<4x240xf32>
    %c0_16 = arith.constant 0 : index
    %c0_17 = arith.constant 0 : index
    %29 = vector.load %arg8[%c0_16, %c0_17] : memref<4x240xf32, #tpu.memory_space<vmem>>, vector<4x240xf32>
    tpu.vector_store %arg8[%c0_16, %c0_17], %28 {strides = array<i32>} : memref<4x240xf32, #tpu.memory_space<vmem>>, vector<4x240xf32>,
    %c0_18 = arith.constant 0 : index
    %c0_19 = arith.constant 0 : index
    %30 = vector.load %arg5[%c0_18, %c0_19] : memref<48x48xf32, #tpu.memory_space<vmem>>, vector<48x48xf32>
    %cst_20 = arith.constant dense<0.000000e+00> : vector<4x48xf32>
    %31 = tpu.matmul %23, %30, %cst_20 {dimension_numbers = #tpu.dot_dimension_numbers<[1], [0], [0], [1], [0, 0, 1, 1], [], []>} : vector<4x48xf32>, vector<48x48xf32>, vector<4x48xf32> -> vector<4x48xf32>
    %c0_21 = arith.constant 0 : index
    %c0_22 = arith.constant 0 : index
    %32 = vector.load %arg6[%c0_21, %c0_22] : memref<1x48xf32, #tpu.memory_space<vmem>>, vector<1x48xf32>
    %33 = vector.broadcast %32 : vector<1x48xf32> to vector<4x48xf32>
    %34 = arith.addf %31, %33 : vector<4x48xf32>
    %35 = arith.mulf %34, %34 : vector<4x48xf32>
    %cst_23 = arith.constant dense<0.000000e+00> : vector<4xf32>
    %36 = vector.multi_reduction <add>, %35, %cst_23 [1] : vector<4x48xf32> to vector<4xf32>
    %37 = vector.shape_cast %36 : vector<4xf32> to vector<4x1xf32>
    %cst_24 = arith.constant 9.99999996E-13 : f32
    %38 = vector.broadcast %cst_24 : f32 to vector<4x1xf32>
    %39 = arith.maximumf %37, %38 : vector<4x1xf32>
    %40 = math.rsqrt %39 : vector<4x1xf32>
    %41 = vector.broadcast %40 : vector<4x1xf32> to vector<4x48xf32>
    %42 = arith.mulf %34, %41 : vector<4x48xf32>
    %c0_25 = arith.constant 0 : index
    %c0_26 = arith.constant 0 : index
    %43 = vector.load %arg7[%c0_25, %c0_26] : memref<8x48xf32, #tpu.memory_space<vmem>>, vector<8x48xf32>
    %44 = arith.mulf %43, %43 : vector<8x48xf32>
    %cst_27 = arith.constant dense<0.000000e+00> : vector<8xf32>
    %45 = vector.multi_reduction <add>, %44, %cst_27 [1] : vector<8x48xf32> to vector<8xf32>
    %46 = vector.shape_cast %45 : vector<8xf32> to vector<8x1xf32>
    %cst_28 = arith.constant 9.99999996E-13 : f32
    %47 = vector.broadcast %cst_28 : f32 to vector<8x1xf32>
    %48 = arith.maximumf %46, %47 : vector<8x1xf32>
    %49 = math.rsqrt %48 : vector<8x1xf32>
    %50 = vector.broadcast %49 : vector<8x1xf32> to vector<8x48xf32>
    %51 = arith.mulf %43, %50 : vector<8x48xf32>
    %cst_29 = arith.constant dense<0.000000e+00> : vector<4x8xf32>
    %52 = tpu.matmul %42, %51, %cst_29 {dimension_numbers = #tpu.dot_dimension_numbers<[1], [1], [0], [0], [0, 0, 1, 0], [], []>} : vector<4x48xf32>, vector<8x48xf32>, vector<4x8xf32> -> vector<4x8xf32>
    %c0_30 = arith.constant 0 : index
    %c0_31 = arith.constant 0 : index
    %53 = vector.load %arg9[%c0_30, %c0_31] : memref<4x8xf32, #tpu.memory_space<vmem>>, vector<4x8xf32>
    tpu.vector_store %arg9[%c0_30, %c0_31], %52 {strides = array<i32>} : memref<4x8xf32, #tpu.memory_space<vmem>>, vector<4x8xf32>,
    %54 = tpu.concatenate %4, %14 in 1 : vector<4x1xf32>, vector<4x1xf32> -> vector<4x2xf32>
    %c0_32 = arith.constant 0 : index
    %c0_33 = arith.constant 0 : index
    %55 = vector.load %arg10[%c0_32, %c0_33] : memref<4x2xf32, #tpu.memory_space<vmem>>, vector<4x2xf32>
    tpu.vector_store %arg10[%c0_32, %c0_33], %54 {strides = array<i32>} : memref<4x2xf32, #tpu.memory_space<vmem>>, vector<4x2xf32>,
    return
  }
}

module attributes {stable_mosaic.version = 11 : i64} {
  func.func @_gpt2_head_kernel(%arg0: i32, %arg1: memref<1x7x48xf32, #tpu.memory_space<vmem>>, %arg2: memref<1x1x2xf32, #tpu.memory_space<vmem>>, %arg3: memref<7x48xf32, #tpu.memory_space<vmem>>, %arg4: memref<2x1x48xf32, #tpu.memory_space<vmem>>, %arg5: memref<2x1x48xf32, #tpu.memory_space<vmem>>, %arg6: memref<2x48x48xf32, #tpu.memory_space<vmem>>, %arg7: memref<2x1x48xf32, #tpu.memory_space<vmem>>, %arg8: memref<2x48x48xf32, #tpu.memory_space<vmem>>, %arg9: memref<2x1x48xf32, #tpu.memory_space<vmem>>, %arg10: memref<2x48x48xf32, #tpu.memory_space<vmem>>, %arg11: memref<2x1x48xf32, #tpu.memory_space<vmem>>, %arg12: memref<2x48x48xf32, #tpu.memory_space<vmem>>, %arg13: memref<2x1x48xf32, #tpu.memory_space<vmem>>, %arg14: memref<2x1x48xf32, #tpu.memory_space<vmem>>, %arg15: memref<2x1x48xf32, #tpu.memory_space<vmem>>, %arg16: memref<2x48x192xf32, #tpu.memory_space<vmem>>, %arg17: memref<2x1x192xf32, #tpu.memory_space<vmem>>, %arg18: memref<2x192x48xf32, #tpu.memory_space<vmem>>, %arg19: memref<2x1x48xf32, #tpu.memory_space<vmem>>, %arg20: memref<1x48xf32, #tpu.memory_space<vmem>>, %arg21: memref<1x48xf32, #tpu.memory_space<vmem>>, %arg22: memref<7x48x8xf32, #tpu.memory_space<vmem>>, %arg23: memref<1x8xf32, #tpu.memory_space<vmem>>, %arg24: memref<1x1x8xf32, #tpu.memory_space<vmem>>) attributes {dimension_semantics = [#tpu.dimension_semantics<parallel>], iteration_bounds = array<i64: 4>, scalar_prefetch = 0 : i64, scratch_operands = 0 : i64, tpu.core_type = #tpu.core_type<tc>, window_params = [{transform_indices = @transform_0, window_bounds = array<i64: 1, 7, 48>}, {transform_indices = @transform_1, window_bounds = array<i64: 1, 1, 2>}, {pipeline_mode = #tpu.pipeline_mode<synchronous>, transform_indices = @transform_2, window_bounds = array<i64: 7, 48>}, {pipeline_mode = #tpu.pipeline_mode<synchronous>, transform_indices = @transform_3, window_bounds = array<i64: 2, 1, 48>}, {pipeline_mode = #tpu.pipeline_mode<synchronous>, transform_indices = @transform_4, window_bounds = array<i64: 2, 1, 48>}, {pipeline_mode = #tpu.pipeline_mode<synchronous>, transform_indices = @transform_5, window_bounds = array<i64: 2, 48, 48>}, {pipeline_mode = #tpu.pipeline_mode<synchronous>, transform_indices = @transform_6, window_bounds = array<i64: 2, 1, 48>}, {pipeline_mode = #tpu.pipeline_mode<synchronous>, transform_indices = @transform_7, window_bounds = array<i64: 2, 48, 48>}, {pipeline_mode = #tpu.pipeline_mode<synchronous>, transform_indices = @transform_8, window_bounds = array<i64: 2, 1, 48>}, {pipeline_mode = #tpu.pipeline_mode<synchronous>, transform_indices = @transform_9, window_bounds = array<i64: 2, 48, 48>}, {pipeline_mode = #tpu.pipeline_mode<synchronous>, transform_indices = @transform_10, window_bounds = array<i64: 2, 1, 48>}, {pipeline_mode = #tpu.pipeline_mode<synchronous>, transform_indices = @transform_11, window_bounds = array<i64: 2, 48, 48>}, {pipeline_mode = #tpu.pipeline_mode<synchronous>, transform_indices = @transform_12, window_bounds = array<i64: 2, 1, 48>}, {pipeline_mode = #tpu.pipeline_mode<synchronous>, transform_indices = @transform_13, window_bounds = array<i64: 2, 1, 48>}, {pipeline_mode = #tpu.pipeline_mode<synchronous>, transform_indices = @transform_14, window_bounds = array<i64: 2, 1, 48>}, {pipeline_mode = #tpu.pipeline_mode<synchronous>, transform_indices = @transform_15, window_bounds = array<i64: 2, 48, 192>}, {pipeline_mode = #tpu.pipeline_mode<synchronous>, transform_indices = @transform_16, window_bounds = array<i64: 2, 1, 192>}, {pipeline_mode = #tpu.pipeline_mode<synchronous>, transform_indices = @transform_17, window_bounds = array<i64: 2, 192, 48>}, {pipeline_mode = #tpu.pipeline_mode<synchronous>, transform_indices = @transform_18, window_bounds = array<i64: 2, 1, 48>}, {pipeline_mode = #tpu.pipeline_mode<synchronous>, transform_indices = @transform_19, window_bounds = array<i64: 1, 48>}, {pipeline_mode = #tpu.pipeline_mode<synchronous>, transform_indices = @transform_20, window_bounds = array<i64: 1, 48>}, {pipeline_mode = #tpu.pipeline_mode<synchronous>, transform_indices = @transform_21, window_bounds = array<i64: 7, 48, 8>}, {pipeline_mode = #tpu.pipeline_mode<synchronous>, transform_indices = @transform_22, window_bounds = array<i64: 1, 8>}, {transform_indices = @transform_23, window_bounds = array<i64: 1, 1, 8>}]} {
    %c0 = arith.constant 0 : index
    %c0_0 = arith.constant 0 : index
    %c0_1 = arith.constant 0 : index
    %0 = vector.load %arg1[%c0, %c0_0, %c0_1] : memref<1x7x48xf32, #tpu.memory_space<vmem>>, vector<1x7x48xf32>
    %1 = vector.shape_cast %0 : vector<1x7x48xf32> to vector<7x48xf32>
    %c0_2 = arith.constant 0 : index
    %c0_3 = arith.constant 0 : index
    %2 = vector.load %arg3[%c0_2, %c0_3] : memref<7x48xf32, #tpu.memory_space<vmem>>, vector<7x48xf32>
    %3 = arith.addf %1, %2 : vector<7x48xf32>
    %4 = tpu.iota {dimensions = array<i32: 0>} : vector<7x7xi32>
    %5 = tpu.iota {dimensions = array<i32: 1>} : vector<7x7xi32>
    %6 = arith.cmpi sle, %5, %4 : vector<7x7xi32>
    %cst = arith.constant 0.000000e+00 : f32
    %cst_4 = arith.constant -1.000000e+09 : f32
    %7 = vector.broadcast %cst : f32 to vector<7x7xf32>
    %8 = vector.broadcast %cst_4 : f32 to vector<7x7xf32>
    %9 = arith.select %6, %7, %8 : vector<7x7xi1>, vector<7x7xf32>
    %c0_5 = arith.constant 0 : index
    %c0_6 = arith.constant 0 : index
    %c0_7 = arith.constant 0 : index
    %10 = vector.load %arg4[%c0_5, %c0_6, %c0_7] : memref<2x1x48xf32, #tpu.memory_space<vmem>>, vector<1x1x48xf32>
    %11 = vector.shape_cast %10 : vector<1x1x48xf32> to vector<1x48xf32>
    %c0_8 = arith.constant 0 : index
    %c0_9 = arith.constant 0 : index
    %c0_10 = arith.constant 0 : index
    %12 = vector.load %arg5[%c0_8, %c0_9, %c0_10] : memref<2x1x48xf32, #tpu.memory_space<vmem>>, vector<1x1x48xf32>
    %13 = vector.shape_cast %12 : vector<1x1x48xf32> to vector<1x48xf32>
    %cst_11 = arith.constant dense<0.000000e+00> : vector<7xf32>
    %14 = vector.multi_reduction <add>, %3, %cst_11 [1] : vector<7x48xf32> to vector<7xf32>
    %15 = vector.shape_cast %14 : vector<7xf32> to vector<7x1xf32>
    %cst_12 = arith.constant 4.800000e+01 : f32
    %16 = vector.broadcast %cst_12 : f32 to vector<7x1xf32>
    %17 = arith.divf %15, %16 : vector<7x1xf32>
    %18 = vector.broadcast %17 : vector<7x1xf32> to vector<7x48xf32>
    %19 = arith.subf %3, %18 : vector<7x48xf32>
    %20 = arith.mulf %19, %19 : vector<7x48xf32>
    %cst_13 = arith.constant dense<0.000000e+00> : vector<7xf32>
    %21 = vector.multi_reduction <add>, %20, %cst_13 [1] : vector<7x48xf32> to vector<7xf32>
    %22 = vector.shape_cast %21 : vector<7xf32> to vector<7x1xf32>
    %cst_14 = arith.constant 4.800000e+01 : f32
    %23 = vector.broadcast %cst_14 : f32 to vector<7x1xf32>
    %24 = arith.divf %22, %23 : vector<7x1xf32>
    %cst_15 = arith.constant 9.99999974E-6 : f32
    %25 = vector.broadcast %cst_15 : f32 to vector<7x1xf32>
    %26 = arith.addf %24, %25 : vector<7x1xf32>
    %27 = math.rsqrt %26 : vector<7x1xf32>
    %28 = vector.broadcast %27 : vector<7x1xf32> to vector<7x48xf32>
    %29 = arith.mulf %19, %28 : vector<7x48xf32>
    %30 = vector.broadcast %11 : vector<1x48xf32> to vector<7x48xf32>
    %31 = arith.mulf %29, %30 : vector<7x48xf32>
    %32 = vector.broadcast %13 : vector<1x48xf32> to vector<7x48xf32>
    %33 = arith.addf %31, %32 : vector<7x48xf32>
    %c0_16 = arith.constant 0 : index
    %c0_17 = arith.constant 0 : index
    %c0_18 = arith.constant 0 : index
    %34 = vector.load %arg6[%c0_16, %c0_17, %c0_18] : memref<2x48x48xf32, #tpu.memory_space<vmem>>, vector<1x48x48xf32>
    %35 = vector.shape_cast %34 : vector<1x48x48xf32> to vector<48x48xf32>
    %cst_19 = arith.constant dense<0.000000e+00> : vector<7x48xf32>
    %36 = tpu.matmul %33, %35, %cst_19 {dimension_numbers = #tpu.dot_dimension_numbers<[1], [0], [0], [1], [0, 0, 1, 1], [], []>} : vector<7x48xf32>, vector<48x48xf32>, vector<7x48xf32> -> vector<7x48xf32>
    %c0_20 = arith.constant 0 : index
    %c0_21 = arith.constant 0 : index
    %c0_22 = arith.constant 0 : index
    %37 = vector.load %arg7[%c0_20, %c0_21, %c0_22] : memref<2x1x48xf32, #tpu.memory_space<vmem>>, vector<1x1x48xf32>
    %38 = vector.shape_cast %37 : vector<1x1x48xf32> to vector<1x48xf32>
    %39 = vector.broadcast %38 : vector<1x48xf32> to vector<7x48xf32>
    %40 = arith.addf %36, %39 : vector<7x48xf32>
    %c0_23 = arith.constant 0 : index
    %c0_24 = arith.constant 0 : index
    %c0_25 = arith.constant 0 : index
    %41 = vector.load %arg8[%c0_23, %c0_24, %c0_25] : memref<2x48x48xf32, #tpu.memory_space<vmem>>, vector<1x48x48xf32>
    %42 = vector.shape_cast %41 : vector<1x48x48xf32> to vector<48x48xf32>
    %cst_26 = arith.constant dense<0.000000e+00> : vector<7x48xf32>
    %43 = tpu.matmul %33, %42, %cst_26 {dimension_numbers = #tpu.dot_dimension_numbers<[1], [0], [0], [1], [0, 0, 1, 1], [], []>} : vector<7x48xf32>, vector<48x48xf32>, vector<7x48xf32> -> vector<7x48xf32>
    %c0_27 = arith.constant 0 : index
    %c0_28 = arith.constant 0 : index
    %c0_29 = arith.constant 0 : index
    %44 = vector.load %arg9[%c0_27, %c0_28, %c0_29] : memref<2x1x48xf32, #tpu.memory_space<vmem>>, vector<1x1x48xf32>
    %45 = vector.shape_cast %44 : vector<1x1x48xf32> to vector<1x48xf32>
    %46 = vector.broadcast %45 : vector<1x48xf32> to vector<7x48xf32>
    %47 = arith.addf %43, %46 : vector<7x48xf32>
    %c0_30 = arith.constant 0 : index
    %c0_31 = arith.constant 0 : index
    %c0_32 = arith.constant 0 : index
    %48 = vector.load %arg10[%c0_30, %c0_31, %c0_32] : memref<2x48x48xf32, #tpu.memory_space<vmem>>, vector<1x48x48xf32>
    %49 = vector.shape_cast %48 : vector<1x48x48xf32> to vector<48x48xf32>
    %cst_33 = arith.constant dense<0.000000e+00> : vector<7x48xf32>
    %50 = tpu.matmul %33, %49, %cst_33 {dimension_numbers = #tpu.dot_dimension_numbers<[1], [0], [0], [1], [0, 0, 1, 1], [], []>} : vector<7x48xf32>, vector<48x48xf32>, vector<7x48xf32> -> vector<7x48xf32>
    %c0_34 = arith.constant 0 : index
    %c0_35 = arith.constant 0 : index
    %c0_36 = arith.constant 0 : index
    %51 = vector.load %arg11[%c0_34, %c0_35, %c0_36] : memref<2x1x48xf32, #tpu.memory_space<vmem>>, vector<1x1x48xf32>
    %52 = vector.shape_cast %51 : vector<1x1x48xf32> to vector<1x48xf32>
    %53 = vector.broadcast %52 : vector<1x48xf32> to vector<7x48xf32>
    %54 = arith.addf %50, %53 : vector<7x48xf32>
    %55 = vector.extract_strided_slice %40 {offsets = [0, 0], sizes = [7, 12], strides = [1, 1]} : vector<7x48xf32> to vector<7x12xf32>
    %56 = vector.extract_strided_slice %47 {offsets = [0, 0], sizes = [7, 12], strides = [1, 1]} : vector<7x48xf32> to vector<7x12xf32>
    %57 = vector.extract_strided_slice %54 {offsets = [0, 0], sizes = [7, 12], strides = [1, 1]} : vector<7x48xf32> to vector<7x12xf32>
    %cst_37 = arith.constant dense<0.000000e+00> : vector<7x7xf32>
    %58 = tpu.matmul %55, %56, %cst_37 {dimension_numbers = #tpu.dot_dimension_numbers<[1], [1], [0], [0], [0, 0, 1, 0], [], []>} : vector<7x12xf32>, vector<7x12xf32>, vector<7x7xf32> -> vector<7x7xf32>
    %cst_38 = arith.constant 0.288675129 : f32
    %59 = vector.broadcast %cst_38 : f32 to vector<7x7xf32>
    %60 = arith.mulf %58, %59 : vector<7x7xf32>
    %61 = arith.addf %60, %9 : vector<7x7xf32>
    %cst_39 = arith.constant dense<0xFF800000> : vector<7xf32>
    %62 = vector.multi_reduction <maximumf>, %61, %cst_39 [1] : vector<7x7xf32> to vector<7xf32>
    %63 = vector.shape_cast %62 : vector<7xf32> to vector<7x1xf32>
    %64 = vector.broadcast %63 : vector<7x1xf32> to vector<7x7xf32>
    %65 = arith.subf %61, %64 : vector<7x7xf32>
    %66 = math.exp %65 : vector<7x7xf32>
    %cst_40 = arith.constant dense<0.000000e+00> : vector<7xf32>
    %67 = vector.multi_reduction <add>, %66, %cst_40 [1] : vector<7x7xf32> to vector<7xf32>
    %68 = vector.shape_cast %67 : vector<7xf32> to vector<7x1xf32>
    %69 = vector.broadcast %68 : vector<7x1xf32> to vector<7x7xf32>
    %70 = arith.divf %66, %69 : vector<7x7xf32>
    %cst_41 = arith.constant dense<0.000000e+00> : vector<7x12xf32>
    %71 = tpu.matmul %70, %57, %cst_41 {dimension_numbers = #tpu.dot_dimension_numbers<[1], [0], [0], [1], [0, 0, 1, 1], [], []>} : vector<7x7xf32>, vector<7x12xf32>, vector<7x12xf32> -> vector<7x12xf32>
    %72 = vector.extract_strided_slice %40 {offsets = [0, 12], sizes = [7, 12], strides = [1, 1]} : vector<7x48xf32> to vector<7x12xf32>
    %73 = vector.extract_strided_slice %47 {offsets = [0, 12], sizes = [7, 12], strides = [1, 1]} : vector<7x48xf32> to vector<7x12xf32>
    %74 = vector.extract_strided_slice %54 {offsets = [0, 12], sizes = [7, 12], strides = [1, 1]} : vector<7x48xf32> to vector<7x12xf32>
    %cst_42 = arith.constant dense<0.000000e+00> : vector<7x7xf32>
    %75 = tpu.matmul %72, %73, %cst_42 {dimension_numbers = #tpu.dot_dimension_numbers<[1], [1], [0], [0], [0, 0, 1, 0], [], []>} : vector<7x12xf32>, vector<7x12xf32>, vector<7x7xf32> -> vector<7x7xf32>
    %cst_43 = arith.constant 0.288675129 : f32
    %76 = vector.broadcast %cst_43 : f32 to vector<7x7xf32>
    %77 = arith.mulf %75, %76 : vector<7x7xf32>
    %78 = arith.addf %77, %9 : vector<7x7xf32>
    %cst_44 = arith.constant dense<0xFF800000> : vector<7xf32>
    %79 = vector.multi_reduction <maximumf>, %78, %cst_44 [1] : vector<7x7xf32> to vector<7xf32>
    %80 = vector.shape_cast %79 : vector<7xf32> to vector<7x1xf32>
    %81 = vector.broadcast %80 : vector<7x1xf32> to vector<7x7xf32>
    %82 = arith.subf %78, %81 : vector<7x7xf32>
    %83 = math.exp %82 : vector<7x7xf32>
    %cst_45 = arith.constant dense<0.000000e+00> : vector<7xf32>
    %84 = vector.multi_reduction <add>, %83, %cst_45 [1] : vector<7x7xf32> to vector<7xf32>
    %85 = vector.shape_cast %84 : vector<7xf32> to vector<7x1xf32>
    %86 = vector.broadcast %85 : vector<7x1xf32> to vector<7x7xf32>
    %87 = arith.divf %83, %86 : vector<7x7xf32>
    %cst_46 = arith.constant dense<0.000000e+00> : vector<7x12xf32>
    %88 = tpu.matmul %87, %74, %cst_46 {dimension_numbers = #tpu.dot_dimension_numbers<[1], [0], [0], [1], [0, 0, 1, 1], [], []>} : vector<7x7xf32>, vector<7x12xf32>, vector<7x12xf32> -> vector<7x12xf32>
    %89 = vector.extract_strided_slice %40 {offsets = [0, 24], sizes = [7, 12], strides = [1, 1]} : vector<7x48xf32> to vector<7x12xf32>
    %90 = vector.extract_strided_slice %47 {offsets = [0, 24], sizes = [7, 12], strides = [1, 1]} : vector<7x48xf32> to vector<7x12xf32>
    %91 = vector.extract_strided_slice %54 {offsets = [0, 24], sizes = [7, 12], strides = [1, 1]} : vector<7x48xf32> to vector<7x12xf32>
    %cst_47 = arith.constant dense<0.000000e+00> : vector<7x7xf32>
    %92 = tpu.matmul %89, %90, %cst_47 {dimension_numbers = #tpu.dot_dimension_numbers<[1], [1], [0], [0], [0, 0, 1, 0], [], []>} : vector<7x12xf32>, vector<7x12xf32>, vector<7x7xf32> -> vector<7x7xf32>
    %cst_48 = arith.constant 0.288675129 : f32
    %93 = vector.broadcast %cst_48 : f32 to vector<7x7xf32>
    %94 = arith.mulf %92, %93 : vector<7x7xf32>
    %95 = arith.addf %94, %9 : vector<7x7xf32>
    %cst_49 = arith.constant dense<0xFF800000> : vector<7xf32>
    %96 = vector.multi_reduction <maximumf>, %95, %cst_49 [1] : vector<7x7xf32> to vector<7xf32>
    %97 = vector.shape_cast %96 : vector<7xf32> to vector<7x1xf32>
    %98 = vector.broadcast %97 : vector<7x1xf32> to vector<7x7xf32>
    %99 = arith.subf %95, %98 : vector<7x7xf32>
    %100 = math.exp %99 : vector<7x7xf32>
    %cst_50 = arith.constant dense<0.000000e+00> : vector<7xf32>
    %101 = vector.multi_reduction <add>, %100, %cst_50 [1] : vector<7x7xf32> to vector<7xf32>
    %102 = vector.shape_cast %101 : vector<7xf32> to vector<7x1xf32>
    %103 = vector.broadcast %102 : vector<7x1xf32> to vector<7x7xf32>
    %104 = arith.divf %100, %103 : vector<7x7xf32>
    %cst_51 = arith.constant dense<0.000000e+00> : vector<7x12xf32>
    %105 = tpu.matmul %104, %91, %cst_51 {dimension_numbers = #tpu.dot_dimension_numbers<[1], [0], [0], [1], [0, 0, 1, 1], [], []>} : vector<7x7xf32>, vector<7x12xf32>, vector<7x12xf32> -> vector<7x12xf32>
    %106 = vector.extract_strided_slice %40 {offsets = [0, 36], sizes = [7, 12], strides = [1, 1]} : vector<7x48xf32> to vector<7x12xf32>
    %107 = vector.extract_strided_slice %47 {offsets = [0, 36], sizes = [7, 12], strides = [1, 1]} : vector<7x48xf32> to vector<7x12xf32>
    %108 = vector.extract_strided_slice %54 {offsets = [0, 36], sizes = [7, 12], strides = [1, 1]} : vector<7x48xf32> to vector<7x12xf32>
    %cst_52 = arith.constant dense<0.000000e+00> : vector<7x7xf32>
    %109 = tpu.matmul %106, %107, %cst_52 {dimension_numbers = #tpu.dot_dimension_numbers<[1], [1], [0], [0], [0, 0, 1, 0], [], []>} : vector<7x12xf32>, vector<7x12xf32>, vector<7x7xf32> -> vector<7x7xf32>
    %cst_53 = arith.constant 0.288675129 : f32
    %110 = vector.broadcast %cst_53 : f32 to vector<7x7xf32>
    %111 = arith.mulf %109, %110 : vector<7x7xf32>
    %112 = arith.addf %111, %9 : vector<7x7xf32>
    %cst_54 = arith.constant dense<0xFF800000> : vector<7xf32>
    %113 = vector.multi_reduction <maximumf>, %112, %cst_54 [1] : vector<7x7xf32> to vector<7xf32>
    %114 = vector.shape_cast %113 : vector<7xf32> to vector<7x1xf32>
    %115 = vector.broadcast %114 : vector<7x1xf32> to vector<7x7xf32>
    %116 = arith.subf %112, %115 : vector<7x7xf32>
    %117 = math.exp %116 : vector<7x7xf32>
    %cst_55 = arith.constant dense<0.000000e+00> : vector<7xf32>
    %118 = vector.multi_reduction <add>, %117, %cst_55 [1] : vector<7x7xf32> to vector<7xf32>
    %119 = vector.shape_cast %118 : vector<7xf32> to vector<7x1xf32>
    %120 = vector.broadcast %119 : vector<7x1xf32> to vector<7x7xf32>
    %121 = arith.divf %117, %120 : vector<7x7xf32>
    %cst_56 = arith.constant dense<0.000000e+00> : vector<7x12xf32>
    %122 = tpu.matmul %121, %108, %cst_56 {dimension_numbers = #tpu.dot_dimension_numbers<[1], [0], [0], [1], [0, 0, 1, 1], [], []>} : vector<7x7xf32>, vector<7x12xf32>, vector<7x12xf32> -> vector<7x12xf32>
    %123 = tpu.concatenate %71, %88, %105, %122 in 1 : vector<7x12xf32>, vector<7x12xf32>, vector<7x12xf32>, vector<7x12xf32> -> vector<7x48xf32>
    %c0_57 = arith.constant 0 : index
    %c0_58 = arith.constant 0 : index
    %c0_59 = arith.constant 0 : index
    %124 = vector.load %arg12[%c0_57, %c0_58, %c0_59] : memref<2x48x48xf32, #tpu.memory_space<vmem>>, vector<1x48x48xf32>
    %125 = vector.shape_cast %124 : vector<1x48x48xf32> to vector<48x48xf32>
    %cst_60 = arith.constant dense<0.000000e+00> : vector<7x48xf32>
    %126 = tpu.matmul %123, %125, %cst_60 {dimension_numbers = #tpu.dot_dimension_numbers<[1], [0], [0], [1], [0, 0, 1, 1], [], []>} : vector<7x48xf32>, vector<48x48xf32>, vector<7x48xf32> -> vector<7x48xf32>
    %127 = arith.addf %3, %126 : vector<7x48xf32>
    %c0_61 = arith.constant 0 : index
    %c0_62 = arith.constant 0 : index
    %c0_63 = arith.constant 0 : index
    %128 = vector.load %arg13[%c0_61, %c0_62, %c0_63] : memref<2x1x48xf32, #tpu.memory_space<vmem>>, vector<1x1x48xf32>
    %129 = vector.shape_cast %128 : vector<1x1x48xf32> to vector<1x48xf32>
    %130 = vector.broadcast %129 : vector<1x48xf32> to vector<7x48xf32>
    %131 = arith.addf %127, %130 : vector<7x48xf32>
    %c0_64 = arith.constant 0 : index
    %c0_65 = arith.constant 0 : index
    %c0_66 = arith.constant 0 : index
    %132 = vector.load %arg14[%c0_64, %c0_65, %c0_66] : memref<2x1x48xf32, #tpu.memory_space<vmem>>, vector<1x1x48xf32>
    %133 = vector.shape_cast %132 : vector<1x1x48xf32> to vector<1x48xf32>
    %c0_67 = arith.constant 0 : index
    %c0_68 = arith.constant 0 : index
    %c0_69 = arith.constant 0 : index
    %134 = vector.load %arg15[%c0_67, %c0_68, %c0_69] : memref<2x1x48xf32, #tpu.memory_space<vmem>>, vector<1x1x48xf32>
    %135 = vector.shape_cast %134 : vector<1x1x48xf32> to vector<1x48xf32>
    %cst_70 = arith.constant dense<0.000000e+00> : vector<7xf32>
    %136 = vector.multi_reduction <add>, %131, %cst_70 [1] : vector<7x48xf32> to vector<7xf32>
    %137 = vector.shape_cast %136 : vector<7xf32> to vector<7x1xf32>
    %cst_71 = arith.constant 4.800000e+01 : f32
    %138 = vector.broadcast %cst_71 : f32 to vector<7x1xf32>
    %139 = arith.divf %137, %138 : vector<7x1xf32>
    %140 = vector.broadcast %139 : vector<7x1xf32> to vector<7x48xf32>
    %141 = arith.subf %131, %140 : vector<7x48xf32>
    %142 = arith.mulf %141, %141 : vector<7x48xf32>
    %cst_72 = arith.constant dense<0.000000e+00> : vector<7xf32>
    %143 = vector.multi_reduction <add>, %142, %cst_72 [1] : vector<7x48xf32> to vector<7xf32>
    %144 = vector.shape_cast %143 : vector<7xf32> to vector<7x1xf32>
    %cst_73 = arith.constant 4.800000e+01 : f32
    %145 = vector.broadcast %cst_73 : f32 to vector<7x1xf32>
    %146 = arith.divf %144, %145 : vector<7x1xf32>
    %cst_74 = arith.constant 9.99999974E-6 : f32
    %147 = vector.broadcast %cst_74 : f32 to vector<7x1xf32>
    %148 = arith.addf %146, %147 : vector<7x1xf32>
    %149 = math.rsqrt %148 : vector<7x1xf32>
    %150 = vector.broadcast %149 : vector<7x1xf32> to vector<7x48xf32>
    %151 = arith.mulf %141, %150 : vector<7x48xf32>
    %152 = vector.broadcast %133 : vector<1x48xf32> to vector<7x48xf32>
    %153 = arith.mulf %151, %152 : vector<7x48xf32>
    %154 = vector.broadcast %135 : vector<1x48xf32> to vector<7x48xf32>
    %155 = arith.addf %153, %154 : vector<7x48xf32>
    %c0_75 = arith.constant 0 : index
    %c0_76 = arith.constant 0 : index
    %c0_77 = arith.constant 0 : index
    %156 = vector.load %arg16[%c0_75, %c0_76, %c0_77] : memref<2x48x192xf32, #tpu.memory_space<vmem>>, vector<1x48x192xf32>
    %157 = vector.shape_cast %156 : vector<1x48x192xf32> to vector<48x192xf32>
    %cst_78 = arith.constant dense<0.000000e+00> : vector<7x192xf32>
    %158 = tpu.matmul %155, %157, %cst_78 {dimension_numbers = #tpu.dot_dimension_numbers<[1], [0], [0], [1], [0, 0, 1, 1], [], []>} : vector<7x48xf32>, vector<48x192xf32>, vector<7x192xf32> -> vector<7x192xf32>
    %c0_79 = arith.constant 0 : index
    %c0_80 = arith.constant 0 : index
    %c0_81 = arith.constant 0 : index
    %159 = vector.load %arg17[%c0_79, %c0_80, %c0_81] : memref<2x1x192xf32, #tpu.memory_space<vmem>>, vector<1x1x192xf32>
    %160 = vector.shape_cast %159 : vector<1x1x192xf32> to vector<1x192xf32>
    %161 = vector.broadcast %160 : vector<1x192xf32> to vector<7x192xf32>
    %162 = arith.addf %158, %161 : vector<7x192xf32>
    %cst_82 = arith.constant 5.000000e-01 : f32
    %163 = vector.broadcast %cst_82 : f32 to vector<7x192xf32>
    %164 = arith.mulf %163, %162 : vector<7x192xf32>
    %cst_83 = arith.constant 4.471500e-02 : f32
    %165 = vector.broadcast %cst_83 : f32 to vector<7x192xf32>
    %166 = arith.mulf %165, %162 : vector<7x192xf32>
    %167 = arith.mulf %166, %162 : vector<7x192xf32>
    %168 = arith.mulf %167, %162 : vector<7x192xf32>
    %169 = arith.addf %162, %168 : vector<7x192xf32>
    %cst_84 = arith.constant 0.797884583 : f32
    %170 = vector.broadcast %cst_84 : f32 to vector<7x192xf32>
    %171 = arith.mulf %170, %169 : vector<7x192xf32>
    %172 = math.tanh %171 : vector<7x192xf32>
    %cst_85 = arith.constant 1.000000e+00 : f32
    %173 = vector.broadcast %cst_85 : f32 to vector<7x192xf32>
    %174 = arith.addf %173, %172 : vector<7x192xf32>
    %175 = arith.mulf %164, %174 : vector<7x192xf32>
    %c0_86 = arith.constant 0 : index
    %c0_87 = arith.constant 0 : index
    %c0_88 = arith.constant 0 : index
    %176 = vector.load %arg18[%c0_86, %c0_87, %c0_88] : memref<2x192x48xf32, #tpu.memory_space<vmem>>, vector<1x192x48xf32>
    %177 = vector.shape_cast %176 : vector<1x192x48xf32> to vector<192x48xf32>
    %cst_89 = arith.constant dense<0.000000e+00> : vector<7x48xf32>
    %178 = tpu.matmul %175, %177, %cst_89 {dimension_numbers = #tpu.dot_dimension_numbers<[1], [0], [0], [1], [0, 0, 1, 1], [], []>} : vector<7x192xf32>, vector<192x48xf32>, vector<7x48xf32> -> vector<7x48xf32>
    %179 = arith.addf %131, %178 : vector<7x48xf32>
    %c0_90 = arith.constant 0 : index
    %c0_91 = arith.constant 0 : index
    %c0_92 = arith.constant 0 : index
    %180 = vector.load %arg19[%c0_90, %c0_91, %c0_92] : memref<2x1x48xf32, #tpu.memory_space<vmem>>, vector<1x1x48xf32>
    %181 = vector.shape_cast %180 : vector<1x1x48xf32> to vector<1x48xf32>
    %182 = vector.broadcast %181 : vector<1x48xf32> to vector<7x48xf32>
    %183 = arith.addf %179, %182 : vector<7x48xf32>
    %c1 = arith.constant 1 : index
    %c0_93 = arith.constant 0 : index
    %c0_94 = arith.constant 0 : index
    %184 = vector.load %arg4[%c1, %c0_93, %c0_94] : memref<2x1x48xf32, #tpu.memory_space<vmem>>, vector<1x1x48xf32>
    %185 = vector.shape_cast %184 : vector<1x1x48xf32> to vector<1x48xf32>
    %c1_95 = arith.constant 1 : index
    %c0_96 = arith.constant 0 : index
    %c0_97 = arith.constant 0 : index
    %186 = vector.load %arg5[%c1_95, %c0_96, %c0_97] : memref<2x1x48xf32, #tpu.memory_space<vmem>>, vector<1x1x48xf32>
    %187 = vector.shape_cast %186 : vector<1x1x48xf32> to vector<1x48xf32>
    %cst_98 = arith.constant dense<0.000000e+00> : vector<7xf32>
    %188 = vector.multi_reduction <add>, %183, %cst_98 [1] : vector<7x48xf32> to vector<7xf32>
    %189 = vector.shape_cast %188 : vector<7xf32> to vector<7x1xf32>
    %cst_99 = arith.constant 4.800000e+01 : f32
    %190 = vector.broadcast %cst_99 : f32 to vector<7x1xf32>
    %191 = arith.divf %189, %190 : vector<7x1xf32>
    %192 = vector.broadcast %191 : vector<7x1xf32> to vector<7x48xf32>
    %193 = arith.subf %183, %192 : vector<7x48xf32>
    %194 = arith.mulf %193, %193 : vector<7x48xf32>
    %cst_100 = arith.constant dense<0.000000e+00> : vector<7xf32>
    %195 = vector.multi_reduction <add>, %194, %cst_100 [1] : vector<7x48xf32> to vector<7xf32>
    %196 = vector.shape_cast %195 : vector<7xf32> to vector<7x1xf32>
    %cst_101 = arith.constant 4.800000e+01 : f32
    %197 = vector.broadcast %cst_101 : f32 to vector<7x1xf32>
    %198 = arith.divf %196, %197 : vector<7x1xf32>
    %cst_102 = arith.constant 9.99999974E-6 : f32
    %199 = vector.broadcast %cst_102 : f32 to vector<7x1xf32>
    %200 = arith.addf %198, %199 : vector<7x1xf32>
    %201 = math.rsqrt %200 : vector<7x1xf32>
    %202 = vector.broadcast %201 : vector<7x1xf32> to vector<7x48xf32>
    %203 = arith.mulf %193, %202 : vector<7x48xf32>
    %204 = vector.broadcast %185 : vector<1x48xf32> to vector<7x48xf32>
    %205 = arith.mulf %203, %204 : vector<7x48xf32>
    %206 = vector.broadcast %187 : vector<1x48xf32> to vector<7x48xf32>
    %207 = arith.addf %205, %206 : vector<7x48xf32>
    %c1_103 = arith.constant 1 : index
    %c0_104 = arith.constant 0 : index
    %c0_105 = arith.constant 0 : index
    %208 = vector.load %arg6[%c1_103, %c0_104, %c0_105] : memref<2x48x48xf32, #tpu.memory_space<vmem>>, vector<1x48x48xf32>
    %209 = vector.shape_cast %208 : vector<1x48x48xf32> to vector<48x48xf32>
    %cst_106 = arith.constant dense<0.000000e+00> : vector<7x48xf32>
    %210 = tpu.matmul %207, %209, %cst_106 {dimension_numbers = #tpu.dot_dimension_numbers<[1], [0], [0], [1], [0, 0, 1, 1], [], []>} : vector<7x48xf32>, vector<48x48xf32>, vector<7x48xf32> -> vector<7x48xf32>
    %c1_107 = arith.constant 1 : index
    %c0_108 = arith.constant 0 : index
    %c0_109 = arith.constant 0 : index
    %211 = vector.load %arg7[%c1_107, %c0_108, %c0_109] : memref<2x1x48xf32, #tpu.memory_space<vmem>>, vector<1x1x48xf32>
    %212 = vector.shape_cast %211 : vector<1x1x48xf32> to vector<1x48xf32>
    %213 = vector.broadcast %212 : vector<1x48xf32> to vector<7x48xf32>
    %214 = arith.addf %210, %213 : vector<7x48xf32>
    %c1_110 = arith.constant 1 : index
    %c0_111 = arith.constant 0 : index
    %c0_112 = arith.constant 0 : index
    %215 = vector.load %arg8[%c1_110, %c0_111, %c0_112] : memref<2x48x48xf32, #tpu.memory_space<vmem>>, vector<1x48x48xf32>
    %216 = vector.shape_cast %215 : vector<1x48x48xf32> to vector<48x48xf32>
    %cst_113 = arith.constant dense<0.000000e+00> : vector<7x48xf32>
    %217 = tpu.matmul %207, %216, %cst_113 {dimension_numbers = #tpu.dot_dimension_numbers<[1], [0], [0], [1], [0, 0, 1, 1], [], []>} : vector<7x48xf32>, vector<48x48xf32>, vector<7x48xf32> -> vector<7x48xf32>
    %c1_114 = arith.constant 1 : index
    %c0_115 = arith.constant 0 : index
    %c0_116 = arith.constant 0 : index
    %218 = vector.load %arg9[%c1_114, %c0_115, %c0_116] : memref<2x1x48xf32, #tpu.memory_space<vmem>>, vector<1x1x48xf32>
    %219 = vector.shape_cast %218 : vector<1x1x48xf32> to vector<1x48xf32>
    %220 = vector.broadcast %219 : vector<1x48xf32> to vector<7x48xf32>
    %221 = arith.addf %217, %220 : vector<7x48xf32>
    %c1_117 = arith.constant 1 : index
    %c0_118 = arith.constant 0 : index
    %c0_119 = arith.constant 0 : index
    %222 = vector.load %arg10[%c1_117, %c0_118, %c0_119] : memref<2x48x48xf32, #tpu.memory_space<vmem>>, vector<1x48x48xf32>
    %223 = vector.shape_cast %222 : vector<1x48x48xf32> to vector<48x48xf32>
    %cst_120 = arith.constant dense<0.000000e+00> : vector<7x48xf32>
    %224 = tpu.matmul %207, %223, %cst_120 {dimension_numbers = #tpu.dot_dimension_numbers<[1], [0], [0], [1], [0, 0, 1, 1], [], []>} : vector<7x48xf32>, vector<48x48xf32>, vector<7x48xf32> -> vector<7x48xf32>
    %c1_121 = arith.constant 1 : index
    %c0_122 = arith.constant 0 : index
    %c0_123 = arith.constant 0 : index
    %225 = vector.load %arg11[%c1_121, %c0_122, %c0_123] : memref<2x1x48xf32, #tpu.memory_space<vmem>>, vector<1x1x48xf32>
    %226 = vector.shape_cast %225 : vector<1x1x48xf32> to vector<1x48xf32>
    %227 = vector.broadcast %226 : vector<1x48xf32> to vector<7x48xf32>
    %228 = arith.addf %224, %227 : vector<7x48xf32>
    %229 = vector.extract_strided_slice %214 {offsets = [0, 0], sizes = [7, 12], strides = [1, 1]} : vector<7x48xf32> to vector<7x12xf32>
    %230 = vector.extract_strided_slice %221 {offsets = [0, 0], sizes = [7, 12], strides = [1, 1]} : vector<7x48xf32> to vector<7x12xf32>
    %231 = vector.extract_strided_slice %228 {offsets = [0, 0], sizes = [7, 12], strides = [1, 1]} : vector<7x48xf32> to vector<7x12xf32>
    %cst_124 = arith.constant dense<0.000000e+00> : vector<7x7xf32>
    %232 = tpu.matmul %229, %230, %cst_124 {dimension_numbers = #tpu.dot_dimension_numbers<[1], [1], [0], [0], [0, 0, 1, 0], [], []>} : vector<7x12xf32>, vector<7x12xf32>, vector<7x7xf32> -> vector<7x7xf32>
    %cst_125 = arith.constant 0.288675129 : f32
    %233 = vector.broadcast %cst_125 : f32 to vector<7x7xf32>
    %234 = arith.mulf %232, %233 : vector<7x7xf32>
    %235 = arith.addf %234, %9 : vector<7x7xf32>
    %cst_126 = arith.constant dense<0xFF800000> : vector<7xf32>
    %236 = vector.multi_reduction <maximumf>, %235, %cst_126 [1] : vector<7x7xf32> to vector<7xf32>
    %237 = vector.shape_cast %236 : vector<7xf32> to vector<7x1xf32>
    %238 = vector.broadcast %237 : vector<7x1xf32> to vector<7x7xf32>
    %239 = arith.subf %235, %238 : vector<7x7xf32>
    %240 = math.exp %239 : vector<7x7xf32>
    %cst_127 = arith.constant dense<0.000000e+00> : vector<7xf32>
    %241 = vector.multi_reduction <add>, %240, %cst_127 [1] : vector<7x7xf32> to vector<7xf32>
    %242 = vector.shape_cast %241 : vector<7xf32> to vector<7x1xf32>
    %243 = vector.broadcast %242 : vector<7x1xf32> to vector<7x7xf32>
    %244 = arith.divf %240, %243 : vector<7x7xf32>
    %cst_128 = arith.constant dense<0.000000e+00> : vector<7x12xf32>
    %245 = tpu.matmul %244, %231, %cst_128 {dimension_numbers = #tpu.dot_dimension_numbers<[1], [0], [0], [1], [0, 0, 1, 1], [], []>} : vector<7x7xf32>, vector<7x12xf32>, vector<7x12xf32> -> vector<7x12xf32>
    %246 = vector.extract_strided_slice %214 {offsets = [0, 12], sizes = [7, 12], strides = [1, 1]} : vector<7x48xf32> to vector<7x12xf32>
    %247 = vector.extract_strided_slice %221 {offsets = [0, 12], sizes = [7, 12], strides = [1, 1]} : vector<7x48xf32> to vector<7x12xf32>
    %248 = vector.extract_strided_slice %228 {offsets = [0, 12], sizes = [7, 12], strides = [1, 1]} : vector<7x48xf32> to vector<7x12xf32>
    %cst_129 = arith.constant dense<0.000000e+00> : vector<7x7xf32>
    %249 = tpu.matmul %246, %247, %cst_129 {dimension_numbers = #tpu.dot_dimension_numbers<[1], [1], [0], [0], [0, 0, 1, 0], [], []>} : vector<7x12xf32>, vector<7x12xf32>, vector<7x7xf32> -> vector<7x7xf32>
    %cst_130 = arith.constant 0.288675129 : f32
    %250 = vector.broadcast %cst_130 : f32 to vector<7x7xf32>
    %251 = arith.mulf %249, %250 : vector<7x7xf32>
    %252 = arith.addf %251, %9 : vector<7x7xf32>
    %cst_131 = arith.constant dense<0xFF800000> : vector<7xf32>
    %253 = vector.multi_reduction <maximumf>, %252, %cst_131 [1] : vector<7x7xf32> to vector<7xf32>
    %254 = vector.shape_cast %253 : vector<7xf32> to vector<7x1xf32>
    %255 = vector.broadcast %254 : vector<7x1xf32> to vector<7x7xf32>
    %256 = arith.subf %252, %255 : vector<7x7xf32>
    %257 = math.exp %256 : vector<7x7xf32>
    %cst_132 = arith.constant dense<0.000000e+00> : vector<7xf32>
    %258 = vector.multi_reduction <add>, %257, %cst_132 [1] : vector<7x7xf32> to vector<7xf32>
    %259 = vector.shape_cast %258 : vector<7xf32> to vector<7x1xf32>
    %260 = vector.broadcast %259 : vector<7x1xf32> to vector<7x7xf32>
    %261 = arith.divf %257, %260 : vector<7x7xf32>
    %cst_133 = arith.constant dense<0.000000e+00> : vector<7x12xf32>
    %262 = tpu.matmul %261, %248, %cst_133 {dimension_numbers = #tpu.dot_dimension_numbers<[1], [0], [0], [1], [0, 0, 1, 1], [], []>} : vector<7x7xf32>, vector<7x12xf32>, vector<7x12xf32> -> vector<7x12xf32>
    %263 = vector.extract_strided_slice %214 {offsets = [0, 24], sizes = [7, 12], strides = [1, 1]} : vector<7x48xf32> to vector<7x12xf32>
    %264 = vector.extract_strided_slice %221 {offsets = [0, 24], sizes = [7, 12], strides = [1, 1]} : vector<7x48xf32> to vector<7x12xf32>
    %265 = vector.extract_strided_slice %228 {offsets = [0, 24], sizes = [7, 12], strides = [1, 1]} : vector<7x48xf32> to vector<7x12xf32>
    %cst_134 = arith.constant dense<0.000000e+00> : vector<7x7xf32>
    %266 = tpu.matmul %263, %264, %cst_134 {dimension_numbers = #tpu.dot_dimension_numbers<[1], [1], [0], [0], [0, 0, 1, 0], [], []>} : vector<7x12xf32>, vector<7x12xf32>, vector<7x7xf32> -> vector<7x7xf32>
    %cst_135 = arith.constant 0.288675129 : f32
    %267 = vector.broadcast %cst_135 : f32 to vector<7x7xf32>
    %268 = arith.mulf %266, %267 : vector<7x7xf32>
    %269 = arith.addf %268, %9 : vector<7x7xf32>
    %cst_136 = arith.constant dense<0xFF800000> : vector<7xf32>
    %270 = vector.multi_reduction <maximumf>, %269, %cst_136 [1] : vector<7x7xf32> to vector<7xf32>
    %271 = vector.shape_cast %270 : vector<7xf32> to vector<7x1xf32>
    %272 = vector.broadcast %271 : vector<7x1xf32> to vector<7x7xf32>
    %273 = arith.subf %269, %272 : vector<7x7xf32>
    %274 = math.exp %273 : vector<7x7xf32>
    %cst_137 = arith.constant dense<0.000000e+00> : vector<7xf32>
    %275 = vector.multi_reduction <add>, %274, %cst_137 [1] : vector<7x7xf32> to vector<7xf32>
    %276 = vector.shape_cast %275 : vector<7xf32> to vector<7x1xf32>
    %277 = vector.broadcast %276 : vector<7x1xf32> to vector<7x7xf32>
    %278 = arith.divf %274, %277 : vector<7x7xf32>
    %cst_138 = arith.constant dense<0.000000e+00> : vector<7x12xf32>
    %279 = tpu.matmul %278, %265, %cst_138 {dimension_numbers = #tpu.dot_dimension_numbers<[1], [0], [0], [1], [0, 0, 1, 1], [], []>} : vector<7x7xf32>, vector<7x12xf32>, vector<7x12xf32> -> vector<7x12xf32>
    %280 = vector.extract_strided_slice %214 {offsets = [0, 36], sizes = [7, 12], strides = [1, 1]} : vector<7x48xf32> to vector<7x12xf32>
    %281 = vector.extract_strided_slice %221 {offsets = [0, 36], sizes = [7, 12], strides = [1, 1]} : vector<7x48xf32> to vector<7x12xf32>
    %282 = vector.extract_strided_slice %228 {offsets = [0, 36], sizes = [7, 12], strides = [1, 1]} : vector<7x48xf32> to vector<7x12xf32>
    %cst_139 = arith.constant dense<0.000000e+00> : vector<7x7xf32>
    %283 = tpu.matmul %280, %281, %cst_139 {dimension_numbers = #tpu.dot_dimension_numbers<[1], [1], [0], [0], [0, 0, 1, 0], [], []>} : vector<7x12xf32>, vector<7x12xf32>, vector<7x7xf32> -> vector<7x7xf32>
    %cst_140 = arith.constant 0.288675129 : f32
    %284 = vector.broadcast %cst_140 : f32 to vector<7x7xf32>
    %285 = arith.mulf %283, %284 : vector<7x7xf32>
    %286 = arith.addf %285, %9 : vector<7x7xf32>
    %cst_141 = arith.constant dense<0xFF800000> : vector<7xf32>
    %287 = vector.multi_reduction <maximumf>, %286, %cst_141 [1] : vector<7x7xf32> to vector<7xf32>
    %288 = vector.shape_cast %287 : vector<7xf32> to vector<7x1xf32>
    %289 = vector.broadcast %288 : vector<7x1xf32> to vector<7x7xf32>
    %290 = arith.subf %286, %289 : vector<7x7xf32>
    %291 = math.exp %290 : vector<7x7xf32>
    %cst_142 = arith.constant dense<0.000000e+00> : vector<7xf32>
    %292 = vector.multi_reduction <add>, %291, %cst_142 [1] : vector<7x7xf32> to vector<7xf32>
    %293 = vector.shape_cast %292 : vector<7xf32> to vector<7x1xf32>
    %294 = vector.broadcast %293 : vector<7x1xf32> to vector<7x7xf32>
    %295 = arith.divf %291, %294 : vector<7x7xf32>
    %cst_143 = arith.constant dense<0.000000e+00> : vector<7x12xf32>
    %296 = tpu.matmul %295, %282, %cst_143 {dimension_numbers = #tpu.dot_dimension_numbers<[1], [0], [0], [1], [0, 0, 1, 1], [], []>} : vector<7x7xf32>, vector<7x12xf32>, vector<7x12xf32> -> vector<7x12xf32>
    %297 = tpu.concatenate %245, %262, %279, %296 in 1 : vector<7x12xf32>, vector<7x12xf32>, vector<7x12xf32>, vector<7x12xf32> -> vector<7x48xf32>
    %c1_144 = arith.constant 1 : index
    %c0_145 = arith.constant 0 : index
    %c0_146 = arith.constant 0 : index
    %298 = vector.load %arg12[%c1_144, %c0_145, %c0_146] : memref<2x48x48xf32, #tpu.memory_space<vmem>>, vector<1x48x48xf32>
    %299 = vector.shape_cast %298 : vector<1x48x48xf32> to vector<48x48xf32>
    %cst_147 = arith.constant dense<0.000000e+00> : vector<7x48xf32>
    %300 = tpu.matmul %297, %299, %cst_147 {dimension_numbers = #tpu.dot_dimension_numbers<[1], [0], [0], [1], [0, 0, 1, 1], [], []>} : vector<7x48xf32>, vector<48x48xf32>, vector<7x48xf32> -> vector<7x48xf32>
    %301 = arith.addf %183, %300 : vector<7x48xf32>
    %c1_148 = arith.constant 1 : index
    %c0_149 = arith.constant 0 : index
    %c0_150 = arith.constant 0 : index
    %302 = vector.load %arg13[%c1_148, %c0_149, %c0_150] : memref<2x1x48xf32, #tpu.memory_space<vmem>>, vector<1x1x48xf32>
    %303 = vector.shape_cast %302 : vector<1x1x48xf32> to vector<1x48xf32>
    %304 = vector.broadcast %303 : vector<1x48xf32> to vector<7x48xf32>
    %305 = arith.addf %301, %304 : vector<7x48xf32>
    %c1_151 = arith.constant 1 : index
    %c0_152 = arith.constant 0 : index
    %c0_153 = arith.constant 0 : index
    %306 = vector.load %arg14[%c1_151, %c0_152, %c0_153] : memref<2x1x48xf32, #tpu.memory_space<vmem>>, vector<1x1x48xf32>
    %307 = vector.shape_cast %306 : vector<1x1x48xf32> to vector<1x48xf32>
    %c1_154 = arith.constant 1 : index
    %c0_155 = arith.constant 0 : index
    %c0_156 = arith.constant 0 : index
    %308 = vector.load %arg15[%c1_154, %c0_155, %c0_156] : memref<2x1x48xf32, #tpu.memory_space<vmem>>, vector<1x1x48xf32>
    %309 = vector.shape_cast %308 : vector<1x1x48xf32> to vector<1x48xf32>
    %cst_157 = arith.constant dense<0.000000e+00> : vector<7xf32>
    %310 = vector.multi_reduction <add>, %305, %cst_157 [1] : vector<7x48xf32> to vector<7xf32>
    %311 = vector.shape_cast %310 : vector<7xf32> to vector<7x1xf32>
    %cst_158 = arith.constant 4.800000e+01 : f32
    %312 = vector.broadcast %cst_158 : f32 to vector<7x1xf32>
    %313 = arith.divf %311, %312 : vector<7x1xf32>
    %314 = vector.broadcast %313 : vector<7x1xf32> to vector<7x48xf32>
    %315 = arith.subf %305, %314 : vector<7x48xf32>
    %316 = arith.mulf %315, %315 : vector<7x48xf32>
    %cst_159 = arith.constant dense<0.000000e+00> : vector<7xf32>
    %317 = vector.multi_reduction <add>, %316, %cst_159 [1] : vector<7x48xf32> to vector<7xf32>
    %318 = vector.shape_cast %317 : vector<7xf32> to vector<7x1xf32>
    %cst_160 = arith.constant 4.800000e+01 : f32
    %319 = vector.broadcast %cst_160 : f32 to vector<7x1xf32>
    %320 = arith.divf %318, %319 : vector<7x1xf32>
    %cst_161 = arith.constant 9.99999974E-6 : f32
    %321 = vector.broadcast %cst_161 : f32 to vector<7x1xf32>
    %322 = arith.addf %320, %321 : vector<7x1xf32>
    %323 = math.rsqrt %322 : vector<7x1xf32>
    %324 = vector.broadcast %323 : vector<7x1xf32> to vector<7x48xf32>
    %325 = arith.mulf %315, %324 : vector<7x48xf32>
    %326 = vector.broadcast %307 : vector<1x48xf32> to vector<7x48xf32>
    %327 = arith.mulf %325, %326 : vector<7x48xf32>
    %328 = vector.broadcast %309 : vector<1x48xf32> to vector<7x48xf32>
    %329 = arith.addf %327, %328 : vector<7x48xf32>
    %c1_162 = arith.constant 1 : index
    %c0_163 = arith.constant 0 : index
    %c0_164 = arith.constant 0 : index
    %330 = vector.load %arg16[%c1_162, %c0_163, %c0_164] : memref<2x48x192xf32, #tpu.memory_space<vmem>>, vector<1x48x192xf32>
    %331 = vector.shape_cast %330 : vector<1x48x192xf32> to vector<48x192xf32>
    %cst_165 = arith.constant dense<0.000000e+00> : vector<7x192xf32>
    %332 = tpu.matmul %329, %331, %cst_165 {dimension_numbers = #tpu.dot_dimension_numbers<[1], [0], [0], [1], [0, 0, 1, 1], [], []>} : vector<7x48xf32>, vector<48x192xf32>, vector<7x192xf32> -> vector<7x192xf32>
    %c1_166 = arith.constant 1 : index
    %c0_167 = arith.constant 0 : index
    %c0_168 = arith.constant 0 : index
    %333 = vector.load %arg17[%c1_166, %c0_167, %c0_168] : memref<2x1x192xf32, #tpu.memory_space<vmem>>, vector<1x1x192xf32>
    %334 = vector.shape_cast %333 : vector<1x1x192xf32> to vector<1x192xf32>
    %335 = vector.broadcast %334 : vector<1x192xf32> to vector<7x192xf32>
    %336 = arith.addf %332, %335 : vector<7x192xf32>
    %cst_169 = arith.constant 5.000000e-01 : f32
    %337 = vector.broadcast %cst_169 : f32 to vector<7x192xf32>
    %338 = arith.mulf %337, %336 : vector<7x192xf32>
    %cst_170 = arith.constant 4.471500e-02 : f32
    %339 = vector.broadcast %cst_170 : f32 to vector<7x192xf32>
    %340 = arith.mulf %339, %336 : vector<7x192xf32>
    %341 = arith.mulf %340, %336 : vector<7x192xf32>
    %342 = arith.mulf %341, %336 : vector<7x192xf32>
    %343 = arith.addf %336, %342 : vector<7x192xf32>
    %cst_171 = arith.constant 0.797884583 : f32
    %344 = vector.broadcast %cst_171 : f32 to vector<7x192xf32>
    %345 = arith.mulf %344, %343 : vector<7x192xf32>
    %346 = math.tanh %345 : vector<7x192xf32>
    %cst_172 = arith.constant 1.000000e+00 : f32
    %347 = vector.broadcast %cst_172 : f32 to vector<7x192xf32>
    %348 = arith.addf %347, %346 : vector<7x192xf32>
    %349 = arith.mulf %338, %348 : vector<7x192xf32>
    %c1_173 = arith.constant 1 : index
    %c0_174 = arith.constant 0 : index
    %c0_175 = arith.constant 0 : index
    %350 = vector.load %arg18[%c1_173, %c0_174, %c0_175] : memref<2x192x48xf32, #tpu.memory_space<vmem>>, vector<1x192x48xf32>
    %351 = vector.shape_cast %350 : vector<1x192x48xf32> to vector<192x48xf32>
    %cst_176 = arith.constant dense<0.000000e+00> : vector<7x48xf32>
    %352 = tpu.matmul %349, %351, %cst_176 {dimension_numbers = #tpu.dot_dimension_numbers<[1], [0], [0], [1], [0, 0, 1, 1], [], []>} : vector<7x192xf32>, vector<192x48xf32>, vector<7x48xf32> -> vector<7x48xf32>
    %353 = arith.addf %305, %352 : vector<7x48xf32>
    %c1_177 = arith.constant 1 : index
    %c0_178 = arith.constant 0 : index
    %c0_179 = arith.constant 0 : index
    %354 = vector.load %arg19[%c1_177, %c0_178, %c0_179] : memref<2x1x48xf32, #tpu.memory_space<vmem>>, vector<1x1x48xf32>
    %355 = vector.shape_cast %354 : vector<1x1x48xf32> to vector<1x48xf32>
    %356 = vector.broadcast %355 : vector<1x48xf32> to vector<7x48xf32>
    %357 = arith.addf %353, %356 : vector<7x48xf32>
    %c0_180 = arith.constant 0 : index
    %c0_181 = arith.constant 0 : index
    %358 = vector.load %arg20[%c0_180, %c0_181] : memref<1x48xf32, #tpu.memory_space<vmem>>, vector<1x48xf32>
    %c0_182 = arith.constant 0 : index
    %c0_183 = arith.constant 0 : index
    %359 = vector.load %arg21[%c0_182, %c0_183] : memref<1x48xf32, #tpu.memory_space<vmem>>, vector<1x48xf32>
    %cst_184 = arith.constant dense<0.000000e+00> : vector<7xf32>
    %360 = vector.multi_reduction <add>, %357, %cst_184 [1] : vector<7x48xf32> to vector<7xf32>
    %361 = vector.shape_cast %360 : vector<7xf32> to vector<7x1xf32>
    %cst_185 = arith.constant 4.800000e+01 : f32
    %362 = vector.broadcast %cst_185 : f32 to vector<7x1xf32>
    %363 = arith.divf %361, %362 : vector<7x1xf32>
    %364 = vector.broadcast %363 : vector<7x1xf32> to vector<7x48xf32>
    %365 = arith.subf %357, %364 : vector<7x48xf32>
    %366 = arith.mulf %365, %365 : vector<7x48xf32>
    %cst_186 = arith.constant dense<0.000000e+00> : vector<7xf32>
    %367 = vector.multi_reduction <add>, %366, %cst_186 [1] : vector<7x48xf32> to vector<7xf32>
    %368 = vector.shape_cast %367 : vector<7xf32> to vector<7x1xf32>
    %cst_187 = arith.constant 4.800000e+01 : f32
    %369 = vector.broadcast %cst_187 : f32 to vector<7x1xf32>
    %370 = arith.divf %368, %369 : vector<7x1xf32>
    %cst_188 = arith.constant 9.99999974E-6 : f32
    %371 = vector.broadcast %cst_188 : f32 to vector<7x1xf32>
    %372 = arith.addf %370, %371 : vector<7x1xf32>
    %373 = math.rsqrt %372 : vector<7x1xf32>
    %374 = vector.broadcast %373 : vector<7x1xf32> to vector<7x48xf32>
    %375 = arith.mulf %365, %374 : vector<7x48xf32>
    %376 = vector.broadcast %358 : vector<1x48xf32> to vector<7x48xf32>
    %377 = arith.mulf %375, %376 : vector<7x48xf32>
    %378 = vector.broadcast %359 : vector<1x48xf32> to vector<7x48xf32>
    %379 = arith.addf %377, %378 : vector<7x48xf32>
    %cst_189 = arith.constant 0.000000e+00 : f32
    %380 = vector.broadcast %cst_189 : f32 to vector<1x8xf32>
    %381 = vector.extract_strided_slice %379 {offsets = [0, 0], sizes = [1, 48], strides = [1, 1]} : vector<7x48xf32> to vector<1x48xf32>
    %c0_190 = arith.constant 0 : index
    %c0_191 = arith.constant 0 : index
    %c0_192 = arith.constant 0 : index
    %382 = vector.load %arg22[%c0_190, %c0_191, %c0_192] : memref<7x48x8xf32, #tpu.memory_space<vmem>>, vector<1x48x8xf32>
    %383 = vector.shape_cast %382 : vector<1x48x8xf32> to vector<48x8xf32>
    %cst_193 = arith.constant dense<0.000000e+00> : vector<1x8xf32>
    %384 = tpu.matmul %381, %383, %cst_193 {dimension_numbers = #tpu.dot_dimension_numbers<[1], [0], [0], [1], [0, 0, 1, 1], [], []>} : vector<1x48xf32>, vector<48x8xf32>, vector<1x8xf32> -> vector<1x8xf32>
    %385 = arith.addf %380, %384 : vector<1x8xf32>
    %386 = vector.extract_strided_slice %379 {offsets = [1, 0], sizes = [1, 48], strides = [1, 1]} : vector<7x48xf32> to vector<1x48xf32>
    %c1_194 = arith.constant 1 : index
    %c0_195 = arith.constant 0 : index
    %c0_196 = arith.constant 0 : index
    %387 = vector.load %arg22[%c1_194, %c0_195, %c0_196] : memref<7x48x8xf32, #tpu.memory_space<vmem>>, vector<1x48x8xf32>
    %388 = vector.shape_cast %387 : vector<1x48x8xf32> to vector<48x8xf32>
    %cst_197 = arith.constant dense<0.000000e+00> : vector<1x8xf32>
    %389 = tpu.matmul %386, %388, %cst_197 {dimension_numbers = #tpu.dot_dimension_numbers<[1], [0], [0], [1], [0, 0, 1, 1], [], []>} : vector<1x48xf32>, vector<48x8xf32>, vector<1x8xf32> -> vector<1x8xf32>
    %390 = arith.addf %385, %389 : vector<1x8xf32>
    %391 = vector.extract_strided_slice %379 {offsets = [2, 0], sizes = [1, 48], strides = [1, 1]} : vector<7x48xf32> to vector<1x48xf32>
    %c2 = arith.constant 2 : index
    %c0_198 = arith.constant 0 : index
    %c0_199 = arith.constant 0 : index
    %392 = vector.load %arg22[%c2, %c0_198, %c0_199] : memref<7x48x8xf32, #tpu.memory_space<vmem>>, vector<1x48x8xf32>
    %393 = vector.shape_cast %392 : vector<1x48x8xf32> to vector<48x8xf32>
    %cst_200 = arith.constant dense<0.000000e+00> : vector<1x8xf32>
    %394 = tpu.matmul %391, %393, %cst_200 {dimension_numbers = #tpu.dot_dimension_numbers<[1], [0], [0], [1], [0, 0, 1, 1], [], []>} : vector<1x48xf32>, vector<48x8xf32>, vector<1x8xf32> -> vector<1x8xf32>
    %395 = arith.addf %390, %394 : vector<1x8xf32>
    %396 = vector.extract_strided_slice %379 {offsets = [3, 0], sizes = [1, 48], strides = [1, 1]} : vector<7x48xf32> to vector<1x48xf32>
    %c3 = arith.constant 3 : index
    %c0_201 = arith.constant 0 : index
    %c0_202 = arith.constant 0 : index
    %397 = vector.load %arg22[%c3, %c0_201, %c0_202] : memref<7x48x8xf32, #tpu.memory_space<vmem>>, vector<1x48x8xf32>
    %398 = vector.shape_cast %397 : vector<1x48x8xf32> to vector<48x8xf32>
    %cst_203 = arith.constant dense<0.000000e+00> : vector<1x8xf32>
    %399 = tpu.matmul %396, %398, %cst_203 {dimension_numbers = #tpu.dot_dimension_numbers<[1], [0], [0], [1], [0, 0, 1, 1], [], []>} : vector<1x48xf32>, vector<48x8xf32>, vector<1x8xf32> -> vector<1x8xf32>
    %400 = arith.addf %395, %399 : vector<1x8xf32>
    %401 = vector.extract_strided_slice %379 {offsets = [4, 0], sizes = [1, 48], strides = [1, 1]} : vector<7x48xf32> to vector<1x48xf32>
    %c4 = arith.constant 4 : index
    %c0_204 = arith.constant 0 : index
    %c0_205 = arith.constant 0 : index
    %402 = vector.load %arg22[%c4, %c0_204, %c0_205] : memref<7x48x8xf32, #tpu.memory_space<vmem>>, vector<1x48x8xf32>
    %403 = vector.shape_cast %402 : vector<1x48x8xf32> to vector<48x8xf32>
    %cst_206 = arith.constant dense<0.000000e+00> : vector<1x8xf32>
    %404 = tpu.matmul %401, %403, %cst_206 {dimension_numbers = #tpu.dot_dimension_numbers<[1], [0], [0], [1], [0, 0, 1, 1], [], []>} : vector<1x48xf32>, vector<48x8xf32>, vector<1x8xf32> -> vector<1x8xf32>
    %405 = arith.addf %400, %404 : vector<1x8xf32>
    %406 = vector.extract_strided_slice %379 {offsets = [5, 0], sizes = [1, 48], strides = [1, 1]} : vector<7x48xf32> to vector<1x48xf32>
    %c5 = arith.constant 5 : index
    %c0_207 = arith.constant 0 : index
    %c0_208 = arith.constant 0 : index
    %407 = vector.load %arg22[%c5, %c0_207, %c0_208] : memref<7x48x8xf32, #tpu.memory_space<vmem>>, vector<1x48x8xf32>
    %408 = vector.shape_cast %407 : vector<1x48x8xf32> to vector<48x8xf32>
    %cst_209 = arith.constant dense<0.000000e+00> : vector<1x8xf32>
    %409 = tpu.matmul %406, %408, %cst_209 {dimension_numbers = #tpu.dot_dimension_numbers<[1], [0], [0], [1], [0, 0, 1, 1], [], []>} : vector<1x48xf32>, vector<48x8xf32>, vector<1x8xf32> -> vector<1x8xf32>
    %410 = arith.addf %405, %409 : vector<1x8xf32>
    %411 = vector.extract_strided_slice %379 {offsets = [6, 0], sizes = [1, 48], strides = [1, 1]} : vector<7x48xf32> to vector<1x48xf32>
    %c6 = arith.constant 6 : index
    %c0_210 = arith.constant 0 : index
    %c0_211 = arith.constant 0 : index
    %412 = vector.load %arg22[%c6, %c0_210, %c0_211] : memref<7x48x8xf32, #tpu.memory_space<vmem>>, vector<1x48x8xf32>
    %413 = vector.shape_cast %412 : vector<1x48x8xf32> to vector<48x8xf32>
    %cst_212 = arith.constant dense<0.000000e+00> : vector<1x8xf32>
    %414 = tpu.matmul %411, %413, %cst_212 {dimension_numbers = #tpu.dot_dimension_numbers<[1], [0], [0], [1], [0, 0, 1, 1], [], []>} : vector<1x48xf32>, vector<48x8xf32>, vector<1x8xf32> -> vector<1x8xf32>
    %415 = arith.addf %410, %414 : vector<1x8xf32>
    %c0_213 = arith.constant 0 : index
    %c0_214 = arith.constant 0 : index
    %416 = vector.load %arg23[%c0_213, %c0_214] : memref<1x8xf32, #tpu.memory_space<vmem>>, vector<1x8xf32>
    %cst_215 = arith.constant 3.000000e+00 : f32
    %417 = vector.broadcast %cst_215 : f32 to vector<1x8xf32>
    %418 = arith.mulf %417, %416 : vector<1x8xf32>
    %419 = arith.addf %415, %418 : vector<1x8xf32>
    %c0_216 = arith.constant 0 : index
    %c0_217 = arith.constant 0 : index
    %c1_218 = arith.constant 1 : index
    %420 = vector.load %arg2[%c0_216, %c0_217, %c1_218] : memref<1x1x2xf32, #tpu.memory_space<vmem>>, vector<1x1x1xf32>
    %421 = vector.shape_cast %420 : vector<1x1x1xf32> to vector<1x1xf32>
    %422 = vector.broadcast %421 : vector<1x1xf32> to vector<1x8xf32>
    %423 = arith.mulf %419, %422 : vector<1x8xf32>
    %c0_219 = arith.constant 0 : index
    %c0_220 = arith.constant 0 : index
    %c0_221 = arith.constant 0 : index
    %424 = vector.load %arg2[%c0_219, %c0_220, %c0_221] : memref<1x1x2xf32, #tpu.memory_space<vmem>>, vector<1x1x1xf32>
    %425 = vector.shape_cast %424 : vector<1x1x1xf32> to vector<1x1xf32>
    %426 = vector.broadcast %425 : vector<1x1xf32> to vector<1x8xf32>
    %427 = arith.addf %423, %426 : vector<1x8xf32>
    %c0_222 = arith.constant 0 : index
    %c0_223 = arith.constant 0 : index
    %c0_224 = arith.constant 0 : index
    %428 = vector.load %arg24[%c0_222, %c0_223, %c0_224] : memref<1x1x8xf32, #tpu.memory_space<vmem>>, vector<1x1x8xf32>
    %429 = vector.shape_cast %428 : vector<1x1x8xf32> to vector<1x8xf32>
    %430 = vector.shape_cast %427 : vector<1x8xf32> to vector<1x1x8xf32>
    tpu.vector_store %arg24[%c0_222, %c0_223, %c0_224], %430 {strides = array<i32>} : memref<1x1x8xf32, #tpu.memory_space<vmem>>, vector<1x1x8xf32>,
    return
  }
  func.func @transform_0(%arg0: i32) -> (i32, i32, i32) {
    %c0_i32 = arith.constant 0 : i32
    %c0_i32_0 = arith.constant 0 : i32
    %c0_i32_1 = arith.constant 0 : i32
    return %arg0, %c0_i32, %c0_i32_0 : i32, i32, i32
  }
  func.func @transform_1(%arg0: i32) -> (i32, i32, i32) {
    %c0_i32 = arith.constant 0 : i32
    %c0_i32_0 = arith.constant 0 : i32
    %c0_i32_1 = arith.constant 0 : i32
    return %arg0, %c0_i32, %c0_i32_0 : i32, i32, i32
  }
  func.func @transform_2(%arg0: i32) -> (i32, i32) {
    %c0_i32 = arith.constant 0 : i32
    %c0_i32_0 = arith.constant 0 : i32
    %c0_i32_1 = arith.constant 0 : i32
    return %c0_i32, %c0_i32_0 : i32, i32
  }
  func.func @transform_3(%arg0: i32) -> (i32, i32, i32) {
    %c0_i32 = arith.constant 0 : i32
    %c0_i32_0 = arith.constant 0 : i32
    %c0_i32_1 = arith.constant 0 : i32
    %c0_i32_2 = arith.constant 0 : i32
    return %c0_i32, %c0_i32_0, %c0_i32_1 : i32, i32, i32
  }
  func.func @transform_4(%arg0: i32) -> (i32, i32, i32) {
    %c0_i32 = arith.constant 0 : i32
    %c0_i32_0 = arith.constant 0 : i32
    %c0_i32_1 = arith.constant 0 : i32
    %c0_i32_2 = arith.constant 0 : i32
    return %c0_i32, %c0_i32_0, %c0_i32_1 : i32, i32, i32
  }
  func.func @transform_5(%arg0: i32) -> (i32, i32, i32) {
    %c0_i32 = arith.constant 0 : i32
    %c0_i32_0 = arith.constant 0 : i32
    %c0_i32_1 = arith.constant 0 : i32
    %c0_i32_2 = arith.constant 0 : i32
    return %c0_i32, %c0_i32_0, %c0_i32_1 : i32, i32, i32
  }
  func.func @transform_6(%arg0: i32) -> (i32, i32, i32) {
    %c0_i32 = arith.constant 0 : i32
    %c0_i32_0 = arith.constant 0 : i32
    %c0_i32_1 = arith.constant 0 : i32
    %c0_i32_2 = arith.constant 0 : i32
    return %c0_i32, %c0_i32_0, %c0_i32_1 : i32, i32, i32
  }
  func.func @transform_7(%arg0: i32) -> (i32, i32, i32) {
    %c0_i32 = arith.constant 0 : i32
    %c0_i32_0 = arith.constant 0 : i32
    %c0_i32_1 = arith.constant 0 : i32
    %c0_i32_2 = arith.constant 0 : i32
    return %c0_i32, %c0_i32_0, %c0_i32_1 : i32, i32, i32
  }
  func.func @transform_8(%arg0: i32) -> (i32, i32, i32) {
    %c0_i32 = arith.constant 0 : i32
    %c0_i32_0 = arith.constant 0 : i32
    %c0_i32_1 = arith.constant 0 : i32
    %c0_i32_2 = arith.constant 0 : i32
    return %c0_i32, %c0_i32_0, %c0_i32_1 : i32, i32, i32
  }
  func.func @transform_9(%arg0: i32) -> (i32, i32, i32) {
    %c0_i32 = arith.constant 0 : i32
    %c0_i32_0 = arith.constant 0 : i32
    %c0_i32_1 = arith.constant 0 : i32
    %c0_i32_2 = arith.constant 0 : i32
    return %c0_i32, %c0_i32_0, %c0_i32_1 : i32, i32, i32
  }
  func.func @transform_10(%arg0: i32) -> (i32, i32, i32) {
    %c0_i32 = arith.constant 0 : i32
    %c0_i32_0 = arith.constant 0 : i32
    %c0_i32_1 = arith.constant 0 : i32
    %c0_i32_2 = arith.constant 0 : i32
    return %c0_i32, %c0_i32_0, %c0_i32_1 : i32, i32, i32
  }
  func.func @transform_11(%arg0: i32) -> (i32, i32, i32) {
    %c0_i32 = arith.constant 0 : i32
    %c0_i32_0 = arith.constant 0 : i32
    %c0_i32_1 = arith.constant 0 : i32
    %c0_i32_2 = arith.constant 0 : i32
    return %c0_i32, %c0_i32_0, %c0_i32_1 : i32, i32, i32
  }
  func.func @transform_12(%arg0: i32) -> (i32, i32, i32) {
    %c0_i32 = arith.constant 0 : i32
    %c0_i32_0 = arith.constant 0 : i32
    %c0_i32_1 = arith.constant 0 : i32
    %c0_i32_2 = arith.constant 0 : i32
    return %c0_i32, %c0_i32_0, %c0_i32_1 : i32, i32, i32
  }
  func.func @transform_13(%arg0: i32) -> (i32, i32, i32) {
    %c0_i32 = arith.constant 0 : i32
    %c0_i32_0 = arith.constant 0 : i32
    %c0_i32_1 = arith.constant 0 : i32
    %c0_i32_2 = arith.constant 0 : i32
    return %c0_i32, %c0_i32_0, %c0_i32_1 : i32, i32, i32
  }
  func.func @transform_14(%arg0: i32) -> (i32, i32, i32) {
    %c0_i32 = arith.constant 0 : i32
    %c0_i32_0 = arith.constant 0 : i32
    %c0_i32_1 = arith.constant 0 : i32
    %c0_i32_2 = arith.constant 0 : i32
    return %c0_i32, %c0_i32_0, %c0_i32_1 : i32, i32, i32
  }
  func.func @transform_15(%arg0: i32) -> (i32, i32, i32) {
    %c0_i32 = arith.constant 0 : i32
    %c0_i32_0 = arith.constant 0 : i32
    %c0_i32_1 = arith.constant 0 : i32
    %c0_i32_2 = arith.constant 0 : i32
    return %c0_i32, %c0_i32_0, %c0_i32_1 : i32, i32, i32
  }
  func.func @transform_16(%arg0: i32) -> (i32, i32, i32) {
    %c0_i32 = arith.constant 0 : i32
    %c0_i32_0 = arith.constant 0 : i32
    %c0_i32_1 = arith.constant 0 : i32
    %c0_i32_2 = arith.constant 0 : i32
    return %c0_i32, %c0_i32_0, %c0_i32_1 : i32, i32, i32
  }
  func.func @transform_17(%arg0: i32) -> (i32, i32, i32) {
    %c0_i32 = arith.constant 0 : i32
    %c0_i32_0 = arith.constant 0 : i32
    %c0_i32_1 = arith.constant 0 : i32
    %c0_i32_2 = arith.constant 0 : i32
    return %c0_i32, %c0_i32_0, %c0_i32_1 : i32, i32, i32
  }
  func.func @transform_18(%arg0: i32) -> (i32, i32, i32) {
    %c0_i32 = arith.constant 0 : i32
    %c0_i32_0 = arith.constant 0 : i32
    %c0_i32_1 = arith.constant 0 : i32
    %c0_i32_2 = arith.constant 0 : i32
    return %c0_i32, %c0_i32_0, %c0_i32_1 : i32, i32, i32
  }
  func.func @transform_19(%arg0: i32) -> (i32, i32) {
    %c0_i32 = arith.constant 0 : i32
    %c0_i32_0 = arith.constant 0 : i32
    %c0_i32_1 = arith.constant 0 : i32
    return %c0_i32, %c0_i32_0 : i32, i32
  }
  func.func @transform_20(%arg0: i32) -> (i32, i32) {
    %c0_i32 = arith.constant 0 : i32
    %c0_i32_0 = arith.constant 0 : i32
    %c0_i32_1 = arith.constant 0 : i32
    return %c0_i32, %c0_i32_0 : i32, i32
  }
  func.func @transform_21(%arg0: i32) -> (i32, i32, i32) {
    %c0_i32 = arith.constant 0 : i32
    %c0_i32_0 = arith.constant 0 : i32
    %c0_i32_1 = arith.constant 0 : i32
    %c0_i32_2 = arith.constant 0 : i32
    return %c0_i32, %c0_i32_0, %c0_i32_1 : i32, i32, i32
  }
  func.func @transform_22(%arg0: i32) -> (i32, i32) {
    %c0_i32 = arith.constant 0 : i32
    %c0_i32_0 = arith.constant 0 : i32
    %c0_i32_1 = arith.constant 0 : i32
    return %c0_i32, %c0_i32_0 : i32, i32
  }
  func.func @transform_23(%arg0: i32) -> (i32, i32, i32) {
    %c0_i32 = arith.constant 0 : i32
    %c0_i32_0 = arith.constant 0 : i32
    %c0_i32_1 = arith.constant 0 : i32
    return %arg0, %c0_i32, %c0_i32_0 : i32, i32, i32
  }
}

</mosaic_0001>

<llo_original>
// kernel: forecast.2
$region0: #{forecast.2}
  #allocation0 [shape = 'u32[]', space=smem, size = 0x4, offset = 0x4, fixed_abs, tag = 'smem constant byte address 0x4 - core index']
  #allocation1 [shape = 'u32[72,128]{1,0:T(1,128)}', space=vmem, size = 0x9000, scoped, tag = 'internal scratch']
  %s0 = inlined_call_operand.vmem [shape: f32[4,16], index: 0, kind: input, shape index: {}]
  %s1 = inlined_call_operand.hbm [shape: f32[16,16], index: 1, kind: input, shape index: {}]
  %s2 = inlined_call_operand.vmem [shape: f32[16,16], index: 2, kind: input, shape index: {}]
  %s3 = inlined_call_operand.hbm [shape: f32[48,240], index: 3, kind: input, shape index: {}]
  %s4 = inlined_call_operand.vmem [shape: f32[1,240], index: 4, kind: input, shape index: {}]
  %s5 = inlined_call_operand.hbm [shape: f32[48,48], index: 5, kind: input, shape index: {}]
  %s6 = inlined_call_operand.vmem [shape: f32[1,48], index: 6, kind: input, shape index: {}]
  %s7 = inlined_call_operand.vmem [shape: f32[8,48], index: 7, kind: input, shape index: {}]
  %s8 = inlined_call_operand.vmem [shape: f32[4,240], index: 8, kind: output, shape index: {0}]
  %s9 = inlined_call_operand.vmem [shape: f32[4,8], index: 9, kind: output, shape index: {1}]
  %s10 = inlined_call_operand.vmem [shape: f32[4,2], index: 10, kind: output, shape index: {2}]
  %11 = xla_tuple %s8, %s9, %s10
  %s12 = sld [smem:[#allocation0]]
  $region70: #{forecast.2} parent=0
    _
  %s14 = ssub.s32 1, %s12
  %s15 = scalar_select 0, %s14, %s12
  $region1: #{forecast.2} parent=0
    #allocation2 [shape = 'u8[8192]{0}', space=vmem, size = 0x2000, scoped, tag = 'input window, operand 1, single buffered']
    #allocation3 [shape = 's32[1]{0}', space=sflag, size = 0x4, scoped, tag = 'scoped memory for forecast.2']
    #allocation4 [shape = 'u8[49152]{0}', space=vmem, size = 0xc000, scoped, tag = 'input window, operand 3, single buffered']
    #allocation5 [shape = 's32[1]{0}', space=sflag, size = 0x4, scoped, tag = 'scoped memory for forecast.2']
    #allocation6 [shape = 'u8[24576]{0}', space=vmem, size = 0x6000, scoped, tag = 'input window, operand 5, single buffered']
    %16 = vsyncpa [#allocation3], 0
    %17 = vsyncpa [#allocation5], 0
    // Predicated region
    $region2: #{forecast.2} parent=1 // pred_check
      _
    $region3: #{forecast.2} parent=1 // pred_check_branch
      %19 = sbr.rel (0) target = $region5
    $region4: #{forecast.2} parent=1 // pred_region
      _
    $region5: #{forecast.2} parent=1 // pred_fallthru
      _
    // Predicated region
    $region6: #{forecast.2} parent=1 // pred_check
      _
    $region7: #{forecast.2} parent=1 // pred_check_branch
      %21 = sbr.rel (0) target = $region9
    $region8: #{forecast.2} parent=1 // pred_region
      %23 = vsyncadd [#allocation3], 0
      %s24 = sshll.u32 %s1, 4
      %s25 = int_to_ptr.hbm [resolvable:$true] %s24
      %s26 = sshll.u32 [#allocation2], 4
      %s27 = int_to_ptr.vmem [resolvable:$true] %s26
      %32 = dma.hbm_to_vmem [thread:$0]  %s25, 256, %s27, [#allocation3], 128, 128, 8
    $region9: #{forecast.2} parent=1 // pred_fallthru
      _
    // Predicated region
    $region10: #{forecast.2} parent=1 // pred_check
      _
    $region11: #{forecast.2} parent=1 // pred_check_branch
      %34 = sbr.rel (0) target = $region13
    $region12: #{forecast.2} parent=1 // pred_region
      _
    $region13: #{forecast.2} parent=1 // pred_fallthru
      _
    // Predicated region
    $region14: #{forecast.2} parent=1 // pred_check
      _
    $region15: #{forecast.2} parent=1 // pred_check_branch
      %36 = sbr.rel (0) target = $region17
    $region16: #{forecast.2} parent=1 // pred_region
      %38 = vsyncadd [#allocation5], 0
      %s39 = sshll.u32 %s3, 4
      %s40 = int_to_ptr.hbm [resolvable:$true] %s39
      %s41 = sshll.u32 [#allocation4], 4
      %s42 = int_to_ptr.vmem [resolvable:$true] %s41
      %47 = dma.hbm_to_vmem [thread:$0]  %s40, 1536, %s42, [#allocation5], 256, 256, 16
    $region17: #{forecast.2} parent=1 // pred_fallthru
      _
    // Predicated region
    $region18: #{forecast.2} parent=1 // pred_check
      _
    $region19: #{forecast.2} parent=1 // pred_check_branch
      %49 = sbr.rel (0) target = $region21
    $region20: #{forecast.2} parent=1 // pred_region
      _
    $region21: #{forecast.2} parent=1 // pred_fallthru
      _
    // Predicated region
    $region22: #{forecast.2} parent=1 // pred_check
      _
    $region23: #{forecast.2} parent=1 // pred_check_branch
      %51 = sbr.rel (0) target = $region25
    $region24: #{forecast.2} parent=1 // pred_region
      %53 = vsyncadd [#allocation5], 0
      %s54 = sshll.u32 %s5, 4
      %s55 = int_to_ptr.hbm [resolvable:$true] %s54
      %s56 = sshll.u32 [#allocation6], 4
      %s57 = int_to_ptr.vmem [resolvable:$true] %s56
      %62 = dma.hbm_to_vmem [thread:$0]  %s55, 768, %s57, [#allocation5], 128, 128, 8
    $region25: #{forecast.2} parent=1 // pred_fallthru
      _
    // Predicated region
    $region26: #{forecast.2} parent=1 // pred_check
      _
    $region27: #{forecast.2} parent=1 // pred_check_branch
      %64 = sbr.rel (0) target = $region29
    $region28: #{forecast.2} parent=1 // pred_region
      _
    $region29: #{forecast.2} parent=1 // pred_fallthru
      _
    // Predicated region
    $region30: #{forecast.2} parent=1 // pred_check
      _
    $region31: #{forecast.2} parent=1 // pred_check_branch
      %66 = sbr.rel (0) target = $region33
    $region32: #{forecast.2} parent=1 // pred_region
      _
    $region33: #{forecast.2} parent=1 // pred_fallthru
      _
    // Predicated region
    $region34: #{forecast.2} parent=1 // pred_check
      _
    $region35: #{forecast.2} parent=1 // pred_check_branch
      %68 = sbr.rel (0) target = $region37
    $region36: #{forecast.2} parent=1 // pred_region
      %70 = dma.done [#allocation3], 256
    $region37: #{forecast.2} parent=1 // pred_fallthru
      _
    // Predicated region
    $region38: #{forecast.2} parent=1 // pred_check
      _
    $region39: #{forecast.2} parent=1 // pred_check_branch
      %72 = sbr.rel (0) target = $region41
    $region40: #{forecast.2} parent=1 // pred_region
      %74 = dma.done [#allocation5], 1536
    $region41: #{forecast.2} parent=1 // pred_fallthru
      _
    // Predicated region
    $region42: #{forecast.2} parent=1 // pred_check
      _
    $region43: #{forecast.2} parent=1 // pred_check_branch
      %76 = sbr.rel (0) target = $region45
    $region44: #{forecast.2} parent=1 // pred_region
      %78 = dma.done [#allocation5], 768
    $region45: #{forecast.2} parent=1 // pred_fallthru
      _
    %v79 = vld [vmem:[%s0] sm:$0xf]
    %vm80 = vcmask 125952
    %v81 = vsel %vm80, %v79, 0.0
    %82 = vadd.xlane.f32.xlu0 %v81
    %v83 = vpop.xlane.xlu0 %82
    %v84 = vrcp.pop 16.0
    %v85 = vmul.f32 16.0, %v84
    %v86 = vsub.f32 1.0, %v85
    %v87 = vmul.f32 %v84, %v86
    %v88 = vadd.f32 %v84, %v87
    %vm89 = vweird.f32 %v84
    %v90 = vsel %vm89, %v84, %v88
    %v91 = vmul.f32 %v83, %v90
    %v92 = vsub.f32 %v79, %v91
    %v93 = vmul.f32 %v92, %v92
    %v94 = vsel %vm80, %v93, 0.0
    %95 = vadd.xlane.f32.xlu0 %v94
    %v96 = vpop.xlane.xlu0 %95
    %v97 = vmul.f32 %v96, %v90
    %v98 = vadd.f32 %v97, 1e-05
    %v99 = vrsqrt.pop %v98
    %v100 = vmul.f32 %v99, %v98
    %v101 = vmul.f32 %v100, %v99
    %v102 = vmul.f32 0.5, %v101
    %v103 = vsub.f32 1.5, %v102
    %v104 = vmul.f32 %v99, %v103
    %v105 = vmul.f32 %v98, %v104
    %vm106 = vcmp.eq.f32.partialorder %v98, inf
    %v107 = vsel %vm106, %v98, %v105
    %vm108 = vcmp.eq.f32.partialorder %v98, 0.0
    %v109 = vand.u32 %v98, 2147483648
    %v110 = vsel %vm108, %v109, %v107
    %v111 = vrcp.pop %v110
    %v112 = vmul.f32 %v110, %v111
    %v113 = vsub.f32 1.0, %v112
    %v114 = vmul.f32 %v111, %v113
    %v115 = vadd.f32 %v111, %v114
    %vm116 = vweird.f32 %v110
    %vm117 = vweird.f32 %v111
    %vm118 = vmor %vm116, %vm117
    %v119 = vsel %vm118, %v111, %v115
    %v120 = vand.u32 2147483647, %v110
    %vm121 = vcmp.eq.f32.partialorder %v120, 8.507059e+37
    %v122 = vand.u32 %v110, 2147483648
    %v123 = vor.u32 1.1754944e-38, %v122
    %v124 = vsel %vm121, %v123, %v119
    %v125 = vmul.f32 %v92, %v124
    %v126 = vld [vmem:[#allocation2] sm:$0xff]
    %v127 = vld [vmem:[#allocation2 + $0x8] sm:$0xff]
    %vm128 = vcmask 130048
    %v130 = vsel %vm128, %v125, 0
    %132 = vmatpush.msra.mxu0 0.0
    %133 = vmatpush.msra.mxu0 0.0
    %134 = vmatpush.msra.mxu0 0.0
    %135 = vmatpush.msra.mxu0 0.0
    %136 = vmatpush.msra.mxu0 0.0
    %137 = vmatpush.msra.mxu0 0.0
    %138 = vmatpush.msra.mxu0 0.0
    %139 = vmatpush.msra.mxu0 0.0
    %140 = vmatpush.msra.mxu0 0.0
    %141 = vmatpush.msra.mxu0 0.0
    %142 = vmatpush.msra.mxu0 0.0
    %143 = vmatpush.msra.mxu0 0.0
    %144 = vmatpush.msra.mxu0 0.0
    %145 = vmatpush.msra.mxu0 0.0
    %146 = vmatpush.msra.mxu0 %v127
    %147 = vmatpush.msra.mxu0 %v126
    %148 = vmatmul.f32.gmra.mxu0 %v130
    %v149 = vpop.f32.mrf.mxu0
    %v150 = vadd.f32 0.0, %v149
    %151 = vdwg.mxu0
    %v152 = vsub.f32 %v125, %v150
    %v153 = vld [vmem:[%s2] sm:$0xff]
    %v154 = vld [vmem:[%s2 + $0x8] sm:$0xff]
    %v156 = vsel %vm128, %v152, 0
    %158 = vmatpush.msra.mxu0 0.0
    %159 = vmatpush.msra.mxu0 0.0
    %160 = vmatpush.msra.mxu0 0.0
    %161 = vmatpush.msra.mxu0 0.0
    %162 = vmatpush.msra.mxu0 0.0
    %163 = vmatpush.msra.mxu0 0.0
    %164 = vmatpush.msra.mxu0 0.0
    %165 = vmatpush.msra.mxu0 0.0
    %166 = vmatpush.msra.mxu0 0.0
    %167 = vmatpush.msra.mxu0 0.0
    %168 = vmatpush.msra.mxu0 0.0
    %169 = vmatpush.msra.mxu0 0.0
    %170 = vmatpush.msra.mxu0 0.0
    %171 = vmatpush.msra.mxu0 0.0
    %172 = vmatpush.msra.mxu0 %v154
    %173 = vmatpush.msra.mxu0 %v153
    %174 = vmatmul.f32.gmra.mxu0 %v156
    %v175 = vpop.f32.mrf.mxu0
    %v176 = vadd.f32 0.0, %v175
    %177 = vdwg.mxu0
    %v178 = vsub.f32 %v152, %v176
    %180 = vrot.lane.b32.xlu0 %v176, 16
    %v181 = vpop.permute.xlu0 %180
    %184 = vrot.lane.b32.xlu0 %v178, 32
    %v185 = vpop.permute.xlu0 %184
    %v187 = vsel %vm128, %v150, %v181
    %vm188 = vcmask 261120
    %v189 = vsel %vm188, %v187, %v185
    %v190 = vld [vmem:[#allocation4] sm:$0xff]
    %v191 = vld [vmem:[#allocation4 + $0x8] sm:$0xff]
    %v192 = vld [vmem:[#allocation4 + $0x10] sm:$0xff]
    %v193 = vld [vmem:[#allocation4 + $0x18] sm:$0xff]
    %v194 = vld [vmem:[#allocation4 + $0x20] sm:$0xff]
    %v195 = vld [vmem:[#allocation4 + $0x28] sm:$0xff]
    %v196 = vld [vmem:[#allocation4 + $0x30] sm:$0xff]
    %v197 = vld [vmem:[#allocation4 + $0x38] sm:$0xff]
    %v198 = vld [vmem:[#allocation4 + $0x40] sm:$0xff]
    %v199 = vld [vmem:[#allocation4 + $0x48] sm:$0xff]
    %v200 = vld [vmem:[#allocation4 + $0x50] sm:$0xff]
    %v201 = vld [vmem:[#allocation4 + $0x58] sm:$0xff]
    %v202 = vld [vmem:[%s4] sm:$0x3]
    %v204 = vperm.slane %v202, 0
    %v205 = vperm.slane %v202, 1
    %vm208 = vcmask 392192
    %v210 = vsel %vm208, %v189, 0
    %212 = vmatpush.msra.mxu0 0.0
    %213 = vmatpush.msra.mxu0 0.0
    %214 = vmatpush.msra.mxu0 0.0
    %215 = vmatpush.msra.mxu0 0.0
    %216 = vmatpush.msra.mxu0 0.0
    %217 = vmatpush.msra.mxu0 0.0
    %218 = vmatpush.msra.mxu0 0.0
    %219 = vmatpush.msra.mxu0 0.0
    %220 = vmatpush.msra.mxu0 0.0
    %221 = vmatpush.msra.mxu0 0.0
    %222 = vmatpush.msra.mxu0 %v200
    %223 = vmatpush.msra.mxu0 %v198
    %224 = vmatpush.msra.mxu0 %v196
    %225 = vmatpush.msra.mxu0 %v194
    %226 = vmatpush.msra.mxu0 %v192
    %227 = vmatpush.msra.mxu0 %v190
    %228 = vmatmul.f32.gmra.mxu0 %v210
    %v229 = vpop.f32.mrf.mxu0
    %v230 = vadd.f32 %v204, %v229
    %231 = vdwg.mxu0
    %232 = vmatpush.msra.mxu0 0.0
    %233 = vmatpush.msra.mxu0 0.0
    %234 = vmatpush.msra.mxu0 0.0
    %235 = vmatpush.msra.mxu0 0.0
    %236 = vmatpush.msra.mxu0 0.0
    %237 = vmatpush.msra.mxu0 0.0
    %238 = vmatpush.msra.mxu0 0.0
    %239 = vmatpush.msra.mxu0 0.0
    %240 = vmatpush.msra.mxu0 0.0
    %241 = vmatpush.msra.mxu0 0.0
    %242 = vmatpush.msra.mxu0 %v201
    %243 = vmatpush.msra.mxu0 %v199
    %244 = vmatpush.msra.mxu0 %v197
    %245 = vmatpush.msra.mxu0 %v195
    %246 = vmatpush.msra.mxu0 %v193
    %247 = vmatpush.msra.mxu0 %v191
    %248 = vmatmul.f32.gmra.mxu0 %v210
    %v249 = vpop.f32.mrf.mxu0
    %v250 = vadd.f32 %v205, %v249
    %251 = vdwg.mxu0
    %v254 = vrot.slane %v250, 4
    %vm255 = vcmask 1043456
    %v256 = vsel %vm255, %v230, %v254
    %vm258 = vcmask 916484
    %vm259 = vmor %vm258, %vm255
    %260 = vst.msk [vmem:[%s8] sm:$0xff] %vm259, %v256
    %v261 = vld [vmem:[#allocation6] sm:$0xff]
    %v262 = vld [vmem:[#allocation6 + $0x8] sm:$0xff]
    %v263 = vld [vmem:[#allocation6 + $0x10] sm:$0xff]
    %v264 = vld [vmem:[#allocation6 + $0x18] sm:$0xff]
    %v265 = vld [vmem:[#allocation6 + $0x20] sm:$0xff]
    %v266 = vld [vmem:[#allocation6 + $0x28] sm:$0xff]
    %v267 = vld [vmem:[%s6] sm:$0x1]
    %v269 = vperm.slane %v267, 0
    %271 = vmatpush.msra.mxu0 0.0
    %272 = vmatpush.msra.mxu0 0.0
    %273 = vmatpush.msra.mxu0 0.0
    %274 = vmatpush.msra.mxu0 0.0
    %275 = vmatpush.msra.mxu0 0.0
    %276 = vmatpush.msra.mxu0 0.0
    %277 = vmatpush.msra.mxu0 0.0
    %278 = vmatpush.msra.mxu0 0.0
    %279 = vmatpush.msra.mxu0 0.0
    %280 = vmatpush.msra.mxu0 0.0
    %281 = vmatpush.msra.mxu0 %v266
    %282 = vmatpush.msra.mxu0 %v265
    %283 = vmatpush.msra.mxu0 %v264
    %284 = vmatpush.msra.mxu0 %v263
    %285 = vmatpush.msra.mxu0 %v262
    %286 = vmatpush.msra.mxu0 %v261
    %287 = vmatmul.f32.gmra.mxu0 %v210
    %v288 = vpop.f32.mrf.mxu0
    %v289 = vadd.f32 %v269, %v288
    %290 = vdwg.mxu0
    %v291 = vmul.f32 %v289, %v289
    %vm292 = vcmask 388096
    %v293 = vsel %vm292, %v291, 0.0
    %294 = vadd.xlane.f32.xlu0 %v293
    %v295 = vpop.xlane.xlu0 %294
    %v296 = vmax.f32 %v295, 1e-12
    %v297 = vrsqrt.pop %v296
    %v298 = vmul.f32 %v297, %v296
    %v299 = vmul.f32 %v298, %v297
    %v300 = vmul.f32 0.5, %v299
    %v301 = vsub.f32 1.5, %v300
    %v302 = vmul.f32 %v297, %v301
    %vm303 = vweird.f32 %v296
    %vm304 = vweird.f32 %v297
    %vm305 = vmor %vm303, %vm304
    %v306 = vsel %vm305, %v297, %v302
    %v307 = vmul.f32 %v289, %v306
    %v308 = vld [vmem:[%s7] sm:$0xff]
    %v309 = vmul.f32 %v308, %v308
    %v310 = vsel %vm208, %v309, 0.0
    %311 = vadd.xlane.f32.xlu0 %v310
    %v312 = vpop.xlane.xlu0 %311
    %v313 = vmax.f32 %v312, 1e-12
    %v314 = vrsqrt.pop %v313
    %v315 = vmul.f32 %v314, %v313
    %v316 = vmul.f32 %v315, %v314
    %v317 = vmul.f32 0.5, %v316
    %v318 = vsub.f32 1.5, %v317
    %v319 = vmul.f32 %v314, %v318
    %vm320 = vweird.f32 %v313
    %vm321 = vweird.f32 %v314
    %vm322 = vmor %vm320, %vm321
    %v323 = vsel %vm322, %v314, %v319
    %v324 = vmul.f32 %v308, %v323
    %v326 = vsel %vm208, %v307, 0
    %v329 = vsel %vm208, %v324, 0
    %331 = vmatpush.xpose.msra.mxu0 0.0
    %332 = vmatpush.xpose.msra.mxu0 0.0
    %333 = vmatpush.xpose.msra.mxu0 0.0
    %334 = vmatpush.xpose.msra.mxu0 0.0
    %335 = vmatpush.xpose.msra.mxu0 0.0
    %336 = vmatpush.xpose.msra.mxu0 0.0
    %337 = vmatpush.xpose.msra.mxu0 0.0
    %338 = vmatpush.xpose.msra.mxu0 0.0
    %339 = vmatpush.xpose.msra.mxu0 0.0
    %340 = vmatpush.xpose.msra.mxu0 0.0
    %341 = vmatpush.xpose.msra.mxu0 0.0
    %342 = vmatpush.xpose.msra.mxu0 0.0
    %343 = vmatpush.xpose.msra.mxu0 0.0
    %344 = vmatpush.xpose.msra.mxu0 0.0
    %345 = vmatpush.xpose.msra.mxu0 0.0
    %346 = vmatpush.xpose.msra.mxu0 %v329
    %347 = vmatmul.f32.gmra.mxu0 %v326
    %v348 = vpop.f32.mrf.mxu0
    %v349 = vadd.f32 0.0, %v348
    %350 = vdwg.mxu0
    %vm351 = vcmask 60416
    %352 = vst.msk [vmem:[%s9] sm:$0xf] %vm351, %v349
    %vm353 = vcmask 7168
    %v354 = vsel %vm353, %v91, %v110
    %vm355 = vcmask 11264
    %356 = vst.msk [vmem:[%s10] sm:$0xf] %vm355, %v354
    // Predicated region
    $region46: #{forecast.2} parent=1 // pred_check
      _
    $region47: #{forecast.2} parent=1 // pred_check_branch
      %358 = sbr.rel (0) target = $region49
    $region48: #{forecast.2} parent=1 // pred_region
      _
    $region49: #{forecast.2} parent=1 // pred_fallthru
      _
    // Predicated region
    $region50: #{forecast.2} parent=1 // pred_check
      _
    $region51: #{forecast.2} parent=1 // pred_check_branch
      %360 = sbr.rel (0) target = $region53
    $region52: #{forecast.2} parent=1 // pred_region
      _
    $region53: #{forecast.2} parent=1 // pred_fallthru
      _
    // Predicated region
    $region54: #{forecast.2} parent=1 // pred_check
      _
    $region55: #{forecast.2} parent=1 // pred_check_branch
      %362 = sbr.rel (0) target = $region57
    $region56: #{forecast.2} parent=1 // pred_region
      _
    $region57: #{forecast.2} parent=1 // pred_fallthru
      _
    // Predicated region
    $region58: #{forecast.2} parent=1 // pred_check
      _
    $region59: #{forecast.2} parent=1 // pred_check_branch
      %364 = sbr.rel (0) target = $region61
    $region60: #{forecast.2} parent=1 // pred_region
      _
    $region61: #{forecast.2} parent=1 // pred_fallthru
      _
    // Predicated region
    $region62: #{forecast.2} parent=1 // pred_check
      _
    $region63: #{forecast.2} parent=1 // pred_check_branch
      %366 = sbr.rel (0) target = $region65
    $region64: #{forecast.2} parent=1 // pred_region
      _
    $region65: #{forecast.2} parent=1 // pred_fallthru
      _
    // Predicated region
    $region66: #{forecast.2} parent=1 // pred_check
      _
    $region67: #{forecast.2} parent=1 // pred_check_branch
      %368 = sbr.rel (0) target = $region69
    $region68: #{forecast.2} parent=1 // pred_region
      _
    $region69: #{forecast.2} parent=1 // pred_fallthru
      _
    %369 = vsyncpa [#allocation3], 1
    %370 = vsyncpa [#allocation5], 1

// kernel: forecast.3
$region0: #{forecast.3}
  #allocation0 [shape = 'u32[]', space=smem, size = 0x4, offset = 0x4, fixed_abs, tag = 'smem constant byte address 0x4 - core index']
  #allocation1 [shape = 'u32[72,128]{1,0:T(1,128)}', space=vmem, size = 0x9000, scoped, tag = 'internal scratch']
  %s0 = inlined_call_operand.vmem [shape: f32[4,7,48], index: 0, kind: input, shape index: {}]
  %s1 = inlined_call_operand.vmem [shape: f32[4,1,2], index: 1, kind: input, shape index: {}]
  %s2 = inlined_call_operand.vmem [shape: f32[7,48], index: 2, kind: input, shape index: {}]
  %s3 = inlined_call_operand.vmem [shape: f32[2,1,48], index: 3, kind: input, shape index: {}]
  %s4 = inlined_call_operand.vmem [shape: f32[2,1,48], index: 4, kind: input, shape index: {}]
  %s5 = inlined_call_operand.vmem [shape: f32[2,48,48], index: 5, kind: input, shape index: {}]
  %s6 = inlined_call_operand.vmem [shape: f32[2,1,48], index: 6, kind: input, shape index: {}]
  %s7 = inlined_call_operand.vmem [shape: f32[2,48,48], index: 7, kind: input, shape index: {}]
  %s8 = inlined_call_operand.vmem [shape: f32[2,1,48], index: 8, kind: input, shape index: {}]
  %s9 = inlined_call_operand.vmem [shape: f32[2,48,48], index: 9, kind: input, shape index: {}]
  %s10 = inlined_call_operand.vmem [shape: f32[2,1,48], index: 10, kind: input, shape index: {}]
  %s11 = inlined_call_operand.vmem [shape: f32[2,48,48], index: 11, kind: input, shape index: {}]
  %s12 = inlined_call_operand.vmem [shape: f32[2,1,48], index: 12, kind: input, shape index: {}]
  %s13 = inlined_call_operand.vmem [shape: f32[2,1,48], index: 13, kind: input, shape index: {}]
  %s14 = inlined_call_operand.vmem [shape: f32[2,1,48], index: 14, kind: input, shape index: {}]
  %s15 = inlined_call_operand.vmem [shape: f32[2,48,192], index: 15, kind: input, shape index: {}]
  %s16 = inlined_call_operand.vmem [shape: f32[2,1,192], index: 16, kind: input, shape index: {}]
  %s17 = inlined_call_operand.vmem [shape: f32[2,192,48], index: 17, kind: input, shape index: {}]
  %s18 = inlined_call_operand.vmem [shape: f32[2,1,48], index: 18, kind: input, shape index: {}]
  %s19 = inlined_call_operand.vmem [shape: f32[1,48], index: 19, kind: input, shape index: {}]
  %s20 = inlined_call_operand.vmem [shape: f32[1,48], index: 20, kind: input, shape index: {}]
  %s21 = inlined_call_operand.vmem [shape: f32[7,48,8], index: 21, kind: input, shape index: {}]
  %s22 = inlined_call_operand.vmem [shape: f32[1,8], index: 22, kind: input, shape index: {}]
  %s23 = inlined_call_operand.hbm [shape: f32[4,1,8], index: 23, kind: output, shape index: {}]
  %s24 = sld [smem:[#allocation0]]
  $region125: #{forecast.3} parent=0
    _
  %s26 = ssub.s32 1, %s24
  %s27 = scalar_select 0, %s26, %s24
  $region1: #{forecast.3} parent=0
    #allocation2 [shape = 'u8[1024]{0}', space=vmem, size = 0x400, scoped, tag = 'output window, operand 0']
    #allocation3 [shape = 's32[2]{0}', space=sflag, size = 0x8, scoped, tag = 'scoped memory for forecast.3']
    %28 = vsyncpa [#allocation3], 0
    %s29 = scalar_lea.sflag [#allocation3], 1
    %30 = vsyncpa %s29, 0
    loop: start=0, step=1, limit=6
    $region2: #{forecast.3} parent=1 // loop_pre_header
      _
    $region3: #{forecast.3} parent=1 // loop_header
      %s32 = sphi 0, %s36
      %p33 = scmp.ge.s32.totalorder %s32, 6
      %s42 = sphi 0, %s44
      %s45 = sphi 0, %s42
      %s46 = sphi 0, %s45
      %s62 = sphi 0, %s46
      %s68 = sphi 0, %s70
      %s71 = sphi 0, %s68
      %s72 = sphi 0, %s71
      %s88 = sphi 0, %s72
      %s92 = sphi 0, %s92
      %s94 = sphi 0, %s92
      %s95 = sphi 0, %s94
      %s109 = sphi 0, %s95
      %s113 = sphi 0, %s113
      %s115 = sphi 0, %s113
      %s116 = sphi 0, %s115
      %s130 = sphi 0, %s116
      %s134 = sphi 0, %s134
      %s136 = sphi 0, %s134
      %s137 = sphi 0, %s136
      %s151 = sphi 0, %s137
      %s155 = sphi 0, %s155
      %s157 = sphi 0, %s155
      %s158 = sphi 0, %s157
      %s172 = sphi 0, %s158
      %s176 = sphi 0, %s176
      %s178 = sphi 0, %s176
      %s179 = sphi 0, %s178
      %s193 = sphi 0, %s179
      %s197 = sphi 0, %s197
      %s199 = sphi 0, %s197
      %s200 = sphi 0, %s199
      %s214 = sphi 0, %s200
      %s218 = sphi 0, %s218
      %s220 = sphi 0, %s218
      %s221 = sphi 0, %s220
      %s235 = sphi 0, %s221
      %s239 = sphi 0, %s239
      %s241 = sphi 0, %s239
      %s242 = sphi 0, %s241
      %s256 = sphi 0, %s242
      %s260 = sphi 0, %s260
      %s262 = sphi 0, %s260
      %s263 = sphi 0, %s262
      %s277 = sphi 0, %s263
      %s281 = sphi 0, %s281
      %s283 = sphi 0, %s281
      %s284 = sphi 0, %s283
      %s298 = sphi 0, %s284
      %s302 = sphi 0, %s302
      %s304 = sphi 0, %s302
      %s305 = sphi 0, %s304
      %s319 = sphi 0, %s305
      %s323 = sphi 0, %s323
      %s325 = sphi 0, %s323
      %s326 = sphi 0, %s325
      %s340 = sphi 0, %s326
      %s344 = sphi 0, %s344
      %s346 = sphi 0, %s344
      %s347 = sphi 0, %s346
      %s361 = sphi 0, %s347
      %s365 = sphi 0, %s365
      %s367 = sphi 0, %s365
      %s368 = sphi 0, %s367
      %s382 = sphi 0, %s368
      %s386 = sphi 0, %s386
      %s388 = sphi 0, %s386
      %s389 = sphi 0, %s388
      %s403 = sphi 0, %s389
      %s407 = sphi 0, %s407
      %s409 = sphi 0, %s407
      %s410 = sphi 0, %s409
      %s424 = sphi 0, %s410
      %s428 = sphi 0, %s428
      %s430 = sphi 0, %s428
      %s431 = sphi 0, %s430
      %s445 = sphi 0, %s431
      %s449 = sphi 0, %s449
      %s451 = sphi 0, %s449
      %s452 = sphi 0, %s451
      %s466 = sphi 0, %s452
      %s470 = sphi 0, %s470
      %s472 = sphi 0, %s470
      %s473 = sphi 0, %s472
      %s487 = sphi 0, %s473
      %s491 = sphi 0, %s491
      %s493 = sphi 0, %s491
      %s494 = sphi 0, %s493
      %s508 = sphi 0, %s494
      %s512 = sphi 0, %s512
      %s514 = sphi 0, %s512
      %s515 = sphi 0, %s514
      %s529 = sphi 0, %s515
      %s535 = sphi 0, %s537
      %s538 = sphi 0, %s535
      %s539 = sphi 0, %s538
      %s555 = sphi 0, %s539
    $region4: #{forecast.3} parent=1 // loop_header_branch
      %35 = sbr.rel (%p33) target = $region8
    $region5: #{forecast.3} parent=1 // loop_body
      %s37 = ssub.s32 %s32, 1
      %s38 = ssub.s32 %s32, 2
      %s39 = sadd.s32 %s32, 1
      %s40 = ssub.s32 %s32, %s39
      %p41 = scmp.eq.s32.totalorder %s40, 0
      %s43 = sadd.s32 %s42, 1
      %s44 = scalar_select %p41, %s42, %s43
      %p47 = pneg %p41
      %p48 = scmp.eq.s32.totalorder %s32, 3
      %p49 = por %p47, %p48
      %p50 = scmp.ne.s32.totalorder %s42, %s45
      %p51 = scmp.eq.s32.totalorder %s32, 0
      %p52 = por %p50, %p51
      %p53 = scmp.ne.s32.totalorder %s42, %s45
      %p54 = scmp.eq.s32.totalorder %s37, 3
      %p55 = por %p53, %p54
      %p56 = scmp.ne.s32.totalorder %s45, %s46
      %p57 = scmp.eq.s32.totalorder %s37, 0
      %p58 = por %p56, %p57
      %p59 = scmp.ne.s32.totalorder %s45, %s46
      %p60 = scmp.eq.s32.totalorder %s38, 3
      %p61 = por %p59, %p60
      %p63 = scmp.ne.s32.totalorder %s46, %s62
      %p64 = scmp.eq.s32.totalorder %s38, 0
      %p65 = por %p63, %p64
      %s66 = ssub.s32 %s32, %s39
      %p67 = scmp.eq.s32.totalorder %s66, 0
      %s69 = sadd.s32 %s68, 1
      %s70 = scalar_select %p67, %s68, %s69
      %p73 = pneg %p67
      %p74 = scmp.eq.s32.totalorder %s32, 3
      %p75 = por %p73, %p74
      %p76 = scmp.ne.s32.totalorder %s68, %s71
      %p77 = scmp.eq.s32.totalorder %s32, 0
      %p78 = por %p76, %p77
      %p79 = scmp.ne.s32.totalorder %s68, %s71
      %p80 = scmp.eq.s32.totalorder %s37, 3
      %p81 = por %p79, %p80
      %p82 = scmp.ne.s32.totalorder %s71, %s72
      %p83 = scmp.eq.s32.totalorder %s37, 0
      %p84 = por %p82, %p83
      %p85 = scmp.ne.s32.totalorder %s71, %s72
      %p86 = scmp.eq.s32.totalorder %s38, 3
      %p87 = por %p85, %p86
      %p89 = scmp.ne.s32.totalorder %s72, %s88
      %p90 = scmp.eq.s32.totalorder %s38, 0
      %p91 = por %p89, %p90
      %s93 = sadd.s32 %s92, 1
      %p96 = scmp.eq.s32.totalorder %s32, 3
      %p97 = scmp.ne.s32.totalorder %s92, %s94
      %p98 = scmp.eq.s32.totalorder %s32, 0
      %p99 = por %p97, %p98
      %p100 = scmp.ne.s32.totalorder %s92, %s94
      %p101 = scmp.eq.s32.totalorder %s37, 3
      %p102 = por %p100, %p101
      %p103 = scmp.ne.s32.totalorder %s94, %s95
      %p104 = scmp.eq.s32.totalorder %s37, 0
      %p105 = por %p103, %p104
      %p106 = scmp.ne.s32.totalorder %s94, %s95
      %p107 = scmp.eq.s32.totalorder %s38, 3
      %p108 = por %p106, %p107
      %p110 = scmp.ne.s32.totalorder %s95, %s109
      %p111 = scmp.eq.s32.totalorder %s38, 0
      %p112 = por %p110, %p111
      %s114 = sadd.s32 %s113, 1
      %p117 = scmp.eq.s32.totalorder %s32, 3
      %p118 = scmp.ne.s32.totalorder %s113, %s115
      %p119 = scmp.eq.s32.totalorder %s32, 0
      %p120 = por %p118, %p119
      %p121 = scmp.ne.s32.totalorder %s113, %s115
      %p122 = scmp.eq.s32.totalorder %s37, 3
      %p123 = por %p121, %p122
      %p124 = scmp.ne.s32.totalorder %s115, %s116
      %p125 = scmp.eq.s32.totalorder %s37, 0
      %p126 = por %p124, %p125
      %p127 = scmp.ne.s32.totalorder %s115, %s116
      %p128 = scmp.eq.s32.totalorder %s38, 3
      %p129 = por %p127, %p128
      %p131 = scmp.ne.s32.totalorder %s116, %s130
      %p132 = scmp.eq.s32.totalorder %s38, 0
      %p133 = por %p131, %p132
      %s135 = sadd.s32 %s134, 1
      %p138 = scmp.eq.s32.totalorder %s32, 3
      %p139 = scmp.ne.s32.totalorder %s134, %s136
      %p140 = scmp.eq.s32.totalorder %s32, 0
      %p141 = por %p139, %p140
      %p142 = scmp.ne.s32.totalorder %s134, %s136
      %p143 = scmp.eq.s32.totalorder %s37, 3
      %p144 = por %p142, %p143
      %p145 = scmp.ne.s32.totalorder %s136, %s137
      %p146 = scmp.eq.s32.totalorder %s37, 0
      %p147 = por %p145, %p146
      %p148 = scmp.ne.s32.totalorder %s136, %s137
      %p149 = scmp.eq.s32.totalorder %s38, 3
      %p150 = por %p148, %p149
      %p152 = scmp.ne.s32.totalorder %s137, %s151
      %p153 = scmp.eq.s32.totalorder %s38, 0
      %p154 = por %p152, %p153
      %s156 = sadd.s32 %s155, 1
      %p159 = scmp.eq.s32.totalorder %s32, 3
      %p160 = scmp.ne.s32.totalorder %s155, %s157
      %p161 = scmp.eq.s32.totalorder %s32, 0
      %p162 = por %p160, %p161
      %p163 = scmp.ne.s32.totalorder %s155, %s157
      %p164 = scmp.eq.s32.totalorder %s37, 3
      %p165 = por %p163, %p164
      %p166 = scmp.ne.s32.totalorder %s157, %s158
      %p167 = scmp.eq.s32.totalorder %s37, 0
      %p168 = por %p166, %p167
      %p169 = scmp.ne.s32.totalorder %s157, %s158
      %p170 = scmp.eq.s32.totalorder %s38, 3
      %p171 = por %p169, %p170
      %p173 = scmp.ne.s32.totalorder %s158, %s172
      %p174 = scmp.eq.s32.totalorder %s38, 0
      %p175 = por %p173, %p174
      %s177 = sadd.s32 %s176, 1
      %p180 = scmp.eq.s32.totalorder %s32, 3
      %p181 = scmp.ne.s32.totalorder %s176, %s178
      %p182 = scmp.eq.s32.totalorder %s32, 0
      %p183 = por %p181, %p182
      %p184 = scmp.ne.s32.totalorder %s176, %s178
      %p185 = scmp.eq.s32.totalorder %s37, 3
      %p186 = por %p184, %p185
      %p187 = scmp.ne.s32.totalorder %s178, %s179
      %p188 = scmp.eq.s32.totalorder %s37, 0
      %p189 = por %p187, %p188
      %p190 = scmp.ne.s32.totalorder %s178, %s179
      %p191 = scmp.eq.s32.totalorder %s38, 3
      %p192 = por %p190, %p191
      %p194 = scmp.ne.s32.totalorder %s179, %s193
      %p195 = scmp.eq.s32.totalorder %s38, 0
      %p196 = por %p194, %p195
      %s198 = sadd.s32 %s197, 1
      %p201 = scmp.eq.s32.totalorder %s32, 3
      %p202 = scmp.ne.s32.totalorder %s197, %s199
      %p203 = scmp.eq.s32.totalorder %s32, 0
      %p204 = por %p202, %p203
      %p205 = scmp.ne.s32.totalorder %s197, %s199
      %p206 = scmp.eq.s32.totalorder %s37, 3
      %p207 = por %p205, %p206
      %p208 = scmp.ne.s32.totalorder %s199, %s200
      %p209 = scmp.eq.s32.totalorder %s37, 0
      %p210 = por %p208, %p209
      %p211 = scmp.ne.s32.totalorder %s199, %s200
      %p212 = scmp.eq.s32.totalorder %s38, 3
      %p213 = por %p211, %p212
      %p215 = scmp.ne.s32.totalorder %s200, %s214
      %p216 = scmp.eq.s32.totalorder %s38, 0
      %p217 = por %p215, %p216
      %s219 = sadd.s32 %s218, 1
      %p222 = scmp.eq.s32.totalorder %s32, 3
      %p223 = scmp.ne.s32.totalorder %s218, %s220
      %p224 = scmp.eq.s32.totalorder %s32, 0
      %p225 = por %p223, %p224
      %p226 = scmp.ne.s32.totalorder %s218, %s220
      %p227 = scmp.eq.s32.totalorder %s37, 3
      %p228 = por %p226, %p227
      %p229 = scmp.ne.s32.totalorder %s220, %s221
      %p230 = scmp.eq.s32.totalorder %s37, 0
      %p231 = por %p229, %p230
      %p232 = scmp.ne.s32.totalorder %s220, %s221
      %p233 = scmp.eq.s32.totalorder %s38, 3
      %p234 = por %p232, %p233
      %p236 = scmp.ne.s32.totalorder %s221, %s235
      %p237 = scmp.eq.s32.totalorder %s38, 0
      %p238 = por %p236, %p237
      %s240 = sadd.s32 %s239, 1
      %p243 = scmp.eq.s32.totalorder %s32, 3
      %p244 = scmp.ne.s32.totalorder %s239, %s241
      %p245 = scmp.eq.s32.totalorder %s32, 0
      %p246 = por %p244, %p245
      %p247 = scmp.ne.s32.totalorder %s239, %s241
      %p248 = scmp.eq.s32.totalorder %s37, 3
      %p249 = por %p247, %p248
      %p250 = scmp.ne.s32.totalorder %s241, %s242
      %p251 = scmp.eq.s32.totalorder %s37, 0
      %p252 = por %p250, %p251
      %p253 = scmp.ne.s32.totalorder %s241, %s242
      %p254 = scmp.eq.s32.totalorder %s38, 3
      %p255 = por %p253, %p254
      %p257 = scmp.ne.s32.totalorder %s242, %s256
      %p258 = scmp.eq.s32.totalorder %s38, 0
      %p259 = por %p257, %p258
      %s261 = sadd.s32 %s260, 1
      %p264 = scmp.eq.s32.totalorder %s32, 3
      %p265 = scmp.ne.s32.totalorder %s260, %s262
      %p266 = scmp.eq.s32.totalorder %s32, 0
      %p267 = por %p265, %p266
      %p268 = scmp.ne.s32.totalorder %s260, %s262
      %p269 = scmp.eq.s32.totalorder %s37, 3
      %p270 = por %p268, %p269
      %p271 = scmp.ne.s32.totalorder %s262, %s263
      %p272 = scmp.eq.s32.totalorder %s37, 0
      %p273 = por %p271, %p272
      %p274 = scmp.ne.s32.totalorder %s262, %s263
      %p275 = scmp.eq.s32.totalorder %s38, 3
      %p276 = por %p274, %p275
      %p278 = scmp.ne.s32.totalorder %s263, %s277
      %p279 = scmp.eq.s32.totalorder %s38, 0
      %p280 = por %p278, %p279
      %s282 = sadd.s32 %s281, 1
      %p285 = scmp.eq.s32.totalorder %s32, 3
      %p286 = scmp.ne.s32.totalorder %s281, %s283
      %p287 = scmp.eq.s32.totalorder %s32, 0
      %p288 = por %p286, %p287
      %p289 = scmp.ne.s32.totalorder %s281, %s283
      %p290 = scmp.eq.s32.totalorder %s37, 3
      %p291 = por %p289, %p290
      %p292 = scmp.ne.s32.totalorder %s283, %s284
      %p293 = scmp.eq.s32.totalorder %s37, 0
      %p294 = por %p292, %p293
      %p295 = scmp.ne.s32.totalorder %s283, %s284
      %p296 = scmp.eq.s32.totalorder %s38, 3
      %p297 = por %p295, %p296
      %p299 = scmp.ne.s32.totalorder %s284, %s298
      %p300 = scmp.eq.s32.totalorder %s38, 0
      %p301 = por %p299, %p300
      %s303 = sadd.s32 %s302, 1
      %p306 = scmp.eq.s32.totalorder %s32, 3
      %p307 = scmp.ne.s32.totalorder %s302, %s304
      %p308 = scmp.eq.s32.totalorder %s32, 0
      %p309 = por %p307, %p308
      %p310 = scmp.ne.s32.totalorder %s302, %s304
      %p311 = scmp.eq.s32.totalorder %s37, 3
      %p312 = por %p310, %p311
      %p313 = scmp.ne.s32.totalorder %s304, %s305
      %p314 = scmp.eq.s32.totalorder %s37, 0
      %p315 = por %p313, %p314
      %p316 = scmp.ne.s32.totalorder %s304, %s305
      %p317 = scmp.eq.s32.totalorder %s38, 3
      %p318 = por %p316, %p317
      %p320 = scmp.ne.s32.totalorder %s305, %s319
      %p321 = scmp.eq.s32.totalorder %s38, 0
      %p322 = por %p320, %p321
      %s324 = sadd.s32 %s323, 1
      %p327 = scmp.eq.s32.totalorder %s32, 3
      %p328 = scmp.ne.s32.totalorder %s323, %s325
      %p329 = scmp.eq.s32.totalorder %s32, 0
      %p330 = por %p328, %p329
      %p331 = scmp.ne.s32.totalorder %s323, %s325
      %p332 = scmp.eq.s32.totalorder %s37, 3
      %p333 = por %p331, %p332
      %p334 = scmp.ne.s32.totalorder %s325, %s326
      %p335 = scmp.eq.s32.totalorder %s37, 0
      %p336 = por %p334, %p335
      %p337 = scmp.ne.s32.totalorder %s325, %s326
      %p338 = scmp.eq.s32.totalorder %s38, 3
      %p339 = por %p337, %p338
      %p341 = scmp.ne.s32.totalorder %s326, %s340
      %p342 = scmp.eq.s32.totalorder %s38, 0
      %p343 = por %p341, %p342
      %s345 = sadd.s32 %s344, 1
      %p348 = scmp.eq.s32.totalorder %s32, 3
      %p349 = scmp.ne.s32.totalorder %s344, %s346
      %p350 = scmp.eq.s32.totalorder %s32, 0
      %p351 = por %p349, %p350
      %p352 = scmp.ne.s32.totalorder %s344, %s346
      %p353 = scmp.eq.s32.totalorder %s37, 3
      %p354 = por %p352, %p353
      %p355 = scmp.ne.s32.totalorder %s346, %s347
      %p356 = scmp.eq.s32.totalorder %s37, 0
      %p357 = por %p355, %p356
      %p358 = scmp.ne.s32.totalorder %s346, %s347
      %p359 = scmp.eq.s32.totalorder %s38, 3
      %p360 = por %p358, %p359
      %p362 = scmp.ne.s32.totalorder %s347, %s361
      %p363 = scmp.eq.s32.totalorder %s38, 0
      %p364 = por %p362, %p363
      %s366 = sadd.s32 %s365, 1
      %p369 = scmp.eq.s32.totalorder %s32, 3
      %p370 = scmp.ne.s32.totalorder %s365, %s367
      %p371 = scmp.eq.s32.totalorder %s32, 0
      %p372 = por %p370, %p371
      %p373 = scmp.ne.s32.totalorder %s365, %s367
      %p374 = scmp.eq.s32.totalorder %s37, 3
      %p375 = por %p373, %p374
      %p376 = scmp.ne.s32.totalorder %s367, %s368
      %p377 = scmp.eq.s32.totalorder %s37, 0
      %p378 = por %p376, %p377
      %p379 = scmp.ne.s32.totalorder %s367, %s368
      %p380 = scmp.eq.s32.totalorder %s38, 3
      %p381 = por %p379, %p380
      %p383 = scmp.ne.s32.totalorder %s368, %s382
      %p384 = scmp.eq.s32.totalorder %s38, 0
      %p385 = por %p383, %p384
      %s387 = sadd.s32 %s386, 1
      %p390 = scmp.eq.s32.totalorder %s32, 3
      %p391 = scmp.ne.s32.totalorder %s386, %s388
      %p392 = scmp.eq.s32.totalorder %s32, 0
      %p393 = por %p391, %p392
      %p394 = scmp.ne.s32.totalorder %s386, %s388
      %p395 = scmp.eq.s32.totalorder %s37, 3
      %p396 = por %p394, %p395
      %p397 = scmp.ne.s32.totalorder %s388, %s389
      %p398 = scmp.eq.s32.totalorder %s37, 0
      %p399 = por %p397, %p398
      %p400 = scmp.ne.s32.totalorder %s388, %s389
      %p401 = scmp.eq.s32.totalorder %s38, 3
      %p402 = por %p400, %p401
      %p404 = scmp.ne.s32.totalorder %s389, %s403
      %p405 = scmp.eq.s32.totalorder %s38, 0
      %p406 = por %p404, %p405
      %s408 = sadd.s32 %s407, 1
      %p411 = scmp.eq.s32.totalorder %s32, 3
      %p412 = scmp.ne.s32.totalorder %s407, %s409
      %p413 = scmp.eq.s32.totalorder %s32, 0
      %p414 = por %p412, %p413
      %p415 = scmp.ne.s32.totalorder %s407, %s409
      %p416 = scmp.eq.s32.totalorder %s37, 3
      %p417 = por %p415, %p416
      %p418 = scmp.ne.s32.totalorder %s409, %s410
      %p419 = scmp.eq.s32.totalorder %s37, 0
      %p420 = por %p418, %p419
      %p421 = scmp.ne.s32.totalorder %s409, %s410
      %p422 = scmp.eq.s32.totalorder %s38, 3
      %p423 = por %p421, %p422
      %p425 = scmp.ne.s32.totalorder %s410, %s424
      %p426 = scmp.eq.s32.totalorder %s38, 0
      %p427 = por %p425, %p426
      %s429 = sadd.s32 %s428, 1
      %p432 = scmp.eq.s32.totalorder %s32, 3
      %p433 = scmp.ne.s32.totalorder %s428, %s430
      %p434 = scmp.eq.s32.totalorder %s32, 0
      %p435 = por %p433, %p434
      %p436 = scmp.ne.s32.totalorder %s428, %s430
      %p437 = scmp.eq.s32.totalorder %s37, 3
      %p438 = por %p436, %p437
      %p439 = scmp.ne.s32.totalorder %s430, %s431
      %p440 = scmp.eq.s32.totalorder %s37, 0
      %p441 = por %p439, %p440
      %p442 = scmp.ne.s32.totalorder %s430, %s431
      %p443 = scmp.eq.s32.totalorder %s38, 3
      %p444 = por %p442, %p443
      %p446 = scmp.ne.s32.totalorder %s431, %s445
      %p447 = scmp.eq.s32.totalorder %s38, 0
      %p448 = por %p446, %p447
      %s450 = sadd.s32 %s449, 1
      %p453 = scmp.eq.s32.totalorder %s32, 3
      %p454 = scmp.ne.s32.totalorder %s449, %s451
      %p455 = scmp.eq.s32.totalorder %s32, 0
      %p456 = por %p454, %p455
      %p457 = scmp.ne.s32.totalorder %s449, %s451
      %p458 = scmp.eq.s32.totalorder %s37, 3
      %p459 = por %p457, %p458
      %p460 = scmp.ne.s32.totalorder %s451, %s452
      %p461 = scmp.eq.s32.totalorder %s37, 0
      %p462 = por %p460, %p461
      %p463 = scmp.ne.s32.totalorder %s451, %s452
      %p464 = scmp.eq.s32.totalorder %s38, 3
      %p465 = por %p463, %p464
      %p467 = scmp.ne.s32.totalorder %s452, %s466
      %p468 = scmp.eq.s32.totalorder %s38, 0
      %p469 = por %p467, %p468
      %s471 = sadd.s32 %s470, 1
      %p474 = scmp.eq.s32.totalorder %s32, 3
      %p475 = scmp.ne.s32.totalorder %s470, %s472
      %p476 = scmp.eq.s32.totalorder %s32, 0
      %p477 = por %p475, %p476
      %p478 = scmp.ne.s32.totalorder %s470, %s472
      %p479 = scmp.eq.s32.totalorder %s37, 3
      %p480 = por %p478, %p479
      %p481 = scmp.ne.s32.totalorder %s472, %s473
      %p482 = scmp.eq.s32.totalorder %s37, 0
      %p483 = por %p481, %p482
      %p484 = scmp.ne.s32.totalorder %s472, %s473
      %p485 = scmp.eq.s32.totalorder %s38, 3
      %p486 = por %p484, %p485
      %p488 = scmp.ne.s32.totalorder %s473, %s487
      %p489 = scmp.eq.s32.totalorder %s38, 0
      %p490 = por %p488, %p489
      %s492 = sadd.s32 %s491, 1
      %p495 = scmp.eq.s32.totalorder %s32, 3
      %p496 = scmp.ne.s32.totalorder %s491, %s493
      %p497 = scmp.eq.s32.totalorder %s32, 0
      %p498 = por %p496, %p497
      %p499 = scmp.ne.s32.totalorder %s491, %s493
      %p500 = scmp.eq.s32.totalorder %s37, 3
      %p501 = por %p499, %p500
      %p502 = scmp.ne.s32.totalorder %s493, %s494
      %p503 = scmp.eq.s32.totalorder %s37, 0
      %p504 = por %p502, %p503
      %p505 = scmp.ne.s32.totalorder %s493, %s494
      %p506 = scmp.eq.s32.totalorder %s38, 3
      %p507 = por %p505, %p506
      %p509 = scmp.ne.s32.totalorder %s494, %s508
      %p510 = scmp.eq.s32.totalorder %s38, 0
      %p511 = por %p509, %p510
      %s513 = sadd.s32 %s512, 1
      %p516 = scmp.eq.s32.totalorder %s32, 3
      %p517 = scmp.ne.s32.totalorder %s512, %s514
      %p518 = scmp.eq.s32.totalorder %s32, 0
      %p519 = por %p517, %p518
      %p520 = scmp.ne.s32.totalorder %s512, %s514
      %p521 = scmp.eq.s32.totalorder %s37, 3
      %p522 = por %p520, %p521
      %p523 = scmp.ne.s32.totalorder %s514, %s515
      %p524 = scmp.eq.s32.totalorder %s37, 0
      %p525 = por %p523, %p524
      %p526 = scmp.ne.s32.totalorder %s514, %s515
      %p527 = scmp.eq.s32.totalorder %s38, 3
      %p528 = por %p526, %p527
      %p530 = scmp.ne.s32.totalorder %s515, %s529
      %p531 = scmp.eq.s32.totalorder %s38, 0
      %p532 = por %p530, %p531
      %s533 = ssub.s32 %s32, %s39
      %p534 = scmp.eq.s32.totalorder %s533, 0
      %s536 = sadd.s32 %s535, 1
      %s537 = scalar_select %p534, %s535, %s536
      %p540 = pneg %p534
      %p541 = scmp.eq.s32.totalorder %s32, 3
      %p542 = por %p540, %p541
      %p543 = scmp.ne.s32.totalorder %s535, %s538
      %p544 = scmp.eq.s32.totalorder %s32, 0
      %p545 = por %p543, %p544
      %p546 = scmp.ne.s32.totalorder %s535, %s538
      %p547 = scmp.eq.s32.totalorder %s37, 3
      %p548 = por %p546, %p547
      %p549 = scmp.ne.s32.totalorder %s538, %s539
      %p550 = scmp.eq.s32.totalorder %s37, 0
      %p551 = por %p549, %p550
      %p552 = scmp.ne.s32.totalorder %s538, %s539
      %p553 = scmp.eq.s32.totalorder %s38, 3
      %p554 = por %p552, %p553
      %p556 = scmp.ne.s32.totalorder %s539, %s555
      %p557 = scmp.eq.s32.totalorder %s38, 0
      %p558 = por %p556, %p557
      %p559 = scmp.le.s32.totalorder 1, %s32
      %p560 = scmp.lt.s32.totalorder %s32, 5
      %p561 = pnand %p559, %p560
      %p562 = pneg %p561
      // Predicated region
      $region9: #{forecast.3} parent=5 // pred_check
        _
      $region10: #{forecast.3} parent=5 // pred_check_branch
        %564 = sbr.rel (%p561) target = $region12
      $region11: #{forecast.3} parent=5 // pred_region
        %s565 = ssub.s32 %s32, 1
        // Predicated region
        $region13: #{forecast.3} parent=11 // pred_check
          %p566 = pneg %p105
        $region14: #{forecast.3} parent=11 // pred_check_branch
          %568 = sbr.rel (%p566) target = $region16
        $region15: #{forecast.3} parent=11 // pred_region
          _
        $region16: #{forecast.3} parent=11 // pred_fallthru
          _
        // Predicated region
        $region17: #{forecast.3} parent=11 // pred_check
          %p569 = pneg %p126
        $region18: #{forecast.3} parent=11 // pred_check_branch
          %571 = sbr.rel (%p569) target = $region20
        $region19: #{forecast.3} parent=11 // pred_region
          _
        $region20: #{forecast.3} parent=11 // pred_fallthru
          _
        // Predicated region
        $region21: #{forecast.3} parent=11 // pred_check
          %p572 = pneg %p147
        $region22: #{forecast.3} parent=11 // pred_check_branch
          %574 = sbr.rel (%p572) target = $region24
        $region23: #{forecast.3} parent=11 // pred_region
          _
        $region24: #{forecast.3} parent=11 // pred_fallthru
          _
        // Predicated region
        $region25: #{forecast.3} parent=11 // pred_check
          %p575 = pneg %p168
        $region26: #{forecast.3} parent=11 // pred_check_branch
          %577 = sbr.rel (%p575) target = $region28
        $region27: #{forecast.3} parent=11 // pred_region
          _
        $region28: #{forecast.3} parent=11 // pred_fallthru
          _
        // Predicated region
        $region29: #{forecast.3} parent=11 // pred_check
          %p578 = pneg %p189
        $region30: #{forecast.3} parent=11 // pred_check_branch
          %580 = sbr.rel (%p578) target = $region32
        $region31: #{forecast.3} parent=11 // pred_region
          _
        $region32: #{forecast.3} parent=11 // pred_fallthru
          _
        // Predicated region
        $region33: #{forecast.3} parent=11 // pred_check
          %p581 = pneg %p210
        $region34: #{forecast.3} parent=11 // pred_check_branch
          %583 = sbr.rel (%p581) target = $region36
        $region35: #{forecast.3} parent=11 // pred_region
          _
        $region36: #{forecast.3} parent=11 // pred_fallthru
          _
        // Predicated region
        $region37: #{forecast.3} parent=11 // pred_check
          %p584 = pneg %p231
        $region38: #{forecast.3} parent=11 // pred_check_branch
          %586 = sbr.rel (%p584) target = $region40
        $region39: #{forecast.3} parent=11 // pred_region
          _
        $region40: #{forecast.3} parent=11 // pred_fallthru
          _
        // Predicated region
        $region41: #{forecast.3} parent=11 // pred_check
          %p587 = pneg %p252
        $region42: #{forecast.3} parent=11 // pred_check_branch
          %589 = sbr.rel (%p587) target = $region44
        $region43: #{forecast.3} parent=11 // pred_region
          _
        $region44: #{forecast.3} parent=11 // pred_fallthru
          _
        // Predicated region
        $region45: #{forecast.3} parent=11 // pred_check
          %p590 = pneg %p273
        $region46: #{forecast.3} parent=11 // pred_check_branch
          %592 = sbr.rel (%p590) target = $region48
        $region47: #{forecast.3} parent=11 // pred_region
          _
        $region48: #{forecast.3} parent=11 // pred_fallthru
          _
        // Predicated region
        $region49: #{forecast.3} parent=11 // pred_check
          %p593 = pneg %p294
        $region50: #{forecast.3} parent=11 // pred_check_branch
          %595 = sbr.rel (%p593) target = $region52
        $region51: #{forecast.3} parent=11 // pred_region
          _
        $region52: #{forecast.3} parent=11 // pred_fallthru
          _
        // Predicated region
        $region53: #{forecast.3} parent=11 // pred_check
          %p596 = pneg %p315
        $region54: #{forecast.3} parent=11 // pred_check_branch
          %598 = sbr.rel (%p596) target = $region56
        $region55: #{forecast.3} parent=11 // pred_region
          _
        $region56: #{forecast.3} parent=11 // pred_fallthru
          _
        // Predicated region
        $region57: #{forecast.3} parent=11 // pred_check
          %p599 = pneg %p336
        $region58: #{forecast.3} parent=11 // pred_check_branch
          %601 = sbr.rel (%p599) target = $region60
        $region59: #{forecast.3} parent=11 // pred_region
          _
        $region60: #{forecast.3} parent=11 // pred_fallthru
          _
        // Predicated region
        $region61: #{forecast.3} parent=11 // pred_check
          %p602 = pneg %p357
        $region62: #{forecast.3} parent=11 // pred_check_branch
          %604 = sbr.rel (%p602) target = $region64
        $region63: #{forecast.3} parent=11 // pred_region
          _
        $region64: #{forecast.3} parent=11 // pred_fallthru
          _
        // Predicated region
        $region65: #{forecast.3} parent=11 // pred_check
          %p605 = pneg %p378
        $region66: #{forecast.3} parent=11 // pred_check_branch
          %607 = sbr.rel (%p605) target = $region68
        $region67: #{forecast.3} parent=11 // pred_region
          _
        $region68: #{forecast.3} parent=11 // pred_fallthru
          _
        // Predicated region
        $region69: #{forecast.3} parent=11 // pred_check
          %p608 = pneg %p399
        $region70: #{forecast.3} parent=11 // pred_check_branch
          %610 = sbr.rel (%p608) target = $region72
        $region71: #{forecast.3} parent=11 // pred_region
          _
        $region72: #{forecast.3} parent=11 // pred_fallthru
          _
        // Predicated region
        $region73: #{forecast.3} parent=11 // pred_check
          %p611 = pneg %p420
        $region74: #{forecast.3} parent=11 // pred_check_branch
          %613 = sbr.rel (%p611) target = $region76
        $region75: #{forecast.3} parent=11 // pred_region
          _
        $region76: #{forecast.3} parent=11 // pred_fallthru
          _
        // Predicated region
        $region77: #{forecast.3} parent=11 // pred_check
          %p614 = pneg %p441
        $region78: #{forecast.3} parent=11 // pred_check_branch
          %616 = sbr.rel (%p614) target = $region80
        $region79: #{forecast.3} parent=11 // pred_region
          _
        $region80: #{forecast.3} parent=11 // pred_fallthru
          _
        // Predicated region
        $region81: #{forecast.3} parent=11 // pred_check
          %p617 = pneg %p462
        $region82: #{forecast.3} parent=11 // pred_check_branch
          %619 = sbr.rel (%p617) target = $region84
        $region83: #{forecast.3} parent=11 // pred_region
          _
        $region84: #{forecast.3} parent=11 // pred_fallthru
          _
        // Predicated region
        $region85: #{forecast.3} parent=11 // pred_check
          %p620 = pneg %p483
        $region86: #{forecast.3} parent=11 // pred_check_branch
          %622 = sbr.rel (%p620) target = $region88
        $region87: #{forecast.3} parent=11 // pred_region
          _
        $region88: #{forecast.3} parent=11 // pred_fallthru
          _
        // Predicated region
        $region89: #{forecast.3} parent=11 // pred_check
          %p623 = pneg %p504
        $region90: #{forecast.3} parent=11 // pred_check_branch
          %625 = sbr.rel (%p623) target = $region92
        $region91: #{forecast.3} parent=11 // pred_region
          _
        $region92: #{forecast.3} parent=11 // pred_fallthru
          _
        // Predicated region
        $region93: #{forecast.3} parent=11 // pred_check
          %p626 = pneg %p525
        $region94: #{forecast.3} parent=11 // pred_check_branch
          %628 = sbr.rel (%p626) target = $region96
        $region95: #{forecast.3} parent=11 // pred_region
          _
        $region96: #{forecast.3} parent=11 // pred_fallthru
          _
      $region12: #{forecast.3} parent=5 // pred_fallthru
        _
      %p629 = scmp.lt.s32.totalorder %s32, 4
      // Predicated region
      $region97: #{forecast.3} parent=5 // pred_check
        %p630 = pneg %p629
      $region98: #{forecast.3} parent=5 // pred_check_branch
        %632 = sbr.rel (%p630) target = $region100
      $region99: #{forecast.3} parent=5 // pred_region
        // Predicated region
        $region101: #{forecast.3} parent=99 // pred_check
          %p633 = pneg %p52
        $region102: #{forecast.3} parent=99 // pred_check_branch
          %635 = sbr.rel (%p633) target = $region104
        $region103: #{forecast.3} parent=99 // pred_region
          %p636 = scmp.lt.s32.totalorder %s32, 3
          %s637 = scalar_select %p636, %s32, 3
          %s638 = smul.addr %s637, 8
          %s639 = scalar_lea.vmem %s0, %s638
        $region104: #{forecast.3} parent=99 // pred_fallthru
          _
        // Predicated region
        $region105: #{forecast.3} parent=99 // pred_check
          %p640 = pneg %p78
        $region106: #{forecast.3} parent=99 // pred_check_branch
          %642 = sbr.rel (%p640) target = $region108
        $region107: #{forecast.3} parent=99 // pred_region
          %p643 = scmp.lt.s32.totalorder %s32, 3
          %s644 = scalar_select %p643, %s32, 3
          %s645 = scalar_lea.vmem %s1, %s644
        $region108: #{forecast.3} parent=99 // pred_fallthru
          _
      $region100: #{forecast.3} parent=5 // pred_fallthru
        _
      %p646 = scmp.le.s32.totalorder 1, %s32
      %p647 = scmp.lt.s32.totalorder %s32, 5
      %p648 = pnand %p646, %p647
      %p649 = pneg %p648
      // Predicated region
      $region109: #{forecast.3} parent=5 // pred_check
        _
      $region110: #{forecast.3} parent=5 // pred_check_branch
        %651 = sbr.rel (%p648) target = $region112
      $region111: #{forecast.3} parent=5 // pred_region
        %s652 = ssub.s32 %s32, 1
        %p653 = scmp.lt.s32.totalorder %s37, 3
        %s654 = scalar_select %p653, %s37, 3
        %s655 = smul.addr %s654, 8
        %s656 = scalar_lea.vmem %s0, %s655
        %p657 = pneg %p58
        %p658 = pneg %p55
        %p659 = scmp.lt.s32.totalorder %s37, 3
        %s660 = scalar_select %p659, %s37, 3
        %s661 = scalar_lea.vmem %s1, %s660
        %p662 = pneg %p84
        %p663 = pneg %p81
        %p664 = pneg %p105
        %p665 = pneg %p102
        %p666 = pneg %p126
        %p667 = pneg %p123
        %p668 = pneg %p147
        %p669 = pneg %p144
        %p670 = pneg %p168
        %p671 = pneg %p165
        %p672 = pneg %p189
        %p673 = pneg %p186
        %p674 = pneg %p210
        %p675 = pneg %p207
        %p676 = pneg %p231
        %p677 = pneg %p228
        %p678 = pneg %p252
        %p679 = pneg %p249
        %p680 = pneg %p273
        %p681 = pneg %p270
        %p682 = pneg %p294
        %p683 = pneg %p291
        %p684 = pneg %p315
        %p685 = pneg %p312
        %p686 = pneg %p336
        %p687 = pneg %p333
        %p688 = pneg %p357
        %p689 = pneg %p354
        %p690 = pneg %p378
        %p691 = pneg %p375
        %p692 = pneg %p399
        %p693 = pneg %p396
        %p694 = pneg %p420
        %p695 = pneg %p417
        %p696 = pneg %p441
        %p697 = pneg %p438
        %p698 = pneg %p462
        %p699 = pneg %p459
        %p700 = pneg %p483
        %p701 = pneg %p480
        %p702 = pneg %p504
        %p703 = pneg %p501
        %p704 = pneg %p525
        %p705 = pneg %p522
        %p706 = pneg %p551
        %p707 = pneg %p548
        %s708 = sand.u32 %s538, 1
        %s709 = scalar_lea.sflag [#allocation3], %s708
        %s710 = sand.u32 %s538, 1
        %s711 = scalar_lea.vmem [#allocation2], %s710
        %p712 = scmp.lt.s32.totalorder %s37, 3
        %s713 = scalar_select %p712, %s37, 3
        %s714 = smul.addr %s713, 8
        %s715 = scalar_lea.vmem %s0, %s714
        %p716 = scmp.lt.s32.totalorder %s37, 3
        %s717 = scalar_select %p716, %s37, 3
        %s718 = scalar_lea.vmem %s1, %s717
        %v719 = vld [vmem:[%s715] sm:$0x7f]
        %v720 = vld [vmem:[%s2] sm:$0x7f]
        %v721 = vadd.f32 %v719, %v720
        %v722 = vlaneseq
        %v723 = vshrl.u32 %v722, 7
        %v724 = vlaneseq
        %v725 = vand.u32 %v724, 127
        %vm726 = vcmp.le.s32.totalorder %v725, %v723
        %v727 = vsel %vm726, 0.0, -1e+09
        %v728 = vld [vmem:[%s3] sm:$0x1]
        %v729 = vld [vmem:[%s4] sm:$0x1]
        %vm730 = vcmask 391168
        %v731 = vsel %vm730, %v721, 0.0
        %732 = vadd.xlane.f32.xlu0 %v731
        %v733 = vpop.xlane.xlu0 %732
        %v734 = vrcp.pop 48.0
        %v735 = vmul.f32 48.0, %v734
        %v736 = vsub.f32 1.0, %v735
        %v737 = vmul.f32 %v734, %v736
        %v738 = vadd.f32 %v734, %v737
        %vm739 = vweird.f32 %v734
        %v740 = vsel %vm739, %v734, %v738
        %v741 = vmul.f32 %v733, %v740
        %v742 = vsub.f32 %v721, %v741
        %v743 = vmul.f32 %v742, %v742
        %v744 = vsel %vm730, %v743, 0.0
        %745 = vadd.xlane.f32.xlu0 %v744
        %v746 = vpop.xlane.xlu0 %745
        %v747 = vmul.f32 %v746, %v740
        %v748 = vadd.f32 %v747, 1e-05
        %v749 = vrsqrt.pop %v748
        %v750 = vmul.f32 %v749, %v748
        %v751 = vmul.f32 %v750, %v749
        %v752 = vmul.f32 0.5, %v751
        %v753 = vsub.f32 1.5, %v752
        %v754 = vmul.f32 %v749, %v753
        %vm755 = vweird.f32 %v748
        %vm756 = vweird.f32 %v749
        %vm757 = vmor %vm755, %vm756
        %v758 = vsel %vm757, %v749, %v754
        %v759 = vmul.f32 %v742, %v758
        %v761 = vperm.slane %v728, 0
        %v763 = vmul.f32 %v759, %v761
        %v765 = vperm.slane %v729, 0
        %v767 = vadd.f32 %v763, %v765
        %v768 = vld [vmem:[%s5] sm:$0xff]
        %v769 = vld [vmem:[%s5 + $0x8] sm:$0xff]
        %v770 = vld [vmem:[%s5 + $0x10] sm:$0xff]
        %v771 = vld [vmem:[%s5 + $0x18] sm:$0xff]
        %v772 = vld [vmem:[%s5 + $0x20] sm:$0xff]
        %v773 = vld [vmem:[%s5 + $0x28] sm:$0xff]
        %v774 = vld [vmem:[%s6] sm:$0x1]
        %v776 = vperm.slane %v774, 0
        %vm778 = vcmask 392192
        %v780 = vsel %vm778, %v767, 0
        %782 = vmatpush.msra.mxu0 0.0
        %783 = vmatpush.msra.mxu0 0.0
        %784 = vmatpush.msra.mxu0 0.0
        %785 = vmatpush.msra.mxu0 0.0
        %786 = vmatpush.msra.mxu0 0.0
        %787 = vmatpush.msra.mxu0 0.0
        %788 = vmatpush.msra.mxu0 0.0
        %789 = vmatpush.msra.mxu0 0.0
        %790 = vmatpush.msra.mxu0 0.0
        %791 = vmatpush.msra.mxu0 0.0
        %792 = vmatpush.msra.mxu0 %v773
        %793 = vmatpush.msra.mxu0 %v772
        %794 = vmatpush.msra.mxu0 %v771
        %795 = vmatpush.msra.mxu0 %v770
        %796 = vmatpush.msra.mxu0 %v769
        %797 = vmatpush.msra.mxu0 %v768
        %798 = vmatmul.f32.gmra.mxu0 %v780
        %v799 = vpop.f32.mrf.mxu0
        %v800 = vadd.f32 %v776, %v799
        %801 = vdwg.mxu0
        %v802 = vld [vmem:[%s7] sm:$0xff]
        %v803 = vld [vmem:[%s7 + $0x8] sm:$0xff]
        %v804 = vld [vmem:[%s7 + $0x10] sm:$0xff]
        %v805 = vld [vmem:[%s7 + $0x18] sm:$0xff]
        %v806 = vld [vmem:[%s7 + $0x20] sm:$0xff]
        %v807 = vld [vmem:[%s7 + $0x28] sm:$0xff]
        %v808 = vld [vmem:[%s8] sm:$0x1]
        %v810 = vperm.slane %v808, 0
        %812 = vmatpush.msra.mxu0 0.0
        %813 = vmatpush.msra.mxu0 0.0
        %814 = vmatpush.msra.mxu0 0.0
        %815 = vmatpush.msra.mxu0 0.0
        %816 = vmatpush.msra.mxu0 0.0
        %817 = vmatpush.msra.mxu0 0.0
        %818 = vmatpush.msra.mxu0 0.0
        %819 = vmatpush.msra.mxu0 0.0
        %820 = vmatpush.msra.mxu0 0.0
        %821 = vmatpush.msra.mxu0 0.0
        %822 = vmatpush.msra.mxu0 %v807
        %823 = vmatpush.msra.mxu0 %v806
        %824 = vmatpush.msra.mxu0 %v805
        %825 = vmatpush.msra.mxu0 %v804
        %826 = vmatpush.msra.mxu0 %v803
        %827 = vmatpush.msra.mxu0 %v802
        %828 = vmatmul.f32.gmra.mxu0 %v780
        %v829 = vpop.f32.mrf.mxu0
        %v830 = vadd.f32 %v810, %v829
        %831 = vdwg.mxu0
        %v832 = vld [vmem:[%s9] sm:$0xff]
        %v833 = vld [vmem:[%s9 + $0x8] sm:$0xff]
        %v834 = vld [vmem:[%s9 + $0x10] sm:$0xff]
        %v835 = vld [vmem:[%s9 + $0x18] sm:$0xff]
        %v836 = vld [vmem:[%s9 + $0x20] sm:$0xff]
        %v837 = vld [vmem:[%s9 + $0x28] sm:$0xff]
        %v838 = vld [vmem:[%s10] sm:$0x1]
        %v840 = vperm.slane %v838, 0
        %842 = vmatpush.msra.mxu0 0.0
        %843 = vmatpush.msra.mxu0 0.0
        %844 = vmatpush.msra.mxu0 0.0
        %845 = vmatpush.msra.mxu0 0.0
        %846 = vmatpush.msra.mxu0 0.0
        %847 = vmatpush.msra.mxu0 0.0
        %848 = vmatpush.msra.mxu0 0.0
        %849 = vmatpush.msra.mxu0 0.0
        %850 = vmatpush.msra.mxu0 0.0
        %851 = vmatpush.msra.mxu0 0.0
        %852 = vmatpush.msra.mxu0 %v837
        %853 = vmatpush.msra.mxu0 %v836
        %854 = vmatpush.msra.mxu0 %v835
        %855 = vmatpush.msra.mxu0 %v834
        %856 = vmatpush.msra.mxu0 %v833
        %857 = vmatpush.msra.mxu0 %v832
        %858 = vmatmul.f32.gmra.mxu0 %v780
        %v859 = vpop.f32.mrf.mxu0
        %v860 = vadd.f32 %v840, %v859
        %861 = vdwg.mxu0
        %vm862 = vcmask 97280
        %v864 = vsel %vm862, %v800, 0
        %v867 = vsel %vm862, %v830, 0
        %869 = vmatpush.xpose.msra.mxu0 0.0
        %870 = vmatpush.xpose.msra.mxu0 0.0
        %871 = vmatpush.xpose.msra.mxu0 0.0
        %872 = vmatpush.xpose.msra.mxu0 0.0
        %873 = vmatpush.xpose.msra.mxu0 0.0
        %874 = vmatpush.xpose.msra.mxu0 0.0
        %875 = vmatpush.xpose.msra.mxu0 0.0
        %876 = vmatpush.xpose.msra.mxu0 0.0
        %877 = vmatpush.xpose.msra.mxu0 0.0
        %878 = vmatpush.xpose.msra.mxu0 0.0
        %879 = vmatpush.xpose.msra.mxu0 0.0
        %880 = vmatpush.xpose.msra.mxu0 0.0
        %881 = vmatpush.xpose.msra.mxu0 0.0
        %882 = vmatpush.xpose.msra.mxu0 0.0
        %883 = vmatpush.xpose.msra.mxu0 0.0
        %884 = vmatpush.xpose.msra.mxu0 %v867
        %885 = vmatmul.f32.gmra.mxu0 %v864
        %v886 = vpop.f32.mrf.mxu0
        %v887 = vadd.f32 0.0, %v886
        %888 = vdwg.mxu0
        %v889 = vmul.f32 %v887, 0.28867513
        %v890 = vadd.f32 %v889, %v727
        %vm891 = vcmask 55296
        %v892 = vsel %vm891, %v890, -inf
        %893 = vmax.xlane.f32.xlu0 %v892
        %v894 = vpop.xlane.xlu0 %893
        %v895 = vsub.f32 %v890, %v894
        %v896 = vmul.f32 %v895, 1.442695
        %v897 = vpow.pop %v896
        %v898 = vsel %vm891, %v897, 0.0
        %899 = vadd.xlane.f32.xlu0 %v898
        %v900 = vpop.xlane.xlu0 %899
        %v901 = vrcp.pop %v900
        %v902 = vmul.f32 %v900, %v901
        %v903 = vsub.f32 1.0, %v902
        %v904 = vmul.f32 %v901, %v903
        %v905 = vadd.f32 %v901, %v904
        %vm906 = vweird.f32 %v900
        %vm907 = vweird.f32 %v901
        %vm908 = vmor %vm906, %vm907
        %v909 = vsel %vm908, %v901, %v905
        %v910 = vand.u32 2147483647, %v900
        %vm911 = vcmp.eq.f32.partialorder %v910, 8.507059e+37
        %v912 = vand.u32 %v900, 2147483648
        %v913 = vor.u32 1.1754944e-38, %v912
        %v914 = vsel %vm911, %v913, %v909
        %v915 = vmul.f32 %v897, %v914
        %vm916 = vcmask 56320
        %v918 = vsel %vm916, %v915, 0
        %vm920 = vcmask 1046528
        %v922 = vsel %vm920, %v860, 0
        %924 = vmatpush.msra.mxu0 0.0
        %925 = vmatpush.msra.mxu0 0.0
        %926 = vmatpush.msra.mxu0 0.0
        %927 = vmatpush.msra.mxu0 0.0
        %928 = vmatpush.msra.mxu0 0.0
        %929 = vmatpush.msra.mxu0 0.0
        %930 = vmatpush.msra.mxu0 0.0
        %931 = vmatpush.msra.mxu0 0.0
        %932 = vmatpush.msra.mxu0 0.0
        %933 = vmatpush.msra.mxu0 0.0
        %934 = vmatpush.msra.mxu0 0.0
        %935 = vmatpush.msra.mxu0 0.0
        %936 = vmatpush.msra.mxu0 0.0
        %937 = vmatpush.msra.mxu0 0.0
        %938 = vmatpush.msra.mxu0 0.0
        %939 = vmatpush.msra.mxu0 %v922
        %940 = vmatmul.f32.gmra.mxu0 %v918
        %v941 = vpop.f32.mrf.mxu0
        %v942 = vadd.f32 0.0, %v941
        %943 = vdwg.mxu0
        %944 = vrot.lane.b32.xlu0 %v800, 116
        %v945 = vpop.permute.xlu0 %944
        %946 = vrot.lane.b32.xlu0 %v830, 116
        %v947 = vpop.permute.xlu0 %946
        %v948 = vsel %vm862, %v945, 0
        %v950 = vsel %vm862, %v947, 0
        %952 = vmatpush.xpose.msra.mxu0 0.0
        %953 = vmatpush.xpose.msra.mxu0 0.0
        %954 = vmatpush.xpose.msra.mxu0 0.0
        %955 = vmatpush.xpose.msra.mxu0 0.0
        %956 = vmatpush.xpose.msra.mxu0 0.0
        %957 = vmatpush.xpose.msra.mxu0 0.0
        %958 = vmatpush.xpose.msra.mxu0 0.0
        %959 = vmatpush.xpose.msra.mxu0 0.0
        %960 = vmatpush.xpose.msra.mxu0 0.0
        %961 = vmatpush.xpose.msra.mxu0 0.0
        %962 = vmatpush.xpose.msra.mxu0 0.0
        %963 = vmatpush.xpose.msra.mxu0 0.0
        %964 = vmatpush.xpose.msra.mxu0 0.0
        %965 = vmatpush.xpose.msra.mxu0 0.0
        %966 = vmatpush.xpose.msra.mxu0 0.0
        %967 = vmatpush.xpose.msra.mxu0 %v950
        %968 = vmatmul.f32.gmra.mxu0 %v948
        %v969 = vpop.f32.mrf.mxu0
        %v970 = vadd.f32 0.0, %v969
        %971 = vdwg.mxu0
        %v972 = vmul.f32 %v970, 0.28867513
        %v973 = vadd.f32 %v972, %v727
        %v974 = vsel %vm891, %v973, -inf
        %975 = vmax.xlane.f32.xlu0 %v974
        %v976 = vpop.xlane.xlu0 %975
        %v977 = vsub.f32 %v973, %v976
        %v978 = vmul.f32 %v977, 1.442695
        %v979 = vpow.pop %v978
        %v980 = vsel %vm891, %v979, 0.0
        %981 = vadd.xlane.f32.xlu0 %v980
        %v982 = vpop.xlane.xlu0 %981
        %v983 = vrcp.pop %v982
        %v984 = vmul.f32 %v982, %v983
        %v985 = vsub.f32 1.0, %v984
        %v986 = vmul.f32 %v983, %v985
        %v987 = vadd.f32 %v983, %v986
        %vm988 = vweird.f32 %v982
        %vm989 = vweird.f32 %v983
        %vm990 = vmor %vm988, %vm989
        %v991 = vsel %vm990, %v983, %v987
        %v992 = vand.u32 2147483647, %v982
        %vm993 = vcmp.eq.f32.partialorder %v992, 8.507059e+37
        %v994 = vand.u32 %v982, 2147483648
        %v995 = vor.u32 1.1754944e-38, %v994
        %v996 = vsel %vm993, %v995, %v991
        %v997 = vmul.f32 %v979, %v996
        %998 = vrot.lane.b32.xlu0 %v860, 116
        %v999 = vpop.permute.xlu0 %998
        %v1001 = vsel %vm916, %v997, 0
        %v1003 = vsel %vm920, %v999, 0
        %1005 = vmatpush.msra.mxu0 0.0
        %1006 = vmatpush.msra.mxu0 0.0
        %1007 = vmatpush.msra.mxu0 0.0
        %1008 = vmatpush.msra.mxu0 0.0
        %1009 = vmatpush.msra.mxu0 0.0
        %1010 = vmatpush.msra.mxu0 0.0
        %1011 = vmatpush.msra.mxu0 0.0
        %1012 = vmatpush.msra.mxu0 0.0
        %1013 = vmatpush.msra.mxu0 0.0
        %1014 = vmatpush.msra.mxu0 0.0
        %1015 = vmatpush.msra.mxu0 0.0
        %1016 = vmatpush.msra.mxu0 0.0
        %1017 = vmatpush.msra.mxu0 0.0
        %1018 = vmatpush.msra.mxu0 0.0
        %1019 = vmatpush.msra.mxu0 0.0
        %1020 = vmatpush.msra.mxu0 %v1003
        %1021 = vmatmul.f32.gmra.mxu0 %v1001
        %v1022 = vpop.f32.mrf.mxu0
        %v1023 = vadd.f32 0.0, %v1022
        %1024 = vdwg.mxu0
        %1025 = vrot.lane.b32.xlu0 %v800, 104
        %v1026 = vpop.permute.xlu0 %1025
        %1027 = vrot.lane.b32.xlu0 %v830, 104
        %v1028 = vpop.permute.xlu0 %1027
        %v1029 = vsel %vm862, %v1026, 0
        %v1031 = vsel %vm862, %v1028, 0
        %1033 = vmatpush.xpose.msra.mxu0 0.0
        %1034 = vmatpush.xpose.msra.mxu0 0.0
        %1035 = vmatpush.xpose.msra.mxu0 0.0
        %1036 = vmatpush.xpose.msra.mxu0 0.0
        %1037 = vmatpush.xpose.msra.mxu0 0.0
        %1038 = vmatpush.xpose.msra.mxu0 0.0
        %1039 = vmatpush.xpose.msra.mxu0 0.0
        %1040 = vmatpush.xpose.msra.mxu0 0.0
        %1041 = vmatpush.xpose.msra.mxu0 0.0
        %1042 = vmatpush.xpose.msra.mxu0 0.0
        %1043 = vmatpush.xpose.msra.mxu0 0.0
        %1044 = vmatpush.xpose.msra.mxu0 0.0
        %1045 = vmatpush.xpose.msra.mxu0 0.0
        %1046 = vmatpush.xpose.msra.mxu0 0.0
        %1047 = vmatpush.xpose.msra.mxu0 0.0
        %1048 = vmatpush.xpose.msra.mxu0 %v1031
        %1049 = vmatmul.f32.gmra.mxu0 %v1029
        %v1050 = vpop.f32.mrf.mxu0
        %v1051 = vadd.f32 0.0, %v1050
        %1052 = vdwg.mxu0
        %v1053 = vmul.f32 %v1051, 0.28867513
        %v1054 = vadd.f32 %v1053, %v727
        %v1055 = vsel %vm891, %v1054, -inf
        %1056 = vmax.xlane.f32.xlu0 %v1055
        %v1057 = vpop.xlane.xlu0 %1056
        %v1058 = vsub.f32 %v1054, %v1057
        %v1059 = vmul.f32 %v1058, 1.442695
        %v1060 = vpow.pop %v1059
        %v1061 = vsel %vm891, %v1060, 0.0
        %1062 = vadd.xlane.f32.xlu0 %v1061
        %v1063 = vpop.xlane.xlu0 %1062
        %v1064 = vrcp.pop %v1063
        %v1065 = vmul.f32 %v1063, %v1064
        %v1066 = vsub.f32 1.0, %v1065
        %v1067 = vmul.f32 %v1064, %v1066
        %v1068 = vadd.f32 %v1064, %v1067
        %vm1069 = vweird.f32 %v1063
        %vm1070 = vweird.f32 %v1064
        %vm1071 = vmor %vm1069, %vm1070
        %v1072 = vsel %vm1071, %v1064, %v1068
        %v1073 = vand.u32 2147483647, %v1063
        %vm1074 = vcmp.eq.f32.partialorder %v1073, 8.507059e+37
        %v1075 = vand.u32 %v1063, 2147483648
        %v1076 = vor.u32 1.1754944e-38, %v1075
        %v1077 = vsel %vm1074, %v1076, %v1072
        %v1078 = vmul.f32 %v1060, %v1077
        %1079 = vrot.lane.b32.xlu0 %v860, 104
        %v1080 = vpop.permute.xlu0 %1079
        %v1082 = vsel %vm916, %v1078, 0
        %v1084 = vsel %vm920, %v1080, 0
        %1086 = vmatpush.msra.mxu0 0.0
        %1087 = vmatpush.msra.mxu0 0.0
        %1088 = vmatpush.msra.mxu0 0.0
        %1089 = vmatpush.msra.mxu0 0.0
        %1090 = vmatpush.msra.mxu0 0.0
        %1091 = vmatpush.msra.mxu0 0.0
        %1092 = vmatpush.msra.mxu0 0.0
        %1093 = vmatpush.msra.mxu0 0.0
        %1094 = vmatpush.msra.mxu0 0.0
        %1095 = vmatpush.msra.mxu0 0.0
        %1096 = vmatpush.msra.mxu0 0.0
        %1097 = vmatpush.msra.mxu0 0.0
        %1098 = vmatpush.msra.mxu0 0.0
        %1099 = vmatpush.msra.mxu0 0.0
        %1100 = vmatpush.msra.mxu0 0.0
        %1101 = vmatpush.msra.mxu0 %v1084
        %1102 = vmatmul.f32.gmra.mxu0 %v1082
        %v1103 = vpop.f32.mrf.mxu0
        %v1104 = vadd.f32 0.0, %v1103
        %1105 = vdwg.mxu0
        %1106 = vrot.lane.b32.xlu0 %v800, 92
        %v1107 = vpop.permute.xlu0 %1106
        %1108 = vrot.lane.b32.xlu0 %v830, 92
        %v1109 = vpop.permute.xlu0 %1108
        %v1110 = vsel %vm862, %v1107, 0
        %v1112 = vsel %vm862, %v1109, 0
        %1114 = vmatpush.xpose.msra.mxu0 0.0
        %1115 = vmatpush.xpose.msra.mxu0 0.0
        %1116 = vmatpush.xpose.msra.mxu0 0.0
        %1117 = vmatpush.xpose.msra.mxu0 0.0
        %1118 = vmatpush.xpose.msra.mxu0 0.0
        %1119 = vmatpush.xpose.msra.mxu0 0.0
        %1120 = vmatpush.xpose.msra.mxu0 0.0
        %1121 = vmatpush.xpose.msra.mxu0 0.0
        %1122 = vmatpush.xpose.msra.mxu0 0.0
        %1123 = vmatpush.xpose.msra.mxu0 0.0
        %1124 = vmatpush.xpose.msra.mxu0 0.0
        %1125 = vmatpush.xpose.msra.mxu0 0.0
        %1126 = vmatpush.xpose.msra.mxu0 0.0
        %1127 = vmatpush.xpose.msra.mxu0 0.0
        %1128 = vmatpush.xpose.msra.mxu0 0.0
        %1129 = vmatpush.xpose.msra.mxu0 %v1112
        %1130 = vmatmul.f32.gmra.mxu0 %v1110
        %v1131 = vpop.f32.mrf.mxu0
        %v1132 = vadd.f32 0.0, %v1131
        %1133 = vdwg.mxu0
        %v1134 = vmul.f32 %v1132, 0.28867513
        %v1135 = vadd.f32 %v1134, %v727
        %v1136 = vsel %vm891, %v1135, -inf
        %1137 = vmax.xlane.f32.xlu0 %v1136
        %v1138 = vpop.xlane.xlu0 %1137
        %v1139 = vsub.f32 %v1135, %v1138
        %v1140 = vmul.f32 %v1139, 1.442695
        %v1141 = vpow.pop %v1140
        %v1142 = vsel %vm891, %v1141, 0.0
        %1143 = vadd.xlane.f32.xlu0 %v1142
        %v1144 = vpop.xlane.xlu0 %1143
        %v1145 = vrcp.pop %v1144
        %v1146 = vmul.f32 %v1144, %v1145
        %v1147 = vsub.f32 1.0, %v1146
        %v1148 = vmul.f32 %v1145, %v1147
        %v1149 = vadd.f32 %v1145, %v1148
        %vm1150 = vweird.f32 %v1144
        %vm1151 = vweird.f32 %v1145
        %vm1152 = vmor %vm1150, %vm1151
        %v1153 = vsel %vm1152, %v1145, %v1149
        %v1154 = vand.u32 2147483647, %v1144
        %vm1155 = vcmp.eq.f32.partialorder %v1154, 8.507059e+37
        %v1156 = vand.u32 %v1144, 2147483648
        %v1157 = vor.u32 1.1754944e-38, %v1156
        %v1158 = vsel %vm1155, %v1157, %v1153
        %v1159 = vmul.f32 %v1141, %v1158
        %1160 = vrot.lane.b32.xlu0 %v860, 92
        %v1161 = vpop.permute.xlu0 %1160
        %v1163 = vsel %vm916, %v1159, 0
        %v1165 = vsel %vm920, %v1161, 0
        %1167 = vmatpush.msra.mxu0 0.0
        %1168 = vmatpush.msra.mxu0 0.0
        %1169 = vmatpush.msra.mxu0 0.0
        %1170 = vmatpush.msra.mxu0 0.0
        %1171 = vmatpush.msra.mxu0 0.0
        %1172 = vmatpush.msra.mxu0 0.0
        %1173 = vmatpush.msra.mxu0 0.0
        %1174 = vmatpush.msra.mxu0 0.0
        %1175 = vmatpush.msra.mxu0 0.0
        %1176 = vmatpush.msra.mxu0 0.0
        %1177 = vmatpush.msra.mxu0 0.0
        %1178 = vmatpush.msra.mxu0 0.0
        %1179 = vmatpush.msra.mxu0 0.0
        %1180 = vmatpush.msra.mxu0 0.0
        %1181 = vmatpush.msra.mxu0 0.0
        %1182 = vmatpush.msra.mxu0 %v1165
        %1183 = vmatmul.f32.gmra.mxu0 %v1163
        %v1184 = vpop.f32.mrf.mxu0
        %v1185 = vadd.f32 0.0, %v1184
        %1186 = vdwg.mxu0
        %1188 = vrot.lane.b32.xlu0 %v1023, 12
        %v1189 = vpop.permute.xlu0 %1188
        %1192 = vrot.lane.b32.xlu0 %v1104, 24
        %v1193 = vpop.permute.xlu0 %1192
        %1196 = vrot.lane.b32.xlu0 %v1185, 36
        %v1197 = vpop.permute.xlu0 %1196
        %v1199 = vsel %vm862, %v942, %v1189
        %vm1200 = vcmask 195584
        %v1201 = vsel %vm1200, %v1199, %v1193
        %vm1202 = vcmask 293888
        %v1203 = vsel %vm1202, %v1201, %v1197
        %v1204 = vld [vmem:[%s11] sm:$0xff]
        %v1205 = vld [vmem:[%s11 + $0x8] sm:$0xff]
        %v1206 = vld [vmem:[%s11 + $0x10] sm:$0xff]
        %v1207 = vld [vmem:[%s11 + $0x18] sm:$0xff]
        %v1208 = vld [vmem:[%s11 + $0x20] sm:$0xff]
        %v1209 = vld [vmem:[%s11 + $0x28] sm:$0xff]
        %v1211 = vsel %vm778, %v1203, 0
        %1213 = vmatpush.msra.mxu0 0.0
        %1214 = vmatpush.msra.mxu0 0.0
        %1215 = vmatpush.msra.mxu0 0.0
        %1216 = vmatpush.msra.mxu0 0.0
        %1217 = vmatpush.msra.mxu0 0.0
        %1218 = vmatpush.msra.mxu0 0.0
        %1219 = vmatpush.msra.mxu0 0.0
        %1220 = vmatpush.msra.mxu0 0.0
        %1221 = vmatpush.msra.mxu0 0.0
        %1222 = vmatpush.msra.mxu0 0.0
        %1223 = vmatpush.msra.mxu0 %v1209
        %1224 = vmatpush.msra.mxu0 %v1208
        %1225 = vmatpush.msra.mxu0 %v1207
        %1226 = vmatpush.msra.mxu0 %v1206
        %1227 = vmatpush.msra.mxu0 %v1205
        %1228 = vmatpush.msra.mxu0 %v1204
        %1229 = vmatmul.f32.gmra.mxu0 %v1211
        %v1230 = vpop.f32.mrf.mxu0
        %v1231 = vadd.f32 0.0, %v1230
        %1232 = vdwg.mxu0
        %v1233 = vadd.f32 %v721, %v1231
        %v1234 = vld [vmem:[%s12] sm:$0x1]
        %v1236 = vperm.slane %v1234, 0
        %v1238 = vadd.f32 %v1233, %v1236
        %v1239 = vld [vmem:[%s13] sm:$0x1]
        %v1240 = vld [vmem:[%s14] sm:$0x1]
        %v1241 = vsel %vm730, %v1238, 0.0
        %1242 = vadd.xlane.f32.xlu0 %v1241
        %v1243 = vpop.xlane.xlu0 %1242
        %v1244 = vmul.f32 %v1243, %v740
        %v1245 = vsub.f32 %v1238, %v1244
        %v1246 = vmul.f32 %v1245, %v1245
        %v1247 = vsel %vm730, %v1246, 0.0
        %1248 = vadd.xlane.f32.xlu0 %v1247
        %v1249 = vpop.xlane.xlu0 %1248
        %v1250 = vmul.f32 %v1249, %v740
        %v1251 = vadd.f32 %v1250, 1e-05
        %v1252 = vrsqrt.pop %v1251
        %v1253 = vmul.f32 %v1252, %v1251
        %v1254 = vmul.f32 %v1253, %v1252
        %v1255 = vmul.f32 0.5, %v1254
        %v1256 = vsub.f32 1.5, %v1255
        %v1257 = vmul.f32 %v1252, %v1256
        %vm1258 = vweird.f32 %v1251
        %vm1259 = vweird.f32 %v1252
        %vm1260 = vmor %vm1258, %vm1259
        %v1261 = vsel %vm1260, %v1252, %v1257
        %v1262 = vmul.f32 %v1245, %v1261
        %v1264 = vperm.slane %v1239, 0
        %v1266 = vmul.f32 %v1262, %v1264
        %v1268 = vperm.slane %v1240, 0
        %v1270 = vadd.f32 %v1266, %v1268
        %v1271 = vld [vmem:[%s15] sm:$0xff]
        %v1272 = vld [vmem:[%s15 + $0x8] sm:$0xff]
        %v1273 = vld [vmem:[%s15 + $0x10] sm:$0xff]
        %v1274 = vld [vmem:[%s15 + $0x18] sm:$0xff]
        %v1275 = vld [vmem:[%s15 + $0x20] sm:$0xff]
        %v1276 = vld [vmem:[%s15 + $0x28] sm:$0xff]
        %v1277 = vld [vmem:[%s15 + $0x30] sm:$0xff]
        %v1278 = vld [vmem:[%s15 + $0x38] sm:$0xff]
        %v1279 = vld [vmem:[%s15 + $0x40] sm:$0xff]
        %v1280 = vld [vmem:[%s15 + $0x48] sm:$0xff]
        %v1281 = vld [vmem:[%s15 + $0x50] sm:$0xff]
        %v1282 = vld [vmem:[%s15 + $0x58] sm:$0xff]
        %v1283 = vld [vmem:[%s16] sm:$0x3]
        %v1285 = vperm.slane %v1283, 0
        %v1286 = vperm.slane %v1283, 1
        %v1290 = vsel %vm778, %v1270, 0
        %1292 = vmatpush.msra.mxu0 0.0
        %1293 = vmatpush.msra.mxu0 0.0
        %1294 = vmatpush.msra.mxu0 0.0
        %1295 = vmatpush.msra.mxu0 0.0
        %1296 = vmatpush.msra.mxu0 0.0
        %1297 = vmatpush.msra.mxu0 0.0
        %1298 = vmatpush.msra.mxu0 0.0
        %1299 = vmatpush.msra.mxu0 0.0
        %1300 = vmatpush.msra.mxu0 0.0
        %1301 = vmatpush.msra.mxu0 0.0
        %1302 = vmatpush.msra.mxu0 %v1281
        %1303 = vmatpush.msra.mxu0 %v1279
        %1304 = vmatpush.msra.mxu0 %v1277
        %1305 = vmatpush.msra.mxu0 %v1275
        %1306 = vmatpush.msra.mxu0 %v1273
        %1307 = vmatpush.msra.mxu0 %v1271
        %1308 = vmatmul.f32.gmra.mxu0 %v1290
        %v1309 = vpop.f32.mrf.mxu0
        %v1310 = vadd.f32 %v1285, %v1309
        %1311 = vdwg.mxu0
        %1312 = vmatpush.msra.mxu0 0.0
        %1313 = vmatpush.msra.mxu0 0.0
        %1314 = vmatpush.msra.mxu0 0.0
        %1315 = vmatpush.msra.mxu0 0.0
        %1316 = vmatpush.msra.mxu0 0.0
        %1317 = vmatpush.msra.mxu0 0.0
        %1318 = vmatpush.msra.mxu0 0.0
        %1319 = vmatpush.msra.mxu0 0.0
        %1320 = vmatpush.msra.mxu0 0.0
        %1321 = vmatpush.msra.mxu0 0.0
        %1322 = vmatpush.msra.mxu0 %v1282
        %1323 = vmatpush.msra.mxu0 %v1280
        %1324 = vmatpush.msra.mxu0 %v1278
        %1325 = vmatpush.msra.mxu0 %v1276
        %1326 = vmatpush.msra.mxu0 %v1274
        %1327 = vmatpush.msra.mxu0 %v1272
        %1328 = vmatmul.f32.gmra.mxu0 %v1290
        %v1329 = vpop.f32.mrf.mxu0
        %v1330 = vadd.f32 %v1286, %v1329
        %1331 = vdwg.mxu0
        %v1332 = vmul.f32 %v1310, 0.5
        %v1333 = vmul.f32 %v1330, 0.5
        %v1334 = vmul.f32 %v1310, 0.044715
        %v1335 = vmul.f32 %v1330, 0.044715
        %v1336 = vmul.f32 %v1334, %v1310
        %v1337 = vmul.f32 %v1335, %v1330
        %v1338 = vmul.f32 %v1336, %v1310
        %v1339 = vmul.f32 %v1337, %v1330
        %v1340 = vadd.f32 %v1310, %v1338
        %v1341 = vadd.f32 %v1330, %v1339
        %v1342 = vmul.f32 %v1340, 0.7978846
        %v1343 = vmul.f32 %v1341, 0.7978846
        %v1344 = vtanh.pop %v1342
        %v1345 = vtanh.pop %v1343
        %v1346 = vadd.f32 %v1344, 1.0
        %v1347 = vadd.f32 %v1345, 1.0
        %v1348 = vmul.f32 %v1332, %v1346
        %v1349 = vmul.f32 %v1333, %v1347
        %v1350 = vld [vmem:[%s17] sm:$0xff]
        %v1351 = vld [vmem:[%s17 + $0x8] sm:$0xff]
        %v1352 = vld [vmem:[%s17 + $0x10] sm:$0xff]
        %v1353 = vld [vmem:[%s17 + $0x18] sm:$0xff]
        %v1354 = vld [vmem:[%s17 + $0x20] sm:$0xff]
        %v1355 = vld [vmem:[%s17 + $0x28] sm:$0xff]
        %v1356 = vld [vmem:[%s17 + $0x30] sm:$0xff]
        %v1357 = vld [vmem:[%s17 + $0x38] sm:$0xff]
        %v1358 = vld [vmem:[%s17 + $0x40] sm:$0xff]
        %v1359 = vld [vmem:[%s17 + $0x48] sm:$0xff]
        %v1360 = vld [vmem:[%s17 + $0x50] sm:$0xff]
        %v1361 = vld [vmem:[%s17 + $0x58] sm:$0xff]
        %v1362 = vld [vmem:[%s17 + $0x60] sm:$0xff]
        %v1363 = vld [vmem:[%s17 + $0x68] sm:$0xff]
        %v1364 = vld [vmem:[%s17 + $0x70] sm:$0xff]
        %v1365 = vld [vmem:[%s17 + $0x78] sm:$0xff]
        %v1366 = vld [vmem:[%s17 + $0x80] sm:$0xff]
        %v1367 = vld [vmem:[%s17 + $0x88] sm:$0xff]
        %v1368 = vld [vmem:[%s17 + $0x90] sm:$0xff]
        %v1369 = vld [vmem:[%s17 + $0x98] sm:$0xff]
        %v1370 = vld [vmem:[%s17 + $0xa0] sm:$0xff]
        %v1371 = vld [vmem:[%s17 + $0xa8] sm:$0xff]
        %v1372 = vld [vmem:[%s17 + $0xb0] sm:$0xff]
        %v1373 = vld [vmem:[%s17 + $0xb8] sm:$0xff]
        %vm1374 = vcmask 523264
        %v1376 = vsel %vm1374, %v1349, 0
        %1378 = vmatpush.msra.mxu0 %v1365
        %1379 = vmatpush.msra.mxu0 %v1364
        %1380 = vmatpush.msra.mxu0 %v1363
        %1381 = vmatpush.msra.mxu0 %v1362
        %1382 = vmatpush.msra.mxu0 %v1361
        %1383 = vmatpush.msra.mxu0 %v1360
        %1384 = vmatpush.msra.mxu0 %v1359
        %1385 = vmatpush.msra.mxu0 %v1358
        %1386 = vmatpush.msra.mxu0 %v1357
        %1387 = vmatpush.msra.mxu0 %v1356
        %1388 = vmatpush.msra.mxu0 %v1355
        %1389 = vmatpush.msra.mxu0 %v1354
        %1390 = vmatpush.msra.mxu0 %v1353
        %1391 = vmatpush.msra.mxu0 %v1352
        %1392 = vmatpush.msra.mxu0 %v1351
        %1393 = vmatpush.msra.mxu0 %v1350
        %1394 = vmatmul.f32.gmra.mxu0 %v1348
        %v1395 = vpop.f32.mrf.mxu0
        %v1396 = vadd.f32 0.0, %v1395
        %1397 = vdwg.mxu0
        %1398 = vmatpush.msra.mxu0 0.0
        %1399 = vmatpush.msra.mxu0 0.0
        %1400 = vmatpush.msra.mxu0 0.0
        %1401 = vmatpush.msra.mxu0 0.0
        %1402 = vmatpush.msra.mxu0 0.0
        %1403 = vmatpush.msra.mxu0 0.0
        %1404 = vmatpush.msra.mxu0 0.0
        %1405 = vmatpush.msra.mxu0 0.0
        %1406 = vmatpush.msra.mxu0 %v1373
        %1407 = vmatpush.msra.mxu0 %v1372
        %1408 = vmatpush.msra.mxu0 %v1371
        %1409 = vmatpush.msra.mxu0 %v1370
        %1410 = vmatpush.msra.mxu0 %v1369
        %1411 = vmatpush.msra.mxu0 %v1368
        %1412 = vmatpush.msra.mxu0 %v1367
        %1413 = vmatpush.msra.mxu0 %v1366
        %1414 = vmatmul.f32.gmra.mxu0 %v1376
        %v1415 = vpop.f32.mrf.mxu0
        %v1416 = vadd.f32 %v1396, %v1415
        %1417 = vdwg.mxu0
        %v1418 = vadd.f32 %v1238, %v1416
        %v1419 = vld [vmem:[%s18] sm:$0x1]
        %v1421 = vperm.slane %v1419, 0
        %v1423 = vadd.f32 %v1418, %v1421
        %s1424 = scalar_lea.vmem %s3, 1
        %v1425 = vld [vmem:[%s1424] sm:$0x1]
        %s1426 = scalar_lea.vmem %s4, 1
        %v1427 = vld [vmem:[%s1426] sm:$0x1]
        %v1428 = vsel %vm730, %v1423, 0.0
        %1429 = vadd.xlane.f32.xlu0 %v1428
        %v1430 = vpop.xlane.xlu0 %1429
        %v1431 = vmul.f32 %v1430, %v740
        %v1432 = vsub.f32 %v1423, %v1431
        %v1433 = vmul.f32 %v1432, %v1432
        %v1434 = vsel %vm730, %v1433, 0.0
        %1435 = vadd.xlane.f32.xlu0 %v1434
        %v1436 = vpop.xlane.xlu0 %1435
        %v1437 = vmul.f32 %v1436, %v740
        %v1438 = vadd.f32 %v1437, 1e-05
        %v1439 = vrsqrt.pop %v1438
        %v1440 = vmul.f32 %v1439, %v1438
        %v1441 = vmul.f32 %v1440, %v1439
        %v1442 = vmul.f32 0.5, %v1441
        %v1443 = vsub.f32 1.5, %v1442
        %v1444 = vmul.f32 %v1439, %v1443
        %vm1445 = vweird.f32 %v1438
        %vm1446 = vweird.f32 %v1439
        %vm1447 = vmor %vm1445, %vm1446
        %v1448 = vsel %vm1447, %v1439, %v1444
        %v1449 = vmul.f32 %v1432, %v1448
        %v1451 = vperm.slane %v1425, 0
        %v1453 = vmul.f32 %v1449, %v1451
        %v1455 = vperm.slane %v1427, 0
        %v1457 = vadd.f32 %v1453, %v1455
        %s1458 = scalar_lea.vmem %s5, 48
        %v1459 = vld [vmem:[%s1458] sm:$0xff]
        %v1460 = vld [vmem:[%s1458 + $0x8] sm:$0xff]
        %v1461 = vld [vmem:[%s1458 + $0x10] sm:$0xff]
        %v1462 = vld [vmem:[%s1458 + $0x18] sm:$0xff]
        %v1463 = vld [vmem:[%s1458 + $0x20] sm:$0xff]
        %v1464 = vld [vmem:[%s1458 + $0x28] sm:$0xff]
        %s1465 = scalar_lea.vmem %s6, 1
        %v1466 = vld [vmem:[%s1465] sm:$0x1]
        %v1468 = vperm.slane %v1466, 0
        %v1471 = vsel %vm778, %v1457, 0
        %1473 = vmatpush.msra.mxu0 0.0
        %1474 = vmatpush.msra.mxu0 0.0
        %1475 = vmatpush.msra.mxu0 0.0
        %1476 = vmatpush.msra.mxu0 0.0
        %1477 = vmatpush.msra.mxu0 0.0
        %1478 = vmatpush.msra.mxu0 0.0
        %1479 = vmatpush.msra.mxu0 0.0
        %1480 = vmatpush.msra.mxu0 0.0
        %1481 = vmatpush.msra.mxu0 0.0
        %1482 = vmatpush.msra.mxu0 0.0
        %1483 = vmatpush.msra.mxu0 %v1464
        %1484 = vmatpush.msra.mxu0 %v1463
        %1485 = vmatpush.msra.mxu0 %v1462
        %1486 = vmatpush.msra.mxu0 %v1461
        %1487 = vmatpush.msra.mxu0 %v1460
        %1488 = vmatpush.msra.mxu0 %v1459
        %1489 = vmatmul.f32.gmra.mxu0 %v1471
        %v1490 = vpop.f32.mrf.mxu0
        %v1491 = vadd.f32 %v1468, %v1490
        %1492 = vdwg.mxu0
        %s1493 = scalar_lea.vmem %s7, 48
        %v1494 = vld [vmem:[%s1493] sm:$0xff]
        %v1495 = vld [vmem:[%s1493 + $0x8] sm:$0xff]
        %v1496 = vld [vmem:[%s1493 + $0x10] sm:$0xff]
        %v1497 = vld [vmem:[%s1493 + $0x18] sm:$0xff]
        %v1498 = vld [vmem:[%s1493 + $0x20] sm:$0xff]
        %v1499 = vld [vmem:[%s1493 + $0x28] sm:$0xff]
        %s1500 = scalar_lea.vmem %s8, 1
        %v1501 = vld [vmem:[%s1500] sm:$0x1]
        %v1503 = vperm.slane %v1501, 0
        %1505 = vmatpush.msra.mxu0 0.0
        %1506 = vmatpush.msra.mxu0 0.0
        %1507 = vmatpush.msra.mxu0 0.0
        %1508 = vmatpush.msra.mxu0 0.0
        %1509 = vmatpush.msra.mxu0 0.0
        %1510 = vmatpush.msra.mxu0 0.0
        %1511 = vmatpush.msra.mxu0 0.0
        %1512 = vmatpush.msra.mxu0 0.0
        %1513 = vmatpush.msra.mxu0 0.0
        %1514 = vmatpush.msra.mxu0 0.0
        %1515 = vmatpush.msra.mxu0 %v1499
        %1516 = vmatpush.msra.mxu0 %v1498
        %1517 = vmatpush.msra.mxu0 %v1497
        %1518 = vmatpush.msra.mxu0 %v1496
        %1519 = vmatpush.msra.mxu0 %v1495
        %1520 = vmatpush.msra.mxu0 %v1494
        %1521 = vmatmul.f32.gmra.mxu0 %v1471
        %v1522 = vpop.f32.mrf.mxu0
        %v1523 = vadd.f32 %v1503, %v1522
        %1524 = vdwg.mxu0
        %s1525 = scalar_lea.vmem %s9, 48
        %v1526 = vld [vmem:[%s1525] sm:$0xff]
        %v1527 = vld [vmem:[%s1525 + $0x8] sm:$0xff]
        %v1528 = vld [vmem:[%s1525 + $0x10] sm:$0xff]
        %v1529 = vld [vmem:[%s1525 + $0x18] sm:$0xff]
        %v1530 = vld [vmem:[%s1525 + $0x20] sm:$0xff]
        %v1531 = vld [vmem:[%s1525 + $0x28] sm:$0xff]
        %s1532 = scalar_lea.vmem %s10, 1
        %v1533 = vld [vmem:[%s1532] sm:$0x1]
        %v1535 = vperm.slane %v1533, 0
        %1537 = vmatpush.msra.mxu0 0.0
        %1538 = vmatpush.msra.mxu0 0.0
        %1539 = vmatpush.msra.mxu0 0.0
        %1540 = vmatpush.msra.mxu0 0.0
        %1541 = vmatpush.msra.mxu0 0.0
        %1542 = vmatpush.msra.mxu0 0.0
        %1543 = vmatpush.msra.mxu0 0.0
        %1544 = vmatpush.msra.mxu0 0.0
        %1545 = vmatpush.msra.mxu0 0.0
        %1546 = vmatpush.msra.mxu0 0.0
        %1547 = vmatpush.msra.mxu0 %v1531
        %1548 = vmatpush.msra.mxu0 %v1530
        %1549 = vmatpush.msra.mxu0 %v1529
        %1550 = vmatpush.msra.mxu0 %v1528
        %1551 = vmatpush.msra.mxu0 %v1527
        %1552 = vmatpush.msra.mxu0 %v1526
        %1553 = vmatmul.f32.gmra.mxu0 %v1471
        %v1554 = vpop.f32.mrf.mxu0
        %v1555 = vadd.f32 %v1535, %v1554
        %1556 = vdwg.mxu0
        %v1558 = vsel %vm862, %v1491, 0
        %v1561 = vsel %vm862, %v1523, 0
        %1563 = vmatpush.xpose.msra.mxu0 0.0
        %1564 = vmatpush.xpose.msra.mxu0 0.0
        %1565 = vmatpush.xpose.msra.mxu0 0.0
        %1566 = vmatpush.xpose.msra.mxu0 0.0
        %1567 = vmatpush.xpose.msra.mxu0 0.0
        %1568 = vmatpush.xpose.msra.mxu0 0.0
        %1569 = vmatpush.xpose.msra.mxu0 0.0
        %1570 = vmatpush.xpose.msra.mxu0 0.0
        %1571 = vmatpush.xpose.msra.mxu0 0.0
        %1572 = vmatpush.xpose.msra.mxu0 0.0
        %1573 = vmatpush.xpose.msra.mxu0 0.0
        %1574 = vmatpush.xpose.msra.mxu0 0.0
        %1575 = vmatpush.xpose.msra.mxu0 0.0
        %1576 = vmatpush.xpose.msra.mxu0 0.0
        %1577 = vmatpush.xpose.msra.mxu0 0.0
        %1578 = vmatpush.xpose.msra.mxu0 %v1561
        %1579 = vmatmul.f32.gmra.mxu0 %v1558
        %v1580 = vpop.f32.mrf.mxu0
        %v1581 = vadd.f32 0.0, %v1580
        %1582 = vdwg.mxu0
        %v1583 = vmul.f32 %v1581, 0.28867513
        %v1584 = vadd.f32 %v1583, %v727
        %v1585 = vsel %vm891, %v1584, -inf
        %1586 = vmax.xlane.f32.xlu0 %v1585
        %v1587 = vpop.xlane.xlu0 %1586
        %v1588 = vsub.f32 %v1584, %v1587
        %v1589 = vmul.f32 %v1588, 1.442695
        %v1590 = vpow.pop %v1589
        %v1591 = vsel %vm891, %v1590, 0.0
        %1592 = vadd.xlane.f32.xlu0 %v1591
        %v1593 = vpop.xlane.xlu0 %1592
        %v1594 = vrcp.pop %v1593
        %v1595 = vmul.f32 %v1593, %v1594
        %v1596 = vsub.f32 1.0, %v1595
        %v1597 = vmul.f32 %v1594, %v1596
        %v1598 = vadd.f32 %v1594, %v1597
        %vm1599 = vweird.f32 %v1593
        %vm1600 = vweird.f32 %v1594
        %vm1601 = vmor %vm1599, %vm1600
        %v1602 = vsel %vm1601, %v1594, %v1598
        %v1603 = vand.u32 2147483647, %v1593
        %vm1604 = vcmp.eq.f32.partialorder %v1603, 8.507059e+37
        %v1605 = vand.u32 %v1593, 2147483648
        %v1606 = vor.u32 1.1754944e-38, %v1605
        %v1607 = vsel %vm1604, %v1606, %v1602
        %v1608 = vmul.f32 %v1590, %v1607
        %v1610 = vsel %vm916, %v1608, 0
        %v1613 = vsel %vm920, %v1555, 0
        %1615 = vmatpush.msra.mxu0 0.0
        %1616 = vmatpush.msra.mxu0 0.0
        %1617 = vmatpush.msra.mxu0 0.0
        %1618 = vmatpush.msra.mxu0 0.0
        %1619 = vmatpush.msra.mxu0 0.0
        %1620 = vmatpush.msra.mxu0 0.0
        %1621 = vmatpush.msra.mxu0 0.0
        %1622 = vmatpush.msra.mxu0 0.0
        %1623 = vmatpush.msra.mxu0 0.0
        %1624 = vmatpush.msra.mxu0 0.0
        %1625 = vmatpush.msra.mxu0 0.0
        %1626 = vmatpush.msra.mxu0 0.0
        %1627 = vmatpush.msra.mxu0 0.0
        %1628 = vmatpush.msra.mxu0 0.0
        %1629 = vmatpush.msra.mxu0 0.0
        %1630 = vmatpush.msra.mxu0 %v1613
        %1631 = vmatmul.f32.gmra.mxu0 %v1610
        %v1632 = vpop.f32.mrf.mxu0
        %v1633 = vadd.f32 0.0, %v1632
        %1634 = vdwg.mxu0
        %1635 = vrot.lane.b32.xlu0 %v1491, 116
        %v1636 = vpop.permute.xlu0 %1635
        %1637 = vrot.lane.b32.xlu0 %v1523, 116
        %v1638 = vpop.permute.xlu0 %1637
        %v1639 = vsel %vm862, %v1636, 0
        %v1641 = vsel %vm862, %v1638, 0
        %1643 = vmatpush.xpose.msra.mxu0 0.0
        %1644 = vmatpush.xpose.msra.mxu0 0.0
        %1645 = vmatpush.xpose.msra.mxu0 0.0
        %1646 = vmatpush.xpose.msra.mxu0 0.0
        %1647 = vmatpush.xpose.msra.mxu0 0.0
        %1648 = vmatpush.xpose.msra.mxu0 0.0
        %1649 = vmatpush.xpose.msra.mxu0 0.0
        %1650 = vmatpush.xpose.msra.mxu0 0.0
        %1651 = vmatpush.xpose.msra.mxu0 0.0
        %1652 = vmatpush.xpose.msra.mxu0 0.0
        %1653 = vmatpush.xpose.msra.mxu0 0.0
        %1654 = vmatpush.xpose.msra.mxu0 0.0
        %1655 = vmatpush.xpose.msra.mxu0 0.0
        %1656 = vmatpush.xpose.msra.mxu0 0.0
        %1657 = vmatpush.xpose.msra.mxu0 0.0
        %1658 = vmatpush.xpose.msra.mxu0 %v1641
        %1659 = vmatmul.f32.gmra.mxu0 %v1639
        %v1660 = vpop.f32.mrf.mxu0
        %v1661 = vadd.f32 0.0, %v1660
        %1662 = vdwg.mxu0
        %v1663 = vmul.f32 %v1661, 0.28867513
        %v1664 = vadd.f32 %v1663, %v727
        %v1665 = vsel %vm891, %v1664, -inf
        %1666 = vmax.xlane.f32.xlu0 %v1665
        %v1667 = vpop.xlane.xlu0 %1666
        %v1668 = vsub.f32 %v1664, %v1667
        %v1669 = vmul.f32 %v1668, 1.442695
        %v1670 = vpow.pop %v1669
        %v1671 = vsel %vm891, %v1670, 0.0
        %1672 = vadd.xlane.f32.xlu0 %v1671
        %v1673 = vpop.xlane.xlu0 %1672
        %v1674 = vrcp.pop %v1673
        %v1675 = vmul.f32 %v1673, %v1674
        %v1676 = vsub.f32 1.0, %v1675
        %v1677 = vmul.f32 %v1674, %v1676
        %v1678 = vadd.f32 %v1674, %v1677
        %vm1679 = vweird.f32 %v1673
        %vm1680 = vweird.f32 %v1674
        %vm1681 = vmor %vm1679, %vm1680
        %v1682 = vsel %vm1681, %v1674, %v1678
        %v1683 = vand.u32 2147483647, %v1673
        %vm1684 = vcmp.eq.f32.partialorder %v1683, 8.507059e+37
        %v1685 = vand.u32 %v1673, 2147483648
        %v1686 = vor.u32 1.1754944e-38, %v1685
        %v1687 = vsel %vm1684, %v1686, %v1682
        %v1688 = vmul.f32 %v1670, %v1687
        %1689 = vrot.lane.b32.xlu0 %v1555, 116
        %v1690 = vpop.permute.xlu0 %1689
        %v1692 = vsel %vm916, %v1688, 0
        %v1694 = vsel %vm920, %v1690, 0
        %1696 = vmatpush.msra.mxu0 0.0
        %1697 = vmatpush.msra.mxu0 0.0
        %1698 = vmatpush.msra.mxu0 0.0
        %1699 = vmatpush.msra.mxu0 0.0
        %1700 = vmatpush.msra.mxu0 0.0
        %1701 = vmatpush.msra.mxu0 0.0
        %1702 = vmatpush.msra.mxu0 0.0
        %1703 = vmatpush.msra.mxu0 0.0
        %1704 = vmatpush.msra.mxu0 0.0
        %1705 = vmatpush.msra.mxu0 0.0
        %1706 = vmatpush.msra.mxu0 0.0
        %1707 = vmatpush.msra.mxu0 0.0
        %1708 = vmatpush.msra.mxu0 0.0
        %1709 = vmatpush.msra.mxu0 0.0
        %1710 = vmatpush.msra.mxu0 0.0
        %1711 = vmatpush.msra.mxu0 %v1694
        %1712 = vmatmul.f32.gmra.mxu0 %v1692
        %v1713 = vpop.f32.mrf.mxu0
        %v1714 = vadd.f32 0.0, %v1713
        %1715 = vdwg.mxu0
        %1716 = vrot.lane.b32.xlu0 %v1491, 104
        %v1717 = vpop.permute.xlu0 %1716
        %1718 = vrot.lane.b32.xlu0 %v1523, 104
        %v1719 = vpop.permute.xlu0 %1718
        %v1720 = vsel %vm862, %v1717, 0
        %v1722 = vsel %vm862, %v1719, 0
        %1724 = vmatpush.xpose.msra.mxu0 0.0
        %1725 = vmatpush.xpose.msra.mxu0 0.0
        %1726 = vmatpush.xpose.msra.mxu0 0.0
        %1727 = vmatpush.xpose.msra.mxu0 0.0
        %1728 = vmatpush.xpose.msra.mxu0 0.0
        %1729 = vmatpush.xpose.msra.mxu0 0.0
        %1730 = vmatpush.xpose.msra.mxu0 0.0
        %1731 = vmatpush.xpose.msra.mxu0 0.0
        %1732 = vmatpush.xpose.msra.mxu0 0.0
        %1733 = vmatpush.xpose.msra.mxu0 0.0
        %1734 = vmatpush.xpose.msra.mxu0 0.0
        %1735 = vmatpush.xpose.msra.mxu0 0.0
        %1736 = vmatpush.xpose.msra.mxu0 0.0
        %1737 = vmatpush.xpose.msra.mxu0 0.0
        %1738 = vmatpush.xpose.msra.mxu0 0.0
        %1739 = vmatpush.xpose.msra.mxu0 %v1722
        %1740 = vmatmul.f32.gmra.mxu0 %v1720
        %v1741 = vpop.f32.mrf.mxu0
        %v1742 = vadd.f32 0.0, %v1741
        %1743 = vdwg.mxu0
        %v1744 = vmul.f32 %v1742, 0.28867513
        %v1745 = vadd.f32 %v1744, %v727
        %v1746 = vsel %vm891, %v1745, -inf
        %1747 = vmax.xlane.f32.xlu0 %v1746
        %v1748 = vpop.xlane.xlu0 %1747
        %v1749 = vsub.f32 %v1745, %v1748
        %v1750 = vmul.f32 %v1749, 1.442695
        %v1751 = vpow.pop %v1750
        %v1752 = vsel %vm891, %v1751, 0.0
        %1753 = vadd.xlane.f32.xlu0 %v1752
        %v1754 = vpop.xlane.xlu0 %1753
        %v1755 = vrcp.pop %v1754
        %v1756 = vmul.f32 %v1754, %v1755
        %v1757 = vsub.f32 1.0, %v1756
        %v1758 = vmul.f32 %v1755, %v1757
        %v1759 = vadd.f32 %v1755, %v1758
        %vm1760 = vweird.f32 %v1754
        %vm1761 = vweird.f32 %v1755
        %vm1762 = vmor %vm1760, %vm1761
        %v1763 = vsel %vm1762, %v1755, %v1759
        %v1764 = vand.u32 2147483647, %v1754
        %vm1765 = vcmp.eq.f32.partialorder %v1764, 8.507059e+37
        %v1766 = vand.u32 %v1754, 2147483648
        %v1767 = vor.u32 1.1754944e-38, %v1766
        %v1768 = vsel %vm1765, %v1767, %v1763
        %v1769 = vmul.f32 %v1751, %v1768
        %1770 = vrot.lane.b32.xlu0 %v1555, 104
        %v1771 = vpop.permute.xlu0 %1770
        %v1773 = vsel %vm916, %v1769, 0
        %v1775 = vsel %vm920, %v1771, 0
        %1777 = vmatpush.msra.mxu0 0.0
        %1778 = vmatpush.msra.mxu0 0.0
        %1779 = vmatpush.msra.mxu0 0.0
        %1780 = vmatpush.msra.mxu0 0.0
        %1781 = vmatpush.msra.mxu0 0.0
        %1782 = vmatpush.msra.mxu0 0.0
        %1783 = vmatpush.msra.mxu0 0.0
        %1784 = vmatpush.msra.mxu0 0.0
        %1785 = vmatpush.msra.mxu0 0.0
        %1786 = vmatpush.msra.mxu0 0.0
        %1787 = vmatpush.msra.mxu0 0.0
        %1788 = vmatpush.msra.mxu0 0.0
        %1789 = vmatpush.msra.mxu0 0.0
        %1790 = vmatpush.msra.mxu0 0.0
        %1791 = vmatpush.msra.mxu0 0.0
        %1792 = vmatpush.msra.mxu0 %v1775
        %1793 = vmatmul.f32.gmra.mxu0 %v1773
        %v1794 = vpop.f32.mrf.mxu0
        %v1795 = vadd.f32 0.0, %v1794
        %1796 = vdwg.mxu0
        %1797 = vrot.lane.b32.xlu0 %v1491, 92
        %v1798 = vpop.permute.xlu0 %1797
        %1799 = vrot.lane.b32.xlu0 %v1523, 92
        %v1800 = vpop.permute.xlu0 %1799
        %v1801 = vsel %vm862, %v1798, 0
        %v1803 = vsel %vm862, %v1800, 0
        %1805 = vmatpush.xpose.msra.mxu0 0.0
        %1806 = vmatpush.xpose.msra.mxu0 0.0
        %1807 = vmatpush.xpose.msra.mxu0 0.0
        %1808 = vmatpush.xpose.msra.mxu0 0.0
        %1809 = vmatpush.xpose.msra.mxu0 0.0
        %1810 = vmatpush.xpose.msra.mxu0 0.0
        %1811 = vmatpush.xpose.msra.mxu0 0.0
        %1812 = vmatpush.xpose.msra.mxu0 0.0
        %1813 = vmatpush.xpose.msra.mxu0 0.0
        %1814 = vmatpush.xpose.msra.mxu0 0.0
        %1815 = vmatpush.xpose.msra.mxu0 0.0
        %1816 = vmatpush.xpose.msra.mxu0 0.0
        %1817 = vmatpush.xpose.msra.mxu0 0.0
        %1818 = vmatpush.xpose.msra.mxu0 0.0
        %1819 = vmatpush.xpose.msra.mxu0 0.0
        %1820 = vmatpush.xpose.msra.mxu0 %v1803
        %1821 = vmatmul.f32.gmra.mxu0 %v1801
        %v1822 = vpop.f32.mrf.mxu0
        %v1823 = vadd.f32 0.0, %v1822
        %1824 = vdwg.mxu0
        %v1825 = vmul.f32 %v1823, 0.28867513
        %v1826 = vadd.f32 %v1825, %v727
        %v1827 = vsel %vm891, %v1826, -inf
        %1828 = vmax.xlane.f32.xlu0 %v1827
        %v1829 = vpop.xlane.xlu0 %1828
        %v1830 = vsub.f32 %v1826, %v1829
        %v1831 = vmul.f32 %v1830, 1.442695
        %v1832 = vpow.pop %v1831
        %v1833 = vsel %vm891, %v1832, 0.0
        %1834 = vadd.xlane.f32.xlu0 %v1833
        %v1835 = vpop.xlane.xlu0 %1834
        %v1836 = vrcp.pop %v1835
        %v1837 = vmul.f32 %v1835, %v1836
        %v1838 = vsub.f32 1.0, %v1837
        %v1839 = vmul.f32 %v1836, %v1838
        %v1840 = vadd.f32 %v1836, %v1839
        %vm1841 = vweird.f32 %v1835
        %vm1842 = vweird.f32 %v1836
        %vm1843 = vmor %vm1841, %vm1842
        %v1844 = vsel %vm1843, %v1836, %v1840
        %v1845 = vand.u32 2147483647, %v1835
        %vm1846 = vcmp.eq.f32.partialorder %v1845, 8.507059e+37
        %v1847 = vand.u32 %v1835, 2147483648
        %v1848 = vor.u32 1.1754944e-38, %v1847
        %v1849 = vsel %vm1846, %v1848, %v1844
        %v1850 = vmul.f32 %v1832, %v1849
        %1851 = vrot.lane.b32.xlu0 %v1555, 92
        %v1852 = vpop.permute.xlu0 %1851
        %v1854 = vsel %vm916, %v1850, 0
        %v1856 = vsel %vm920, %v1852, 0
        %1858 = vmatpush.msra.mxu0 0.0
        %1859 = vmatpush.msra.mxu0 0.0
        %1860 = vmatpush.msra.mxu0 0.0
        %1861 = vmatpush.msra.mxu0 0.0
        %1862 = vmatpush.msra.mxu0 0.0
        %1863 = vmatpush.msra.mxu0 0.0
        %1864 = vmatpush.msra.mxu0 0.0
        %1865 = vmatpush.msra.mxu0 0.0
        %1866 = vmatpush.msra.mxu0 0.0
        %1867 = vmatpush.msra.mxu0 0.0
        %1868 = vmatpush.msra.mxu0 0.0
        %1869 = vmatpush.msra.mxu0 0.0
        %1870 = vmatpush.msra.mxu0 0.0
        %1871 = vmatpush.msra.mxu0 0.0
        %1872 = vmatpush.msra.mxu0 0.0
        %1873 = vmatpush.msra.mxu0 %v1856
        %1874 = vmatmul.f32.gmra.mxu0 %v1854
        %v1875 = vpop.f32.mrf.mxu0
        %v1876 = vadd.f32 0.0, %v1875
        %1877 = vdwg.mxu0
        %1879 = vrot.lane.b32.xlu0 %v1714, 12
        %v1880 = vpop.permute.xlu0 %1879
        %1883 = vrot.lane.b32.xlu0 %v1795, 24
        %v1884 = vpop.permute.xlu0 %1883
        %1887 = vrot.lane.b32.xlu0 %v1876, 36
        %v1888 = vpop.permute.xlu0 %1887
        %v1890 = vsel %vm862, %v1633, %v1880
        %v1891 = vsel %vm1200, %v1890, %v1884
        %v1892 = vsel %vm1202, %v1891, %v1888
        %s1893 = scalar_lea.vmem %s11, 48
        %v1894 = vld [vmem:[%s1893] sm:$0xff]
        %v1895 = vld [vmem:[%s1893 + $0x8] sm:$0xff]
        %v1896 = vld [vmem:[%s1893 + $0x10] sm:$0xff]
        %v1897 = vld [vmem:[%s1893 + $0x18] sm:$0xff]
        %v1898 = vld [vmem:[%s1893 + $0x20] sm:$0xff]
        %v1899 = vld [vmem:[%s1893 + $0x28] sm:$0xff]
        %v1901 = vsel %vm778, %v1892, 0
        %1903 = vmatpush.msra.mxu0 0.0
        %1904 = vmatpush.msra.mxu0 0.0
        %1905 = vmatpush.msra.mxu0 0.0
        %1906 = vmatpush.msra.mxu0 0.0
        %1907 = vmatpush.msra.mxu0 0.0
        %1908 = vmatpush.msra.mxu0 0.0
        %1909 = vmatpush.msra.mxu0 0.0
        %1910 = vmatpush.msra.mxu0 0.0
        %1911 = vmatpush.msra.mxu0 0.0
        %1912 = vmatpush.msra.mxu0 0.0
        %1913 = vmatpush.msra.mxu0 %v1899
        %1914 = vmatpush.msra.mxu0 %v1898
        %1915 = vmatpush.msra.mxu0 %v1897
        %1916 = vmatpush.msra.mxu0 %v1896
        %1917 = vmatpush.msra.mxu0 %v1895
        %1918 = vmatpush.msra.mxu0 %v1894
        %1919 = vmatmul.f32.gmra.mxu0 %v1901
        %v1920 = vpop.f32.mrf.mxu0
        %v1921 = vadd.f32 0.0, %v1920
        %1922 = vdwg.mxu0
        %v1923 = vadd.f32 %v1423, %v1921
        %s1924 = scalar_lea.vmem %s12, 1
        %v1925 = vld [vmem:[%s1924] sm:$0x1]
        %v1927 = vperm.slane %v1925, 0
        %v1929 = vadd.f32 %v1923, %v1927
        %s1930 = scalar_lea.vmem %s13, 1
        %v1931 = vld [vmem:[%s1930] sm:$0x1]
        %s1932 = scalar_lea.vmem %s14, 1
        %v1933 = vld [vmem:[%s1932] sm:$0x1]
        %v1934 = vsel %vm730, %v1929, 0.0
        %1935 = vadd.xlane.f32.xlu0 %v1934
        %v1936 = vpop.xlane.xlu0 %1935
        %v1937 = vmul.f32 %v1936, %v740
        %v1938 = vsub.f32 %v1929, %v1937
        %v1939 = vmul.f32 %v1938, %v1938
        %v1940 = vsel %vm730, %v1939, 0.0
        %1941 = vadd.xlane.f32.xlu0 %v1940
        %v1942 = vpop.xlane.xlu0 %1941
        %v1943 = vmul.f32 %v1942, %v740
        %v1944 = vadd.f32 %v1943, 1e-05
        %v1945 = vrsqrt.pop %v1944
        %v1946 = vmul.f32 %v1945, %v1944
        %v1947 = vmul.f32 %v1946, %v1945
        %v1948 = vmul.f32 0.5, %v1947
        %v1949 = vsub.f32 1.5, %v1948
        %v1950 = vmul.f32 %v1945, %v1949
        %vm1951 = vweird.f32 %v1944
        %vm1952 = vweird.f32 %v1945
        %vm1953 = vmor %vm1951, %vm1952
        %v1954 = vsel %vm1953, %v1945, %v1950
        %v1955 = vmul.f32 %v1938, %v1954
        %v1957 = vperm.slane %v1931, 0
        %v1959 = vmul.f32 %v1955, %v1957
        %v1961 = vperm.slane %v1933, 0
        %v1963 = vadd.f32 %v1959, %v1961
        %s1964 = scalar_lea.vmem %s15, 96
        %v1965 = vld [vmem:[%s1964] sm:$0xff]
        %v1966 = vld [vmem:[%s1964 + $0x8] sm:$0xff]
        %v1967 = vld [vmem:[%s1964 + $0x10] sm:$0xff]
        %v1968 = vld [vmem:[%s1964 + $0x18] sm:$0xff]
        %v1969 = vld [vmem:[%s1964 + $0x20] sm:$0xff]
        %v1970 = vld [vmem:[%s1964 + $0x28] sm:$0xff]
        %v1971 = vld [vmem:[%s1964 + $0x30] sm:$0xff]
        %v1972 = vld [vmem:[%s1964 + $0x38] sm:$0xff]
        %v1973 = vld [vmem:[%s1964 + $0x40] sm:$0xff]
        %v1974 = vld [vmem:[%s1964 + $0x48] sm:$0xff]
        %v1975 = vld [vmem:[%s1964 + $0x50] sm:$0xff]
        %v1976 = vld [vmem:[%s1964 + $0x58] sm:$0xff]
        %s1977 = scalar_lea.vmem %s16, 2
        %v1978 = vld [vmem:[%s1977] sm:$0x3]
        %v1980 = vperm.slane %v1978, 0
        %v1981 = vperm.slane %v1978, 1
        %v1985 = vsel %vm778, %v1963, 0
        %1987 = vmatpush.msra.mxu0 0.0
        %1988 = vmatpush.msra.mxu0 0.0
        %1989 = vmatpush.msra.mxu0 0.0
        %1990 = vmatpush.msra.mxu0 0.0
        %1991 = vmatpush.msra.mxu0 0.0
        %1992 = vmatpush.msra.mxu0 0.0
        %1993 = vmatpush.msra.mxu0 0.0
        %1994 = vmatpush.msra.mxu0 0.0
        %1995 = vmatpush.msra.mxu0 0.0
        %1996 = vmatpush.msra.mxu0 0.0
        %1997 = vmatpush.msra.mxu0 %v1975
        %1998 = vmatpush.msra.mxu0 %v1973
        %1999 = vmatpush.msra.mxu0 %v1971
        %2000 = vmatpush.msra.mxu0 %v1969
        %2001 = vmatpush.msra.mxu0 %v1967
        %2002 = vmatpush.msra.mxu0 %v1965
        %2003 = vmatmul.f32.gmra.mxu0 %v1985
        %v2004 = vpop.f32.mrf.mxu0
        %v2005 = vadd.f32 %v1980, %v2004
        %2006 = vdwg.mxu0
        %2007 = vmatpush.msra.mxu0 0.0
        %2008 = vmatpush.msra.mxu0 0.0
        %2009 = vmatpush.msra.mxu0 0.0
        %2010 = vmatpush.msra.mxu0 0.0
        %2011 = vmatpush.msra.mxu0 0.0
        %2012 = vmatpush.msra.mxu0 0.0
        %2013 = vmatpush.msra.mxu0 0.0
        %2014 = vmatpush.msra.mxu0 0.0
        %2015 = vmatpush.msra.mxu0 0.0
        %2016 = vmatpush.msra.mxu0 0.0
        %2017 = vmatpush.msra.mxu0 %v1976
        %2018 = vmatpush.msra.mxu0 %v1974
        %2019 = vmatpush.msra.mxu0 %v1972
        %2020 = vmatpush.msra.mxu0 %v1970
        %2021 = vmatpush.msra.mxu0 %v1968
        %2022 = vmatpush.msra.mxu0 %v1966
        %2023 = vmatmul.f32.gmra.mxu0 %v1985
        %v2024 = vpop.f32.mrf.mxu0
        %v2025 = vadd.f32 %v1981, %v2024
        %2026 = vdwg.mxu0
        %v2027 = vmul.f32 %v2005, 0.5
        %v2028 = vmul.f32 %v2025, 0.5
        %v2029 = vmul.f32 %v2005, 0.044715
        %v2030 = vmul.f32 %v2025, 0.044715
        %v2031 = vmul.f32 %v2029, %v2005
        %v2032 = vmul.f32 %v2030, %v2025
        %v2033 = vmul.f32 %v2031, %v2005
        %v2034 = vmul.f32 %v2032, %v2025
        %v2035 = vadd.f32 %v2005, %v2033
        %v2036 = vadd.f32 %v2025, %v2034
        %v2037 = vmul.f32 %v2035, 0.7978846
        %v2038 = vmul.f32 %v2036, 0.7978846
        %v2039 = vtanh.pop %v2037
        %v2040 = vtanh.pop %v2038
        %v2041 = vadd.f32 %v2039, 1.0
        %v2042 = vadd.f32 %v2040, 1.0
        %v2043 = vmul.f32 %v2027, %v2041
        %v2044 = vmul.f32 %v2028, %v2042
        %s2045 = scalar_lea.vmem %s17, 192
        %v2046 = vld [vmem:[%s2045] sm:$0xff]
        %v2047 = vld [vmem:[%s2045 + $0x8] sm:$0xff]
        %v2048 = vld [vmem:[%s2045 + $0x10] sm:$0xff]
        %v2049 = vld [vmem:[%s2045 + $0x18] sm:$0xff]
        %v2050 = vld [vmem:[%s2045 + $0x20] sm:$0xff]
        %v2051 = vld [vmem:[%s2045 + $0x28] sm:$0xff]
        %v2052 = vld [vmem:[%s2045 + $0x30] sm:$0xff]
        %v2053 = vld [vmem:[%s2045 + $0x38] sm:$0xff]
        %v2054 = vld [vmem:[%s2045 + $0x40] sm:$0xff]
        %v2055 = vld [vmem:[%s2045 + $0x48] sm:$0xff]
        %v2056 = vld [vmem:[%s2045 + $0x50] sm:$0xff]
        %v2057 = vld [vmem:[%s2045 + $0x58] sm:$0xff]
        %v2058 = vld [vmem:[%s2045 + $0x60] sm:$0xff]
        %v2059 = vld [vmem:[%s2045 + $0x68] sm:$0xff]
        %v2060 = vld [vmem:[%s2045 + $0x70] sm:$0xff]
        %v2061 = vld [vmem:[%s2045 + $0x78] sm:$0xff]
        %v2062 = vld [vmem:[%s2045 + $0x80] sm:$0xff]
        %v2063 = vld [vmem:[%s2045 + $0x88] sm:$0xff]
        %v2064 = vld [vmem:[%s2045 + $0x90] sm:$0xff]
        %v2065 = vld [vmem:[%s2045 + $0x98] sm:$0xff]
        %v2066 = vld [vmem:[%s2045 + $0xa0] sm:$0xff]
        %v2067 = vld [vmem:[%s2045 + $0xa8] sm:$0xff]
        %v2068 = vld [vmem:[%s2045 + $0xb0] sm:$0xff]
        %v2069 = vld [vmem:[%s2045 + $0xb8] sm:$0xff]
        %v2071 = vsel %vm1374, %v2044, 0
        %2073 = vmatpush.msra.mxu0 %v2061
        %2074 = vmatpush.msra.mxu0 %v2060
        %2075 = vmatpush.msra.mxu0 %v2059
        %2076 = vmatpush.msra.mxu0 %v2058
        %2077 = vmatpush.msra.mxu0 %v2057
        %2078 = vmatpush.msra.mxu0 %v2056
        %2079 = vmatpush.msra.mxu0 %v2055
        %2080 = vmatpush.msra.mxu0 %v2054
        %2081 = vmatpush.msra.mxu0 %v2053
        %2082 = vmatpush.msra.mxu0 %v2052
        %2083 = vmatpush.msra.mxu0 %v2051
        %2084 = vmatpush.msra.mxu0 %v2050
        %2085 = vmatpush.msra.mxu0 %v2049
        %2086 = vmatpush.msra.mxu0 %v2048
        %2087 = vmatpush.msra.mxu0 %v2047
        %2088 = vmatpush.msra.mxu0 %v2046
        %2089 = vmatmul.f32.gmra.mxu0 %v2043
        %v2090 = vpop.f32.mrf.mxu0
        %v2091 = vadd.f32 0.0, %v2090
        %2092 = vdwg.mxu0
        %2093 = vmatpush.msra.mxu0 0.0
        %2094 = vmatpush.msra.mxu0 0.0
        %2095 = vmatpush.msra.mxu0 0.0
        %2096 = vmatpush.msra.mxu0 0.0
        %2097 = vmatpush.msra.mxu0 0.0
        %2098 = vmatpush.msra.mxu0 0.0
        %2099 = vmatpush.msra.mxu0 0.0
        %2100 = vmatpush.msra.mxu0 0.0
        %2101 = vmatpush.msra.mxu0 %v2069
        %2102 = vmatpush.msra.mxu0 %v2068
        %2103 = vmatpush.msra.mxu0 %v2067
        %2104 = vmatpush.msra.mxu0 %v2066
        %2105 = vmatpush.msra.mxu0 %v2065
        %2106 = vmatpush.msra.mxu0 %v2064
        %2107 = vmatpush.msra.mxu0 %v2063
        %2108 = vmatpush.msra.mxu0 %v2062
        %2109 = vmatmul.f32.gmra.mxu0 %v2071
        %v2110 = vpop.f32.mrf.mxu0
        %v2111 = vadd.f32 %v2091, %v2110
        %2112 = vdwg.mxu0
        %v2113 = vadd.f32 %v1929, %v2111
        %s2114 = scalar_lea.vmem %s18, 1
        %v2115 = vld [vmem:[%s2114] sm:$0x1]
        %v2117 = vperm.slane %v2115, 0
        %v2119 = vadd.f32 %v2113, %v2117
        %v2120 = vld [vmem:[%s19] sm:$0x1]
        %v2121 = vld [vmem:[%s20] sm:$0x1]
        %v2122 = vsel %vm730, %v2119, 0.0
        %2123 = vadd.xlane.f32.xlu0 %v2122
        %v2124 = vpop.xlane.xlu0 %2123
        %v2125 = vmul.f32 %v2124, %v740
        %v2126 = vsub.f32 %v2119, %v2125
        %v2127 = vmul.f32 %v2126, %v2126
        %v2128 = vsel %vm730, %v2127, 0.0
        %2129 = vadd.xlane.f32.xlu0 %v2128
        %v2130 = vpop.xlane.xlu0 %2129
        %v2131 = vmul.f32 %v2130, %v740
        %v2132 = vadd.f32 %v2131, 1e-05
        %v2133 = vrsqrt.pop %v2132
        %v2134 = vmul.f32 %v2133, %v2132
        %v2135 = vmul.f32 %v2134, %v2133
        %v2136 = vmul.f32 0.5, %v2135
        %v2137 = vsub.f32 1.5, %v2136
        %v2138 = vmul.f32 %v2133, %v2137
        %vm2139 = vweird.f32 %v2132
        %vm2140 = vweird.f32 %v2133
        %vm2141 = vmor %vm2139, %vm2140
        %v2142 = vsel %vm2141, %v2133, %v2138
        %v2143 = vmul.f32 %v2126, %v2142
        %v2145 = vperm.slane %v2120, 0
        %v2147 = vmul.f32 %v2143, %v2145
        %v2149 = vperm.slane %v2121, 0
        %v2151 = vadd.f32 %v2147, %v2149
        %v2152 = vld [vmem:[%s21] sm:$0xff]
        %v2153 = vld [vmem:[%s21 + $0x8] sm:$0xff]
        %v2154 = vld [vmem:[%s21 + $0x10] sm:$0xff]
        %v2155 = vld [vmem:[%s21 + $0x18] sm:$0xff]
        %v2156 = vld [vmem:[%s21 + $0x20] sm:$0xff]
        %v2157 = vld [vmem:[%s21 + $0x28] sm:$0xff]
        %s2158 = scalar_lea.vmem %s21, 48
        %v2159 = vld [vmem:[%s2158] sm:$0xff]
        %v2160 = vld [vmem:[%s2158 + $0x8] sm:$0xff]
        %v2161 = vld [vmem:[%s2158 + $0x10] sm:$0xff]
        %v2162 = vld [vmem:[%s2158 + $0x18] sm:$0xff]
        %v2163 = vld [vmem:[%s2158 + $0x20] sm:$0xff]
        %v2164 = vld [vmem:[%s2158 + $0x28] sm:$0xff]
        %v2166 = vrot.slane %v2151, 1
        %v2167 = vsel %vm778, %v2166, 0
        %2169 = vmatpush.msra.mxu0 0.0
        %2170 = vmatpush.msra.mxu0 0.0
        %2171 = vmatpush.msra.mxu0 0.0
        %2172 = vmatpush.msra.mxu0 0.0
        %2173 = vmatpush.msra.mxu0 0.0
        %2174 = vmatpush.msra.mxu0 0.0
        %2175 = vmatpush.msra.mxu0 0.0
        %2176 = vmatpush.msra.mxu0 0.0
        %2177 = vmatpush.msra.mxu0 0.0
        %2178 = vmatpush.msra.mxu0 0.0
        %2179 = vmatpush.msra.mxu0 %v2164
        %2180 = vmatpush.msra.mxu0 %v2163
        %2181 = vmatpush.msra.mxu0 %v2162
        %2182 = vmatpush.msra.mxu0 %v2161
        %2183 = vmatpush.msra.mxu0 %v2160
        %2184 = vmatpush.msra.mxu0 %v2159
        %2185 = vmatmul.f32.gmra.mxu0 %v2167
        %v2186 = vpop.f32.mrf.mxu0
        %v2187 = vadd.f32 0.0, %v2186
        %2188 = vdwg.mxu0
        %v2189 = vsel %vm778, %v2151, 0
        %2191 = vmatpush.msra.mxu0 0.0
        %2192 = vmatpush.msra.mxu0 0.0
        %2193 = vmatpush.msra.mxu0 0.0
        %2194 = vmatpush.msra.mxu0 0.0
        %2195 = vmatpush.msra.mxu0 0.0
        %2196 = vmatpush.msra.mxu0 0.0
        %2197 = vmatpush.msra.mxu0 0.0
        %2198 = vmatpush.msra.mxu0 0.0
        %2199 = vmatpush.msra.mxu0 0.0
        %2200 = vmatpush.msra.mxu0 0.0
        %2201 = vmatpush.msra.mxu0 %v2157
        %2202 = vmatpush.msra.mxu0 %v2156
        %2203 = vmatpush.msra.mxu0 %v2155
        %2204 = vmatpush.msra.mxu0 %v2154
        %2205 = vmatpush.msra.mxu0 %v2153
        %2206 = vmatpush.msra.mxu0 %v2152
        %2207 = vmatmul.f32.gmra.mxu0 %v2189
        %v2208 = vpop.f32.mrf.mxu0
        %v2209 = vadd.f32 %v2187, %v2208
        %2210 = vdwg.mxu0
        %s2211 = scalar_lea.vmem %s21, 96
        %v2212 = vld [vmem:[%s2211] sm:$0xff]
        %v2213 = vld [vmem:[%s2211 + $0x8] sm:$0xff]
        %v2214 = vld [vmem:[%s2211 + $0x10] sm:$0xff]
        %v2215 = vld [vmem:[%s2211 + $0x18] sm:$0xff]
        %v2216 = vld [vmem:[%s2211 + $0x20] sm:$0xff]
        %v2217 = vld [vmem:[%s2211 + $0x28] sm:$0xff]
        %v2218 = vrot.slane %v2151, 2
        %v2219 = vsel %vm778, %v2218, 0
        %2221 = vmatpush.msra.mxu0 0.0
        %2222 = vmatpush.msra.mxu0 0.0
        %2223 = vmatpush.msra.mxu0 0.0
        %2224 = vmatpush.msra.mxu0 0.0
        %2225 = vmatpush.msra.mxu0 0.0
        %2226 = vmatpush.msra.mxu0 0.0
        %2227 = vmatpush.msra.mxu0 0.0
        %2228 = vmatpush.msra.mxu0 0.0
        %2229 = vmatpush.msra.mxu0 0.0
        %2230 = vmatpush.msra.mxu0 0.0
        %2231 = vmatpush.msra.mxu0 %v2217
        %2232 = vmatpush.msra.mxu0 %v2216
        %2233 = vmatpush.msra.mxu0 %v2215
        %2234 = vmatpush.msra.mxu0 %v2214
        %2235 = vmatpush.msra.mxu0 %v2213
        %2236 = vmatpush.msra.mxu0 %v2212
        %2237 = vmatmul.f32.gmra.mxu0 %v2219
        %v2238 = vpop.f32.mrf.mxu0
        %v2239 = vadd.f32 0.0, %v2238
        %2240 = vdwg.mxu0
        %v2241 = vadd.f32 %v2209, %v2239
        %s2242 = scalar_lea.vmem %s21, 144
        %v2243 = vld [vmem:[%s2242] sm:$0xff]
        %v2244 = vld [vmem:[%s2242 + $0x8] sm:$0xff]
        %v2245 = vld [vmem:[%s2242 + $0x10] sm:$0xff]
        %v2246 = vld [vmem:[%s2242 + $0x18] sm:$0xff]
        %v2247 = vld [vmem:[%s2242 + $0x20] sm:$0xff]
        %v2248 = vld [vmem:[%s2242 + $0x28] sm:$0xff]
        %v2249 = vrot.slane %v2151, 3
        %v2250 = vsel %vm778, %v2249, 0
        %2252 = vmatpush.msra.mxu0 0.0
        %2253 = vmatpush.msra.mxu0 0.0
        %2254 = vmatpush.msra.mxu0 0.0
        %2255 = vmatpush.msra.mxu0 0.0
        %2256 = vmatpush.msra.mxu0 0.0
        %2257 = vmatpush.msra.mxu0 0.0
        %2258 = vmatpush.msra.mxu0 0.0
        %2259 = vmatpush.msra.mxu0 0.0
        %2260 = vmatpush.msra.mxu0 0.0
        %2261 = vmatpush.msra.mxu0 0.0
        %2262 = vmatpush.msra.mxu0 %v2248
        %2263 = vmatpush.msra.mxu0 %v2247
        %2264 = vmatpush.msra.mxu0 %v2246
        %2265 = vmatpush.msra.mxu0 %v2245
        %2266 = vmatpush.msra.mxu0 %v2244
        %2267 = vmatpush.msra.mxu0 %v2243
        %2268 = vmatmul.f32.gmra.mxu0 %v2250
        %v2269 = vpop.f32.mrf.mxu0
        %v2270 = vadd.f32 0.0, %v2269
        %2271 = vdwg.mxu0
        %v2272 = vadd.f32 %v2241, %v2270
        %s2273 = scalar_lea.vmem %s21, 192
        %v2274 = vld [vmem:[%s2273] sm:$0xff]
        %v2275 = vld [vmem:[%s2273 + $0x8] sm:$0xff]
        %v2276 = vld [vmem:[%s2273 + $0x10] sm:$0xff]
        %v2277 = vld [vmem:[%s2273 + $0x18] sm:$0xff]
        %v2278 = vld [vmem:[%s2273 + $0x20] sm:$0xff]
        %v2279 = vld [vmem:[%s2273 + $0x28] sm:$0xff]
        %v2280 = vrot.slane %v2151, 4
        %v2281 = vsel %vm778, %v2280, 0
        %2283 = vmatpush.msra.mxu0 0.0
        %2284 = vmatpush.msra.mxu0 0.0
        %2285 = vmatpush.msra.mxu0 0.0
        %2286 = vmatpush.msra.mxu0 0.0
        %2287 = vmatpush.msra.mxu0 0.0
        %2288 = vmatpush.msra.mxu0 0.0
        %2289 = vmatpush.msra.mxu0 0.0
        %2290 = vmatpush.msra.mxu0 0.0
        %2291 = vmatpush.msra.mxu0 0.0
        %2292 = vmatpush.msra.mxu0 0.0
        %2293 = vmatpush.msra.mxu0 %v2279
        %2294 = vmatpush.msra.mxu0 %v2278
        %2295 = vmatpush.msra.mxu0 %v2277
        %2296 = vmatpush.msra.mxu0 %v2276
        %2297 = vmatpush.msra.mxu0 %v2275
        %2298 = vmatpush.msra.mxu0 %v2274
        %2299 = vmatmul.f32.gmra.mxu0 %v2281
        %v2300 = vpop.f32.mrf.mxu0
        %v2301 = vadd.f32 0.0, %v2300
        %2302 = vdwg.mxu0
        %v2303 = vadd.f32 %v2272, %v2301
        %s2304 = scalar_lea.vmem %s21, 240
        %v2305 = vld [vmem:[%s2304] sm:$0xff]
        %v2306 = vld [vmem:[%s2304 + $0x8] sm:$0xff]
        %v2307 = vld [vmem:[%s2304 + $0x10] sm:$0xff]
        %v2308 = vld [vmem:[%s2304 + $0x18] sm:$0xff]
        %v2309 = vld [vmem:[%s2304 + $0x20] sm:$0xff]
        %v2310 = vld [vmem:[%s2304 + $0x28] sm:$0xff]
        %v2311 = vrot.slane %v2151, 5
        %v2312 = vsel %vm778, %v2311, 0
        %2314 = vmatpush.msra.mxu0 0.0
        %2315 = vmatpush.msra.mxu0 0.0
        %2316 = vmatpush.msra.mxu0 0.0
        %2317 = vmatpush.msra.mxu0 0.0
        %2318 = vmatpush.msra.mxu0 0.0
        %2319 = vmatpush.msra.mxu0 0.0
        %2320 = vmatpush.msra.mxu0 0.0
        %2321 = vmatpush.msra.mxu0 0.0
        %2322 = vmatpush.msra.mxu0 0.0
        %2323 = vmatpush.msra.mxu0 0.0
        %2324 = vmatpush.msra.mxu0 %v2310
        %2325 = vmatpush.msra.mxu0 %v2309
        %2326 = vmatpush.msra.mxu0 %v2308
        %2327 = vmatpush.msra.mxu0 %v2307
        %2328 = vmatpush.msra.mxu0 %v2306
        %2329 = vmatpush.msra.mxu0 %v2305
        %2330 = vmatmul.f32.gmra.mxu0 %v2312
        %v2331 = vpop.f32.mrf.mxu0
        %v2332 = vadd.f32 0.0, %v2331
        %2333 = vdwg.mxu0
        %v2334 = vadd.f32 %v2303, %v2332
        %s2335 = scalar_lea.vmem %s21, 288
        %v2336 = vld [vmem:[%s2335] sm:$0xff]
        %v2337 = vld [vmem:[%s2335 + $0x8] sm:$0xff]
        %v2338 = vld [vmem:[%s2335 + $0x10] sm:$0xff]
        %v2339 = vld [vmem:[%s2335 + $0x18] sm:$0xff]
        %v2340 = vld [vmem:[%s2335 + $0x20] sm:$0xff]
        %v2341 = vld [vmem:[%s2335 + $0x28] sm:$0xff]
        %v2342 = vrot.slane %v2151, 6
        %v2343 = vsel %vm778, %v2342, 0
        %2345 = vmatpush.msra.mxu0 0.0
        %2346 = vmatpush.msra.mxu0 0.0
        %2347 = vmatpush.msra.mxu0 0.0
        %2348 = vmatpush.msra.mxu0 0.0
        %2349 = vmatpush.msra.mxu0 0.0
        %2350 = vmatpush.msra.mxu0 0.0
        %2351 = vmatpush.msra.mxu0 0.0
        %2352 = vmatpush.msra.mxu0 0.0
        %2353 = vmatpush.msra.mxu0 0.0
        %2354 = vmatpush.msra.mxu0 0.0
        %2355 = vmatpush.msra.mxu0 %v2341
        %2356 = vmatpush.msra.mxu0 %v2340
        %2357 = vmatpush.msra.mxu0 %v2339
        %2358 = vmatpush.msra.mxu0 %v2338
        %2359 = vmatpush.msra.mxu0 %v2337
        %2360 = vmatpush.msra.mxu0 %v2336
        %2361 = vmatmul.f32.gmra.mxu0 %v2343
        %v2362 = vpop.f32.mrf.mxu0
        %v2363 = vadd.f32 0.0, %v2362
        %2364 = vdwg.mxu0
        %v2365 = vadd.f32 %v2334, %v2363
        %v2366 = vld [vmem:[%s22] sm:$0x1]
        %v2367 = vmul.f32 %v2366, 3.0
        %v2368 = vadd.f32 %v2365, %v2367
        %v2369 = vld [vmem:[%s718] sm:$0x1]
        %2371 = vset.pattern.permute.xlu0 1
        %2372 = vperm.xlu0 %2371, %v2369
        %v2373 = vpop.permute.xlu0 %2372
        %v2375 = vperm.slane %v2373, 0
        %v2376 = vmul.f32 %v2368, %v2375
        %2377 = vset.pattern.permute.xlu0 0
        %2378 = vperm.xlu0 %2377, %v2369
        %v2379 = vpop.permute.xlu0 %2378
        %v2381 = vperm.slane %v2379, 0
        %v2382 = vadd.f32 %v2376, %v2381
        %vm2383 = vcmask 57344
        %2384 = vst.msk [vmem:[%s711] sm:$0x1] %vm2383, %v2382
        %s2385 = sand.u32 %s538, 1
        %s2386 = scalar_lea.sflag [#allocation3], %s2385
        %s2387 = sand.u32 %s538, 1
        %s2388 = scalar_lea.vmem [#allocation2], %s2387
        // Predicated region
        $region113: #{forecast.3} parent=111 // pred_check
          %p2389 = pneg %p548
        $region114: #{forecast.3} parent=111 // pred_check_branch
          %2391 = sbr.rel (%p2389) target = $region116
        $region115: #{forecast.3} parent=111 // pred_region
          %2393 = vsyncadd %s2386, 0
          %s2394 = scalar_lea.hbm %s23, %s37
          %s2396 = sshll.u32 %s2388, 4
          %s2397 = int_to_ptr.vmem [resolvable:$true] %s2396
          %s2398 = sshll.u32 %s2394, 4
          %s2399 = int_to_ptr.hbm [resolvable:$true] %s2398
          %2401 = dma.vmem_to_hbm [thread:$0]  %s2397, 16, %s2399, %s2386
        $region116: #{forecast.3} parent=111 // pred_fallthru
          _
      $region112: #{forecast.3} parent=5 // pred_fallthru
        _
      %p2402 = scmp.le.s32.totalorder 2, %s32
      // Predicated region
      $region117: #{forecast.3} parent=5 // pred_check
        %p2403 = pneg %p2402
      $region118: #{forecast.3} parent=5 // pred_check_branch
        %2405 = sbr.rel (%p2403) target = $region120
      $region119: #{forecast.3} parent=5 // pred_region
        %s2406 = ssub.s32 %s32, 2
        // Predicated region
        $region121: #{forecast.3} parent=119 // pred_check
          %p2407 = pneg %p554
        $region122: #{forecast.3} parent=119 // pred_check_branch
          %2409 = sbr.rel (%p2407) target = $region124
        $region123: #{forecast.3} parent=119 // pred_region
          %s2410 = sand.u32 %s539, 1
          %s2411 = scalar_lea.sflag [#allocation3], %s2410
          %s2412 = sand.u32 %s539, 1
          %s2413 = scalar_lea.vmem [#allocation2], %s2412
          %2415 = dma.done %s2411, 16
        $region124: #{forecast.3} parent=119 // pred_fallthru
          _
      $region120: #{forecast.3} parent=5 // pred_fallthru
        _
    $region6: #{forecast.3} parent=1 // loop_footer
      %s36 = sadd.s32 1, %s32
    $region7: #{forecast.3} parent=1 // loop_footer_branch
      %31 = sbr.rel target = $region3
    $region8: #{forecast.3} parent=1 // loop_exit
      _
    %2416 = vsyncpa [#allocation3], 1
    %s2417 = scalar_lea.sflag [#allocation3], 1
    %2418 = vsyncpa %s2417, 1

</llo_original>
